<compile_context>
chip_gen: v7x
topology: tpu7x:2x2x1
jax: 0.10.0
libtpu: 0.0.40
codegen_flags: <defaults>
</compile_context>

<pallas_src>
import functools

import jax
import jax.numpy as jnp
import numpy as np
from jax.experimental import pallas as pl
from jax.experimental.pallas import tpu as pltpu

HIDDEN = 128
CLS1 = 1024
CLS2 = 512
BN_EPS = 1e-5
SUBLANE = 8


# --------------------------------------------------------------------------------------
# Fused kernel: batched input projection -> serial GRU recurrence -> classifier epilogue.
# Single invocation (no grid); classifier weights DMA'd in manually to overlap with GRU.
# --------------------------------------------------------------------------------------
def text_gru_kernel(x_ref, wih_ref, whh_ref, bih_ref, bhn_ref,
                    b1_ref, g1_ref, be1_ref,
                    b2_ref, g2_ref, be2_ref,
                    w1_hbm, w2_hbm,
                    out_ref,
                    gi_scr, w1_vmem, w2_vmem, dma_sem,
                    *, seq_len, real_b):
    Bp = out_ref.shape[0]
    H = whh_ref.shape[0]

    # ---- Kick off classifier-weight DMAs immediately: they overlap with Phase 1+2.
    w1_cp = pltpu.make_async_copy(w1_hbm, w1_vmem, dma_sem.at[0])
    w2_cp = pltpu.make_async_copy(w2_hbm, w2_vmem, dma_sem.at[1])
    w1_cp.start()
    w2_cp.start()

    # ---- Phase 1: input projection for ALL timesteps at once (no serial dependency).
    # x_ref is time-major (T*Bp, E); rows [t*Bp, (t+1)*Bp) belong to timestep t.
    # Result goes to VMEM scratch so the unrolled loop below only keeps one slice live.
    gi_scr[...] = (jnp.dot(x_ref[...], wih_ref[...], preferred_element_type=jnp.float32)
                   + bih_ref[...])                               # (T*Bp, 3H)

    whh = whh_ref[...]                                           # (H, 3H), hoisted
    bhn = bhn_ref[...]                                           # (1, H)

    # ---- Phase 2: serial recurrence, fully unrolled (T small & static).
    # t = 0 specialized: h0 == 0  =>  gh == 0 everywhere, so skip the matmul.
    gi0 = gi_scr[0:Bp, :]
    r0 = jax.nn.sigmoid(gi0[:, :H])                              # sigmoid(i_r + b_hr) fused
    z0 = jax.nn.sigmoid(gi0[:, H:2 * H])
    n0 = jnp.tanh(gi0[:, 2 * H:] + r0 * bhn)                     # h @ W_hn == 0
    h = (1.0 - z0) * n0                                          # z0 * h0 == 0

    for t in range(1, seq_len):
        gi = gi_scr[t * Bp:(t + 1) * Bp, :]                      # sublane-aligned static slice
        gh = jnp.dot(h, whh, preferred_element_type=jnp.float32)  # (Bp, 3H), bias fused above
        rz = jax.nn.sigmoid(gi[:, :2 * H] + gh[:, :2 * H])       # r and z in one pass
        r = rz[:, :H]
        z = rz[:, H:]
        n = jnp.tanh(gi[:, 2 * H:] + r * (gh[:, 2 * H:] + bhn))  # b_hh_n stays inside r*(.)
        h = (1.0 - z) * n + z * h

    # ---- Phase 3: classifier epilogue: (Linear -> BatchNorm(train stats) -> ReLU) x2.
    def bn_relu(y, g, b):
        yr = y[:real_b]
        mean = jnp.mean(yr, axis=0, keepdims=True)
        mean_sq = jnp.mean(yr * yr, axis=0, keepdims=True)
        var = jnp.maximum(mean_sq - mean * mean, 0.0)            # one-pass biased variance
        y = (y - mean) * jax.lax.rsqrt(var + BN_EPS) * g + b
        return jnp.maximum(y, 0.0)

    w1_cp.wait()                                                 # w1 needed only now
    y1 = jnp.dot(h, w1_vmem[...], preferred_element_type=jnp.float32) + b1_ref[...]
    y1 = bn_relu(y1, g1_ref[...], be1_ref[...])

    w2_cp.wait()                                                 # w2 needed only now
    y2 = jnp.dot(y1, w2_vmem[...], preferred_element_type=jnp.float32) + b2_ref[...]
    y2 = bn_relu(y2, g2_ref[...], be2_ref[...])
    out_ref[...] = y2


# --------------------------------------------------------------------------------------
# Wrapper
# --------------------------------------------------------------------------------------
@jax.jit
def text_gru_forward(x, params):
    B, T, E = x.shape
    H = HIDDEN

    # Pad batch to a sublane multiple so vreg rows / MXU rows are fully used.
    B_pad = ((B + SUBLANE - 1) // SUBLANE) * SUBLANE
    x_p = jnp.pad(x, ((0, B_pad - B), (0, 0), (0, 0)))

    # Time-major 2-D layout (layout plumbing only, a few KiB at these shapes) so the
    # kernel's per-timestep access is a contiguous, sublane-aligned static slice.
    x_tm = jnp.transpose(x_p, (1, 0, 2)).reshape(T * B_pad, E)

    # Parameter prep (in a real deployment weights would be stored pre-transposed).
    wih_t = params["w_ih"].T                                     # (E, 3H)
    whh_t = params["w_hh"].T                                     # (H, 3H)
    w1_t = params["w1"].T                                        # (H, CLS1)  -> DMA'd in-kernel
    w2_t = params["w2"].T                                        # (CLS1, CLS2) -> DMA'd in-kernel
    # Fused biases: r/z gates take (b_ih + b_hh) once inside the batched projection;
    # the n gate keeps b_hh_n separate (it must sit inside r * (h @ W_hn + b_hn)).
    bih_comb = jnp.concatenate(
        [params["b_ih"][:2 * H] + params["b_hh"][:2 * H], params["b_ih"][2 * H:]]
    )[None, :]                                                   # (1, 3H)
    bhn = params["b_hh"][2 * H:][None, :]                        # (1, H)

    vmem_spec = pl.BlockSpec(memory_space=pltpu.MemorySpace.VMEM)
    any_spec = pl.BlockSpec(memory_space=pl.ANY)

    kernel = functools.partial(text_gru_kernel, seq_len=T, real_b=B)
    out_p = pl.pallas_call(
        kernel,
        out_shape=jax.ShapeDtypeStruct((B_pad, CLS2), jnp.float32),
        # No grid: whole problem is VMEM-resident (~3 MiB) on v5e/v6e/v7x.
        in_specs=[
            vmem_spec,   # x_tm
            vmem_spec,   # wih_t
            vmem_spec,   # whh_t
            vmem_spec,   # bih_comb
            vmem_spec,   # bhn
            vmem_spec,   # b1
            vmem_spec,   # g1
            vmem_spec,   # be1
            vmem_spec,   # b2
            vmem_spec,   # g2
            vmem_spec,   # be2
            any_spec,    # w1 (HBM, manual DMA overlapped with recurrence)
            any_spec,    # w2 (HBM, manual DMA overlapped with recurrence)
        ],
        out_specs=vmem_spec,
        scratch_shapes=[
            pltpu.VMEM((T * B_pad, 3 * H), jnp.float32),         # gi_all
            pltpu.VMEM((H, CLS1), jnp.float32),                  # w1 landing buffer
            pltpu.VMEM((CLS1, CLS2), jnp.float32),               # w2 landing buffer
            pltpu.SemaphoreType.DMA((2,)),
        ],
        compiler_params=pltpu.CompilerParams(vmem_limit_bytes=8 * 1024 * 1024),
    )(
        x_tm, wih_t, whh_t, bih_comb, bhn,
        params["b1"][None, :], params["g1"][None, :], params["be1"][None, :],
        params["b2"][None, :], params["g2"][None, :], params["be2"][None, :],
        w1_t, w2_t,
    )
    return out_p[:B]


# --------------------------------------------------------------------------------------
# Pure-JAX reference (torch-faithful, unfused) + param init
# --------------------------------------------------------------------------------------
def ref_forward(x, p):
    B, T, E = x.shape
    H = HIDDEN

    def step(h, x_t):
        gi = x_t @ p["w_ih"].T + p["b_ih"]
        gh = h @ p["w_hh"].T + p["b_hh"]
        i_r, i_z, i_n = jnp.split(gi, 3, axis=-1)
        h_r, h_z, h_n = jnp.split(gh, 3, axis=-1)
        r = jax.nn.sigmoid(i_r + h_r)
        z = jax.nn.sigmoid(i_z + h_z)
        n = jnp.tanh(i_n + r * h_n)
        return (1.0 - z) * n + z * h, None

    h0 = jnp.zeros((B, H), jnp.float32)
    h, _ = jax.lax.scan(step, h0, jnp.transpose(x, (1, 0, 2)))

    def bn(y, g, b):
        m = jnp.mean(y, 0, keepdims=True)
        v = jnp.mean((y - m) ** 2, 0, keepdims=True)
        return (y - m) / jnp.sqrt(v + BN_EPS) * g + b

    y = h @ p["w1"].T + p["b1"]
    y = jnp.maximum(bn(y, p["g1"], p["be1"]), 0.0)
    y = y @ p["w2"].T + p["b2"]
    y = jnp.maximum(bn(y, p["g2"], p["be2"]), 0.0)
    return y


def init_params(key, emb_dim):
    ks = jax.random.split(key, 8)
    s_gru = 1.0 / np.sqrt(HIDDEN)

    def unif(k, shape, s):
        return jax.random.uniform(k, shape, jnp.float32, -s, s)

    return {
        # GRU (torch layout: (3*H, in) / (3*H, H), gate order r,z,n)
        "w_ih": unif(ks[0], (3 * HIDDEN, emb_dim), s_gru),
        "w_hh": unif(ks[1], (3 * HIDDEN, HIDDEN), s_gru),
        "b_ih": unif(ks[2], (3 * HIDDEN,), s_gru),
        "b_hh": unif(ks[3], (3 * HIDDEN,), s_gru),
        # Linear(128, 1024)
        "w1": unif(ks[4], (CLS1, HIDDEN), 1.0 / np.sqrt(HIDDEN)),
        "b1": unif(ks[5], (CLS1,), 1.0 / np.sqrt(HIDDEN)),
        "g1": jnp.ones((CLS1,), jnp.float32),
        "be1": jnp.zeros((CLS1,), jnp.float32),
        # Linear(1024, 512)
        "w2": unif(ks[6], (CLS2, CLS1), 1.0 / np.sqrt(CLS1)),
        "b2": unif(ks[7], (CLS2,), 1.0 / np.sqrt(CLS1)),
        "g2": jnp.ones((CLS2,), jnp.float32),
        "be2": jnp.zeros((CLS2,), jnp.float32),
    }


if __name__ == "__main__":
    B, T, EMB = 4, 8, 32                              # small shapes consistent with the module
    key = jax.random.PRNGKey(0)
    k_x, k_p = jax.random.split(key)

    x = jax.random.normal(k_x, (B, T, EMB), jnp.float32)
    params = init_params(k_p, EMB)

    out = jax.block_until_ready(text_gru_forward(x, params))
    ref = jax.block_until_ready(ref_forward(x, params))

    assert out.shape == (B, CLS2), out.shape
    np.testing.assert_allclose(np.asarray(out), np.asarray(ref), rtol=1e-4, atol=1e-4)

    print("KERNEL_OK")
</pallas_src>

<mosaic_0001>
module attributes {stable_mosaic.version = 11 : i64} {
  func.func @text_gru_kernel(%arg0: memref<64x32xf32, #tpu.memory_space<vmem>>, %arg1: memref<32x384xf32, #tpu.memory_space<vmem>>, %arg2: memref<128x384xf32, #tpu.memory_space<vmem>>, %arg3: memref<1x384xf32, #tpu.memory_space<vmem>>, %arg4: memref<1x128xf32, #tpu.memory_space<vmem>>, %arg5: memref<1x1024xf32, #tpu.memory_space<vmem>>, %arg6: memref<1x1024xf32, #tpu.memory_space<vmem>>, %arg7: memref<1x1024xf32, #tpu.memory_space<vmem>>, %arg8: memref<1x512xf32, #tpu.memory_space<vmem>>, %arg9: memref<1x512xf32, #tpu.memory_space<vmem>>, %arg10: memref<1x512xf32, #tpu.memory_space<vmem>>, %arg11: memref<128x1024xf32, #tpu.memory_space<any>>, %arg12: memref<1024x512xf32, #tpu.memory_space<any>>, %arg13: memref<8x512xf32, #tpu.memory_space<vmem>>, %arg14: memref<64x384xf32, #tpu.memory_space<vmem>>, %arg15: memref<128x1024xf32, #tpu.memory_space<vmem>>, %arg16: memref<1024x512xf32, #tpu.memory_space<vmem>>, %arg17: memref<2x!tpu.dma_semaphore, #tpu.memory_space<semaphore_mem>>) attributes {dimension_semantics = [], scalar_prefetch = 0 : i64, scratch_operands = 4 : i64, tpu.core_type = #tpu.core_type<tc>} {
    %c0_i32 = arith.constant 0 : i32
    %0 = tpu.memref_slice %arg17[%c0_i32] : memref<2x!tpu.dma_semaphore, #tpu.memory_space<semaphore_mem>> -> memref<1x!tpu.dma_semaphore, #tpu.memory_space<semaphore_mem>>
    %1 = tpu.memref_squeeze %0 : memref<1x!tpu.dma_semaphore, #tpu.memory_space<semaphore_mem>> -> memref<!tpu.dma_semaphore, #tpu.memory_space<semaphore_mem>>
    tpu.enqueue_dma source(%arg11 : memref<128x1024xf32, #tpu.memory_space<any>>) target(%arg15 : memref<128x1024xf32, #tpu.memory_space<vmem>>) target_semaphore(%1 : memref<!tpu.dma_semaphore, #tpu.memory_space<semaphore_mem>>)
    %c1_i32 = arith.constant 1 : i32
    %2 = tpu.memref_slice %arg17[%c1_i32] : memref<2x!tpu.dma_semaphore, #tpu.memory_space<semaphore_mem>> -> memref<1x!tpu.dma_semaphore, #tpu.memory_space<semaphore_mem>>
    %3 = tpu.memref_squeeze %2 : memref<1x!tpu.dma_semaphore, #tpu.memory_space<semaphore_mem>> -> memref<!tpu.dma_semaphore, #tpu.memory_space<semaphore_mem>>
    tpu.enqueue_dma source(%arg12 : memref<1024x512xf32, #tpu.memory_space<any>>) target(%arg16 : memref<1024x512xf32, #tpu.memory_space<vmem>>) target_semaphore(%3 : memref<!tpu.dma_semaphore, #tpu.memory_space<semaphore_mem>>)
    %c0 = arith.constant 0 : index
    %c0_0 = arith.constant 0 : index
    %4 = vector.load %arg0[%c0, %c0_0] : memref<64x32xf32, #tpu.memory_space<vmem>>, vector<64x32xf32>
    %c0_1 = arith.constant 0 : index
    %c0_2 = arith.constant 0 : index
    %5 = vector.load %arg1[%c0_1, %c0_2] : memref<32x384xf32, #tpu.memory_space<vmem>>, vector<32x384xf32>
    %cst = arith.constant dense<0.000000e+00> : vector<64x384xf32>
    %6 = tpu.matmul %4, %5, %cst {dimension_numbers = #tpu.dot_dimension_numbers<[1], [0], [0], [1], [0, 0, 1, 1], [], []>} : vector<64x32xf32>, vector<32x384xf32>, vector<64x384xf32> -> vector<64x384xf32>
    %c0_3 = arith.constant 0 : index
    %c0_4 = arith.constant 0 : index
    %7 = vector.load %arg3[%c0_3, %c0_4] : memref<1x384xf32, #tpu.memory_space<vmem>>, vector<1x384xf32>
    %8 = vector.broadcast %7 : vector<1x384xf32> to vector<64x384xf32>
    %9 = arith.addf %6, %8 : vector<64x384xf32>
    %c0_5 = arith.constant 0 : index
    %c0_6 = arith.constant 0 : index
    %10 = vector.load %arg14[%c0_5, %c0_6] : memref<64x384xf32, #tpu.memory_space<vmem>>, vector<64x384xf32>
    tpu.vector_store %arg14[%c0_5, %c0_6], %9 {strides = array<i32>} : memref<64x384xf32, #tpu.memory_space<vmem>>, vector<64x384xf32>,
    %c0_7 = arith.constant 0 : index
    %c0_8 = arith.constant 0 : index
    %11 = vector.load %arg2[%c0_7, %c0_8] : memref<128x384xf32, #tpu.memory_space<vmem>>, vector<128x384xf32>
    %c0_9 = arith.constant 0 : index
    %c0_10 = arith.constant 0 : index
    %12 = vector.load %arg4[%c0_9, %c0_10] : memref<1x128xf32, #tpu.memory_space<vmem>>, vector<1x128xf32>
    %c0_11 = arith.constant 0 : index
    %c0_12 = arith.constant 0 : index
    %13 = vector.load %arg14[%c0_11, %c0_12] : memref<64x384xf32, #tpu.memory_space<vmem>>, vector<8x384xf32>
    %14 = vector.extract_strided_slice %13 {offsets = [0, 0], sizes = [8, 128], strides = [1, 1]} : vector<8x384xf32> to vector<8x128xf32>
    %15 = arith.negf %14 : vector<8x128xf32>
    %16 = math.exp %15 : vector<8x128xf32>
    %cst_13 = arith.constant 1.000000e+00 : f32
    %17 = vector.broadcast %cst_13 : f32 to vector<8x128xf32>
    %18 = arith.addf %17, %16 : vector<8x128xf32>
    %19 = arith.divf %17, %18 : vector<8x128xf32>
    %20 = vector.extract_strided_slice %13 {offsets = [0, 128], sizes = [8, 128], strides = [1, 1]} : vector<8x384xf32> to vector<8x128xf32>
    %21 = arith.negf %20 : vector<8x128xf32>
    %22 = math.exp %21 : vector<8x128xf32>
    %cst_14 = arith.constant 1.000000e+00 : f32
    %23 = vector.broadcast %cst_14 : f32 to vector<8x128xf32>
    %24 = arith.addf %23, %22 : vector<8x128xf32>
    %25 = arith.divf %23, %24 : vector<8x128xf32>
    %26 = vector.extract_strided_slice %13 {offsets = [0, 256], sizes = [8, 128], strides = [1, 1]} : vector<8x384xf32> to vector<8x128xf32>
    %27 = vector.broadcast %12 : vector<1x128xf32> to vector<8x128xf32>
    %28 = arith.mulf %19, %27 : vector<8x128xf32>
    %29 = arith.addf %26, %28 : vector<8x128xf32>
    %30 = math.tanh %29 : vector<8x128xf32>
    %cst_15 = arith.constant 1.000000e+00 : f32
    %31 = vector.broadcast %cst_15 : f32 to vector<8x128xf32>
    %32 = arith.subf %31, %25 : vector<8x128xf32>
    %33 = arith.mulf %32, %30 : vector<8x128xf32>
    %c8 = arith.constant 8 : index
    %c0_16 = arith.constant 0 : index
    %34 = vector.load %arg14[%c8, %c0_16] : memref<64x384xf32, #tpu.memory_space<vmem>>, vector<8x384xf32>
    %cst_17 = arith.constant dense<0.000000e+00> : vector<8x384xf32>
    %35 = tpu.matmul %33, %11, %cst_17 {dimension_numbers = #tpu.dot_dimension_numbers<[1], [0], [0], [1], [0, 0, 1, 1], [], []>} : vector<8x128xf32>, vector<128x384xf32>, vector<8x384xf32> -> vector<8x384xf32>
    %36 = vector.extract_strided_slice %34 {offsets = [0, 0], sizes = [8, 256], strides = [1, 1]} : vector<8x384xf32> to vector<8x256xf32>
    %37 = vector.extract_strided_slice %35 {offsets = [0, 0], sizes = [8, 256], strides = [1, 1]} : vector<8x384xf32> to vector<8x256xf32>
    %38 = arith.addf %36, %37 : vector<8x256xf32>
    %39 = arith.negf %38 : vector<8x256xf32>
    %40 = math.exp %39 : vector<8x256xf32>
    %cst_18 = arith.constant 1.000000e+00 : f32
    %41 = vector.broadcast %cst_18 : f32 to vector<8x256xf32>
    %42 = arith.addf %41, %40 : vector<8x256xf32>
    %43 = arith.divf %41, %42 : vector<8x256xf32>
    %44 = vector.extract_strided_slice %43 {offsets = [0, 0], sizes = [8, 128], strides = [1, 1]} : vector<8x256xf32> to vector<8x128xf32>
    %45 = vector.extract_strided_slice %43 {offsets = [0, 128], sizes = [8, 128], strides = [1, 1]} : vector<8x256xf32> to vector<8x128xf32>
    %46 = vector.extract_strided_slice %34 {offsets = [0, 256], sizes = [8, 128], strides = [1, 1]} : vector<8x384xf32> to vector<8x128xf32>
    %47 = vector.extract_strided_slice %35 {offsets = [0, 256], sizes = [8, 128], strides = [1, 1]} : vector<8x384xf32> to vector<8x128xf32>
    %48 = vector.broadcast %12 : vector<1x128xf32> to vector<8x128xf32>
    %49 = arith.addf %47, %48 : vector<8x128xf32>
    %50 = arith.mulf %44, %49 : vector<8x128xf32>
    %51 = arith.addf %46, %50 : vector<8x128xf32>
    %52 = math.tanh %51 : vector<8x128xf32>
    %cst_19 = arith.constant 1.000000e+00 : f32
    %53 = vector.broadcast %cst_19 : f32 to vector<8x128xf32>
    %54 = arith.subf %53, %45 : vector<8x128xf32>
    %55 = arith.mulf %54, %52 : vector<8x128xf32>
    %56 = arith.mulf %45, %33 : vector<8x128xf32>
    %57 = arith.addf %55, %56 : vector<8x128xf32>
    %c16 = arith.constant 16 : index
    %c0_20 = arith.constant 0 : index
    %58 = vector.load %arg14[%c16, %c0_20] : memref<64x384xf32, #tpu.memory_space<vmem>>, vector<8x384xf32>
    %cst_21 = arith.constant dense<0.000000e+00> : vector<8x384xf32>
    %59 = tpu.matmul %57, %11, %cst_21 {dimension_numbers = #tpu.dot_dimension_numbers<[1], [0], [0], [1], [0, 0, 1, 1], [], []>} : vector<8x128xf32>, vector<128x384xf32>, vector<8x384xf32> -> vector<8x384xf32>
    %60 = vector.extract_strided_slice %58 {offsets = [0, 0], sizes = [8, 256], strides = [1, 1]} : vector<8x384xf32> to vector<8x256xf32>
    %61 = vector.extract_strided_slice %59 {offsets = [0, 0], sizes = [8, 256], strides = [1, 1]} : vector<8x384xf32> to vector<8x256xf32>
    %62 = arith.addf %60, %61 : vector<8x256xf32>
    %63 = arith.negf %62 : vector<8x256xf32>
    %64 = math.exp %63 : vector<8x256xf32>
    %cst_22 = arith.constant 1.000000e+00 : f32
    %65 = vector.broadcast %cst_22 : f32 to vector<8x256xf32>
    %66 = arith.addf %65, %64 : vector<8x256xf32>
    %67 = arith.divf %65, %66 : vector<8x256xf32>
    %68 = vector.extract_strided_slice %67 {offsets = [0, 0], sizes = [8, 128], strides = [1, 1]} : vector<8x256xf32> to vector<8x128xf32>
    %69 = vector.extract_strided_slice %67 {offsets = [0, 128], sizes = [8, 128], strides = [1, 1]} : vector<8x256xf32> to vector<8x128xf32>
    %70 = vector.extract_strided_slice %58 {offsets = [0, 256], sizes = [8, 128], strides = [1, 1]} : vector<8x384xf32> to vector<8x128xf32>
    %71 = vector.extract_strided_slice %59 {offsets = [0, 256], sizes = [8, 128], strides = [1, 1]} : vector<8x384xf32> to vector<8x128xf32>
    %72 = vector.broadcast %12 : vector<1x128xf32> to vector<8x128xf32>
    %73 = arith.addf %71, %72 : vector<8x128xf32>
    %74 = arith.mulf %68, %73 : vector<8x128xf32>
    %75 = arith.addf %70, %74 : vector<8x128xf32>
    %76 = math.tanh %75 : vector<8x128xf32>
    %cst_23 = arith.constant 1.000000e+00 : f32
    %77 = vector.broadcast %cst_23 : f32 to vector<8x128xf32>
    %78 = arith.subf %77, %69 : vector<8x128xf32>
    %79 = arith.mulf %78, %76 : vector<8x128xf32>
    %80 = arith.mulf %69, %57 : vector<8x128xf32>
    %81 = arith.addf %79, %80 : vector<8x128xf32>
    %c24 = arith.constant 24 : index
    %c0_24 = arith.constant 0 : index
    %82 = vector.load %arg14[%c24, %c0_24] : memref<64x384xf32, #tpu.memory_space<vmem>>, vector<8x384xf32>
    %cst_25 = arith.constant dense<0.000000e+00> : vector<8x384xf32>
    %83 = tpu.matmul %81, %11, %cst_25 {dimension_numbers = #tpu.dot_dimension_numbers<[1], [0], [0], [1], [0, 0, 1, 1], [], []>} : vector<8x128xf32>, vector<128x384xf32>, vector<8x384xf32> -> vector<8x384xf32>
    %84 = vector.extract_strided_slice %82 {offsets = [0, 0], sizes = [8, 256], strides = [1, 1]} : vector<8x384xf32> to vector<8x256xf32>
    %85 = vector.extract_strided_slice %83 {offsets = [0, 0], sizes = [8, 256], strides = [1, 1]} : vector<8x384xf32> to vector<8x256xf32>
    %86 = arith.addf %84, %85 : vector<8x256xf32>
    %87 = arith.negf %86 : vector<8x256xf32>
    %88 = math.exp %87 : vector<8x256xf32>
    %cst_26 = arith.constant 1.000000e+00 : f32
    %89 = vector.broadcast %cst_26 : f32 to vector<8x256xf32>
    %90 = arith.addf %89, %88 : vector<8x256xf32>
    %91 = arith.divf %89, %90 : vector<8x256xf32>
    %92 = vector.extract_strided_slice %91 {offsets = [0, 0], sizes = [8, 128], strides = [1, 1]} : vector<8x256xf32> to vector<8x128xf32>
    %93 = vector.extract_strided_slice %91 {offsets = [0, 128], sizes = [8, 128], strides = [1, 1]} : vector<8x256xf32> to vector<8x128xf32>
    %94 = vector.extract_strided_slice %82 {offsets = [0, 256], sizes = [8, 128], strides = [1, 1]} : vector<8x384xf32> to vector<8x128xf32>
    %95 = vector.extract_strided_slice %83 {offsets = [0, 256], sizes = [8, 128], strides = [1, 1]} : vector<8x384xf32> to vector<8x128xf32>
    %96 = vector.broadcast %12 : vector<1x128xf32> to vector<8x128xf32>
    %97 = arith.addf %95, %96 : vector<8x128xf32>
    %98 = arith.mulf %92, %97 : vector<8x128xf32>
    %99 = arith.addf %94, %98 : vector<8x128xf32>
    %100 = math.tanh %99 : vector<8x128xf32>
    %cst_27 = arith.constant 1.000000e+00 : f32
    %101 = vector.broadcast %cst_27 : f32 to vector<8x128xf32>
    %102 = arith.subf %101, %93 : vector<8x128xf32>
    %103 = arith.mulf %102, %100 : vector<8x128xf32>
    %104 = arith.mulf %93, %81 : vector<8x128xf32>
    %105 = arith.addf %103, %104 : vector<8x128xf32>
    %c32 = arith.constant 32 : index
    %c0_28 = arith.constant 0 : index
    %106 = vector.load %arg14[%c32, %c0_28] : memref<64x384xf32, #tpu.memory_space<vmem>>, vector<8x384xf32>
    %cst_29 = arith.constant dense<0.000000e+00> : vector<8x384xf32>
    %107 = tpu.matmul %105, %11, %cst_29 {dimension_numbers = #tpu.dot_dimension_numbers<[1], [0], [0], [1], [0, 0, 1, 1], [], []>} : vector<8x128xf32>, vector<128x384xf32>, vector<8x384xf32> -> vector<8x384xf32>
    %108 = vector.extract_strided_slice %106 {offsets = [0, 0], sizes = [8, 256], strides = [1, 1]} : vector<8x384xf32> to vector<8x256xf32>
    %109 = vector.extract_strided_slice %107 {offsets = [0, 0], sizes = [8, 256], strides = [1, 1]} : vector<8x384xf32> to vector<8x256xf32>
    %110 = arith.addf %108, %109 : vector<8x256xf32>
    %111 = arith.negf %110 : vector<8x256xf32>
    %112 = math.exp %111 : vector<8x256xf32>
    %cst_30 = arith.constant 1.000000e+00 : f32
    %113 = vector.broadcast %cst_30 : f32 to vector<8x256xf32>
    %114 = arith.addf %113, %112 : vector<8x256xf32>
    %115 = arith.divf %113, %114 : vector<8x256xf32>
    %116 = vector.extract_strided_slice %115 {offsets = [0, 0], sizes = [8, 128], strides = [1, 1]} : vector<8x256xf32> to vector<8x128xf32>
    %117 = vector.extract_strided_slice %115 {offsets = [0, 128], sizes = [8, 128], strides = [1, 1]} : vector<8x256xf32> to vector<8x128xf32>
    %118 = vector.extract_strided_slice %106 {offsets = [0, 256], sizes = [8, 128], strides = [1, 1]} : vector<8x384xf32> to vector<8x128xf32>
    %119 = vector.extract_strided_slice %107 {offsets = [0, 256], sizes = [8, 128], strides = [1, 1]} : vector<8x384xf32> to vector<8x128xf32>
    %120 = vector.broadcast %12 : vector<1x128xf32> to vector<8x128xf32>
    %121 = arith.addf %119, %120 : vector<8x128xf32>
    %122 = arith.mulf %116, %121 : vector<8x128xf32>
    %123 = arith.addf %118, %122 : vector<8x128xf32>
    %124 = math.tanh %123 : vector<8x128xf32>
    %cst_31 = arith.constant 1.000000e+00 : f32
    %125 = vector.broadcast %cst_31 : f32 to vector<8x128xf32>
    %126 = arith.subf %125, %117 : vector<8x128xf32>
    %127 = arith.mulf %126, %124 : vector<8x128xf32>
    %128 = arith.mulf %117, %105 : vector<8x128xf32>
    %129 = arith.addf %127, %128 : vector<8x128xf32>
    %c40 = arith.constant 40 : index
    %c0_32 = arith.constant 0 : index
    %130 = vector.load %arg14[%c40, %c0_32] : memref<64x384xf32, #tpu.memory_space<vmem>>, vector<8x384xf32>
    %cst_33 = arith.constant dense<0.000000e+00> : vector<8x384xf32>
    %131 = tpu.matmul %129, %11, %cst_33 {dimension_numbers = #tpu.dot_dimension_numbers<[1], [0], [0], [1], [0, 0, 1, 1], [], []>} : vector<8x128xf32>, vector<128x384xf32>, vector<8x384xf32> -> vector<8x384xf32>
    %132 = vector.extract_strided_slice %130 {offsets = [0, 0], sizes = [8, 256], strides = [1, 1]} : vector<8x384xf32> to vector<8x256xf32>
    %133 = vector.extract_strided_slice %131 {offsets = [0, 0], sizes = [8, 256], strides = [1, 1]} : vector<8x384xf32> to vector<8x256xf32>
    %134 = arith.addf %132, %133 : vector<8x256xf32>
    %135 = arith.negf %134 : vector<8x256xf32>
    %136 = math.exp %135 : vector<8x256xf32>
    %cst_34 = arith.constant 1.000000e+00 : f32
    %137 = vector.broadcast %cst_34 : f32 to vector<8x256xf32>
    %138 = arith.addf %137, %136 : vector<8x256xf32>
    %139 = arith.divf %137, %138 : vector<8x256xf32>
    %140 = vector.extract_strided_slice %139 {offsets = [0, 0], sizes = [8, 128], strides = [1, 1]} : vector<8x256xf32> to vector<8x128xf32>
    %141 = vector.extract_strided_slice %139 {offsets = [0, 128], sizes = [8, 128], strides = [1, 1]} : vector<8x256xf32> to vector<8x128xf32>
    %142 = vector.extract_strided_slice %130 {offsets = [0, 256], sizes = [8, 128], strides = [1, 1]} : vector<8x384xf32> to vector<8x128xf32>
    %143 = vector.extract_strided_slice %131 {offsets = [0, 256], sizes = [8, 128], strides = [1, 1]} : vector<8x384xf32> to vector<8x128xf32>
    %144 = vector.broadcast %12 : vector<1x128xf32> to vector<8x128xf32>
    %145 = arith.addf %143, %144 : vector<8x128xf32>
    %146 = arith.mulf %140, %145 : vector<8x128xf32>
    %147 = arith.addf %142, %146 : vector<8x128xf32>
    %148 = math.tanh %147 : vector<8x128xf32>
    %cst_35 = arith.constant 1.000000e+00 : f32
    %149 = vector.broadcast %cst_35 : f32 to vector<8x128xf32>
    %150 = arith.subf %149, %141 : vector<8x128xf32>
    %151 = arith.mulf %150, %148 : vector<8x128xf32>
    %152 = arith.mulf %141, %129 : vector<8x128xf32>
    %153 = arith.addf %151, %152 : vector<8x128xf32>
    %c48 = arith.constant 48 : index
    %c0_36 = arith.constant 0 : index
    %154 = vector.load %arg14[%c48, %c0_36] : memref<64x384xf32, #tpu.memory_space<vmem>>, vector<8x384xf32>
    %cst_37 = arith.constant dense<0.000000e+00> : vector<8x384xf32>
    %155 = tpu.matmul %153, %11, %cst_37 {dimension_numbers = #tpu.dot_dimension_numbers<[1], [0], [0], [1], [0, 0, 1, 1], [], []>} : vector<8x128xf32>, vector<128x384xf32>, vector<8x384xf32> -> vector<8x384xf32>
    %156 = vector.extract_strided_slice %154 {offsets = [0, 0], sizes = [8, 256], strides = [1, 1]} : vector<8x384xf32> to vector<8x256xf32>
    %157 = vector.extract_strided_slice %155 {offsets = [0, 0], sizes = [8, 256], strides = [1, 1]} : vector<8x384xf32> to vector<8x256xf32>
    %158 = arith.addf %156, %157 : vector<8x256xf32>
    %159 = arith.negf %158 : vector<8x256xf32>
    %160 = math.exp %159 : vector<8x256xf32>
    %cst_38 = arith.constant 1.000000e+00 : f32
    %161 = vector.broadcast %cst_38 : f32 to vector<8x256xf32>
    %162 = arith.addf %161, %160 : vector<8x256xf32>
    %163 = arith.divf %161, %162 : vector<8x256xf32>
    %164 = vector.extract_strided_slice %163 {offsets = [0, 0], sizes = [8, 128], strides = [1, 1]} : vector<8x256xf32> to vector<8x128xf32>
    %165 = vector.extract_strided_slice %163 {offsets = [0, 128], sizes = [8, 128], strides = [1, 1]} : vector<8x256xf32> to vector<8x128xf32>
    %166 = vector.extract_strided_slice %154 {offsets = [0, 256], sizes = [8, 128], strides = [1, 1]} : vector<8x384xf32> to vector<8x128xf32>
    %167 = vector.extract_strided_slice %155 {offsets = [0, 256], sizes = [8, 128], strides = [1, 1]} : vector<8x384xf32> to vector<8x128xf32>
    %168 = vector.broadcast %12 : vector<1x128xf32> to vector<8x128xf32>
    %169 = arith.addf %167, %168 : vector<8x128xf32>
    %170 = arith.mulf %164, %169 : vector<8x128xf32>
    %171 = arith.addf %166, %170 : vector<8x128xf32>
    %172 = math.tanh %171 : vector<8x128xf32>
    %cst_39 = arith.constant 1.000000e+00 : f32
    %173 = vector.broadcast %cst_39 : f32 to vector<8x128xf32>
    %174 = arith.subf %173, %165 : vector<8x128xf32>
    %175 = arith.mulf %174, %172 : vector<8x128xf32>
    %176 = arith.mulf %165, %153 : vector<8x128xf32>
    %177 = arith.addf %175, %176 : vector<8x128xf32>
    %c56 = arith.constant 56 : index
    %c0_40 = arith.constant 0 : index
    %178 = vector.load %arg14[%c56, %c0_40] : memref<64x384xf32, #tpu.memory_space<vmem>>, vector<8x384xf32>
    %cst_41 = arith.constant dense<0.000000e+00> : vector<8x384xf32>
    %179 = tpu.matmul %177, %11, %cst_41 {dimension_numbers = #tpu.dot_dimension_numbers<[1], [0], [0], [1], [0, 0, 1, 1], [], []>} : vector<8x128xf32>, vector<128x384xf32>, vector<8x384xf32> -> vector<8x384xf32>
    %180 = vector.extract_strided_slice %178 {offsets = [0, 0], sizes = [8, 256], strides = [1, 1]} : vector<8x384xf32> to vector<8x256xf32>
    %181 = vector.extract_strided_slice %179 {offsets = [0, 0], sizes = [8, 256], strides = [1, 1]} : vector<8x384xf32> to vector<8x256xf32>
    %182 = arith.addf %180, %181 : vector<8x256xf32>
    %183 = arith.negf %182 : vector<8x256xf32>
    %184 = math.exp %183 : vector<8x256xf32>
    %cst_42 = arith.constant 1.000000e+00 : f32
    %185 = vector.broadcast %cst_42 : f32 to vector<8x256xf32>
    %186 = arith.addf %185, %184 : vector<8x256xf32>
    %187 = arith.divf %185, %186 : vector<8x256xf32>
    %188 = vector.extract_strided_slice %187 {offsets = [0, 0], sizes = [8, 128], strides = [1, 1]} : vector<8x256xf32> to vector<8x128xf32>
    %189 = vector.extract_strided_slice %187 {offsets = [0, 128], sizes = [8, 128], strides = [1, 1]} : vector<8x256xf32> to vector<8x128xf32>
    %190 = vector.extract_strided_slice %178 {offsets = [0, 256], sizes = [8, 128], strides = [1, 1]} : vector<8x384xf32> to vector<8x128xf32>
    %191 = vector.extract_strided_slice %179 {offsets = [0, 256], sizes = [8, 128], strides = [1, 1]} : vector<8x384xf32> to vector<8x128xf32>
    %192 = vector.broadcast %12 : vector<1x128xf32> to vector<8x128xf32>
    %193 = arith.addf %191, %192 : vector<8x128xf32>
    %194 = arith.mulf %188, %193 : vector<8x128xf32>
    %195 = arith.addf %190, %194 : vector<8x128xf32>
    %196 = math.tanh %195 : vector<8x128xf32>
    %cst_43 = arith.constant 1.000000e+00 : f32
    %197 = vector.broadcast %cst_43 : f32 to vector<8x128xf32>
    %198 = arith.subf %197, %189 : vector<8x128xf32>
    %199 = arith.mulf %198, %196 : vector<8x128xf32>
    %200 = arith.mulf %189, %177 : vector<8x128xf32>
    %201 = arith.addf %199, %200 : vector<8x128xf32>
    %c0_i32_44 = arith.constant 0 : i32
    %202 = tpu.memref_slice %arg17[%c0_i32_44] : memref<2x!tpu.dma_semaphore, #tpu.memory_space<semaphore_mem>> -> memref<1x!tpu.dma_semaphore, #tpu.memory_space<semaphore_mem>>
    %203 = tpu.memref_squeeze %202 : memref<1x!tpu.dma_semaphore, #tpu.memory_space<semaphore_mem>> -> memref<!tpu.dma_semaphore, #tpu.memory_space<semaphore_mem>>
    tpu.wait_dma2 semaphore(%203 : memref<!tpu.dma_semaphore, #tpu.memory_space<semaphore_mem>>) src(%arg11 : memref<128x1024xf32, #tpu.memory_space<any>>) dst(%arg15 : memref<128x1024xf32, #tpu.memory_space<vmem>>)
    %c0_45 = arith.constant 0 : index
    %c0_46 = arith.constant 0 : index
    %204 = vector.load %arg15[%c0_45, %c0_46] : memref<128x1024xf32, #tpu.memory_space<vmem>>, vector<128x1024xf32>
    %cst_47 = arith.constant dense<0.000000e+00> : vector<8x1024xf32>
    %205 = tpu.matmul %201, %204, %cst_47 {dimension_numbers = #tpu.dot_dimension_numbers<[1], [0], [0], [1], [0, 0, 1, 1], [], []>} : vector<8x128xf32>, vector<128x1024xf32>, vector<8x1024xf32> -> vector<8x1024xf32>
    %c0_48 = arith.constant 0 : index
    %c0_49 = arith.constant 0 : index
    %206 = vector.load %arg5[%c0_48, %c0_49] : memref<1x1024xf32, #tpu.memory_space<vmem>>, vector<1x1024xf32>
    %207 = vector.broadcast %206 : vector<1x1024xf32> to vector<8x1024xf32>
    %208 = arith.addf %205, %207 : vector<8x1024xf32>
    %c0_50 = arith.constant 0 : index
    %c0_51 = arith.constant 0 : index
    %209 = vector.load %arg6[%c0_50, %c0_51] : memref<1x1024xf32, #tpu.memory_space<vmem>>, vector<1x1024xf32>
    %c0_52 = arith.constant 0 : index
    %c0_53 = arith.constant 0 : index
    %210 = vector.load %arg7[%c0_52, %c0_53] : memref<1x1024xf32, #tpu.memory_space<vmem>>, vector<1x1024xf32>
    %211 = vector.extract_strided_slice %208 {offsets = [0, 0], sizes = [4, 1024], strides = [1, 1]} : vector<8x1024xf32> to vector<4x1024xf32>
    %cst_54 = arith.constant dense<0.000000e+00> : vector<1024xf32>
    %212 = vector.multi_reduction <add>, %211, %cst_54 [0] : vector<4x1024xf32> to vector<1024xf32>
    %213 = vector.shape_cast %212 : vector<1024xf32> to vector<1x1024xf32>
    %cst_55 = arith.constant 4.000000e+00 : f32
    %214 = vector.broadcast %cst_55 : f32 to vector<1x1024xf32>
    %215 = arith.divf %213, %214 : vector<1x1024xf32>
    %216 = arith.mulf %211, %211 : vector<4x1024xf32>
    %cst_56 = arith.constant dense<0.000000e+00> : vector<1024xf32>
    %217 = vector.multi_reduction <add>, %216, %cst_56 [0] : vector<4x1024xf32> to vector<1024xf32>
    %218 = vector.shape_cast %217 : vector<1024xf32> to vector<1x1024xf32>
    %cst_57 = arith.constant 4.000000e+00 : f32
    %219 = vector.broadcast %cst_57 : f32 to vector<1x1024xf32>
    %220 = arith.divf %218, %219 : vector<1x1024xf32>
    %221 = arith.mulf %215, %215 : vector<1x1024xf32>
    %222 = arith.subf %220, %221 : vector<1x1024xf32>
    %cst_58 = arith.constant 0.000000e+00 : f32
    %223 = vector.broadcast %cst_58 : f32 to vector<1x1024xf32>
    %224 = arith.maximumf %222, %223 : vector<1x1024xf32>
    %225 = vector.broadcast %215 : vector<1x1024xf32> to vector<8x1024xf32>
    %226 = arith.subf %208, %225 : vector<8x1024xf32>
    %cst_59 = arith.constant 9.99999974E-6 : f32
    %227 = vector.broadcast %cst_59 : f32 to vector<1x1024xf32>
    %228 = arith.addf %224, %227 : vector<1x1024xf32>
    %229 = math.rsqrt %228 : vector<1x1024xf32>
    %230 = vector.broadcast %229 : vector<1x1024xf32> to vector<8x1024xf32>
    %231 = arith.mulf %226, %230 : vector<8x1024xf32>
    %232 = vector.broadcast %209 : vector<1x1024xf32> to vector<8x1024xf32>
    %233 = arith.mulf %231, %232 : vector<8x1024xf32>
    %234 = vector.broadcast %210 : vector<1x1024xf32> to vector<8x1024xf32>
    %235 = arith.addf %233, %234 : vector<8x1024xf32>
    %cst_60 = arith.constant 0.000000e+00 : f32
    %236 = vector.broadcast %cst_60 : f32 to vector<8x1024xf32>
    %237 = arith.maximumf %235, %236 : vector<8x1024xf32>
    %c1_i32_61 = arith.constant 1 : i32
    %238 = tpu.memref_slice %arg17[%c1_i32_61] : memref<2x!tpu.dma_semaphore, #tpu.memory_space<semaphore_mem>> -> memref<1x!tpu.dma_semaphore, #tpu.memory_space<semaphore_mem>>
    %239 = tpu.memref_squeeze %238 : memref<1x!tpu.dma_semaphore, #tpu.memory_space<semaphore_mem>> -> memref<!tpu.dma_semaphore, #tpu.memory_space<semaphore_mem>>
    tpu.wait_dma2 semaphore(%239 : memref<!tpu.dma_semaphore, #tpu.memory_space<semaphore_mem>>) src(%arg12 : memref<1024x512xf32, #tpu.memory_space<any>>) dst(%arg16 : memref<1024x512xf32, #tpu.memory_space<vmem>>)
    %c0_62 = arith.constant 0 : index
    %c0_63 = arith.constant 0 : index
    %240 = vector.load %arg16[%c0_62, %c0_63] : memref<1024x512xf32, #tpu.memory_space<vmem>>, vector<1024x512xf32>
    %cst_64 = arith.constant dense<0.000000e+00> : vector<8x512xf32>
    %241 = tpu.matmul %237, %240, %cst_64 {dimension_numbers = #tpu.dot_dimension_numbers<[1], [0], [0], [1], [0, 0, 1, 1], [], []>} : vector<8x1024xf32>, vector<1024x512xf32>, vector<8x512xf32> -> vector<8x512xf32>
    %c0_65 = arith.constant 0 : index
    %c0_66 = arith.constant 0 : index
    %242 = vector.load %arg8[%c0_65, %c0_66] : memref<1x512xf32, #tpu.memory_space<vmem>>, vector<1x512xf32>
    %243 = vector.broadcast %242 : vector<1x512xf32> to vector<8x512xf32>
    %244 = arith.addf %241, %243 : vector<8x512xf32>
    %c0_67 = arith.constant 0 : index
    %c0_68 = arith.constant 0 : index
    %245 = vector.load %arg9[%c0_67, %c0_68] : memref<1x512xf32, #tpu.memory_space<vmem>>, vector<1x512xf32>
    %c0_69 = arith.constant 0 : index
    %c0_70 = arith.constant 0 : index
    %246 = vector.load %arg10[%c0_69, %c0_70] : memref<1x512xf32, #tpu.memory_space<vmem>>, vector<1x512xf32>
    %247 = vector.extract_strided_slice %244 {offsets = [0, 0], sizes = [4, 512], strides = [1, 1]} : vector<8x512xf32> to vector<4x512xf32>
    %cst_71 = arith.constant dense<0.000000e+00> : vector<512xf32>
    %248 = vector.multi_reduction <add>, %247, %cst_71 [0] : vector<4x512xf32> to vector<512xf32>
    %249 = vector.shape_cast %248 : vector<512xf32> to vector<1x512xf32>
    %cst_72 = arith.constant 4.000000e+00 : f32
    %250 = vector.broadcast %cst_72 : f32 to vector<1x512xf32>
    %251 = arith.divf %249, %250 : vector<1x512xf32>
    %252 = arith.mulf %247, %247 : vector<4x512xf32>
    %cst_73 = arith.constant dense<0.000000e+00> : vector<512xf32>
    %253 = vector.multi_reduction <add>, %252, %cst_73 [0] : vector<4x512xf32> to vector<512xf32>
    %254 = vector.shape_cast %253 : vector<512xf32> to vector<1x512xf32>
    %cst_74 = arith.constant 4.000000e+00 : f32
    %255 = vector.broadcast %cst_74 : f32 to vector<1x512xf32>
    %256 = arith.divf %254, %255 : vector<1x512xf32>
    %257 = arith.mulf %251, %251 : vector<1x512xf32>
    %258 = arith.subf %256, %257 : vector<1x512xf32>
    %cst_75 = arith.constant 0.000000e+00 : f32
    %259 = vector.broadcast %cst_75 : f32 to vector<1x512xf32>
    %260 = arith.maximumf %258, %259 : vector<1x512xf32>
    %261 = vector.broadcast %251 : vector<1x512xf32> to vector<8x512xf32>
    %262 = arith.subf %244, %261 : vector<8x512xf32>
    %cst_76 = arith.constant 9.99999974E-6 : f32
    %263 = vector.broadcast %cst_76 : f32 to vector<1x512xf32>
    %264 = arith.addf %260, %263 : vector<1x512xf32>
    %265 = math.rsqrt %264 : vector<1x512xf32>
    %266 = vector.broadcast %265 : vector<1x512xf32> to vector<8x512xf32>
    %267 = arith.mulf %262, %266 : vector<8x512xf32>
    %268 = vector.broadcast %245 : vector<1x512xf32> to vector<8x512xf32>
    %269 = arith.mulf %267, %268 : vector<8x512xf32>
    %270 = vector.broadcast %246 : vector<1x512xf32> to vector<8x512xf32>
    %271 = arith.addf %269, %270 : vector<8x512xf32>
    %cst_77 = arith.constant 0.000000e+00 : f32
    %272 = vector.broadcast %cst_77 : f32 to vector<8x512xf32>
    %273 = arith.maximumf %271, %272 : vector<8x512xf32>
    %c0_78 = arith.constant 0 : index
    %c0_79 = arith.constant 0 : index
    %274 = vector.load %arg13[%c0_78, %c0_79] : memref<8x512xf32, #tpu.memory_space<vmem>>, vector<8x512xf32>
    tpu.vector_store %arg13[%c0_78, %c0_79], %273 {strides = array<i32>} : memref<8x512xf32, #tpu.memory_space<vmem>>, vector<8x512xf32>,
    return
  }
}

</mosaic_0001>

<llo_original>
// kernel: text_gru_forward.1
$region0: #{text_gru_forward.1}
  #allocation0 [shape = 'u32[]', space=smem, size = 0x4, offset = 0x4, fixed_abs, tag = 'smem constant byte address 0x4 - core index']
  #allocation1 [shape = 'u32[144,128]{1,0:T(1,128)}', space=vmem, size = 0x12000, scoped, tag = 'internal scratch']
  #allocation2 [shape = 'f32[64,384]{1,0:T(8,128)}', space=vmem, size = 0x18000, scoped, tag = 'scratch operand']
  #allocation3 [shape = 'f32[128,1024]{1,0:T(8,128)}', space=vmem, size = 0x80000, scoped, tag = 'scratch operand']
  #allocation4 [shape = 'f32[1024,512]{1,0:T(8,128)}', space=vmem, size = 0x200000, scoped, tag = 'scratch operand']
  #allocation5 [shape = 's32[2]{0}', space=sflag, size = 0x8, scoped, tag = 'scratch operand']
  #allocation6 [shape = 's32[]', space=sflag, size = 0x4, offset = 0, fixed_abs, tag = 'sflag constant byte address 0x0 - dummy sync flag']
  #allocation7 [shape = 's32[]', space=sflag, size = 0x4, offset = 0, fixed_abs, tag = 'sflag constant byte address 0x0 - dummy sync flag']
  %s0 = inlined_call_operand.vmem [shape: f32[64,32], index: 0, kind: input, shape index: {}]
  %s1 = inlined_call_operand.vmem [shape: f32[32,384], index: 1, kind: input, shape index: {}]
  %s2 = inlined_call_operand.vmem [shape: f32[128,384], index: 2, kind: input, shape index: {}]
  %s3 = inlined_call_operand.vmem [shape: f32[1,384], index: 3, kind: input, shape index: {}]
  %s4 = inlined_call_operand.vmem [shape: f32[1,128], index: 4, kind: input, shape index: {}]
  %s5 = inlined_call_operand.vmem [shape: f32[1,1024], index: 5, kind: input, shape index: {}]
  %s6 = inlined_call_operand.vmem [shape: f32[1,1024], index: 6, kind: input, shape index: {}]
  %s7 = inlined_call_operand.vmem [shape: f32[1,1024], index: 7, kind: input, shape index: {}]
  %s8 = inlined_call_operand.vmem [shape: f32[1,512], index: 8, kind: input, shape index: {}]
  %s9 = inlined_call_operand.vmem [shape: f32[1,512], index: 9, kind: input, shape index: {}]
  %s10 = inlined_call_operand.vmem [shape: f32[1,512], index: 10, kind: input, shape index: {}]
  %s11 = inlined_call_operand.vmem [shape: f32[128,1024], index: 11, kind: input, shape index: {}]
  %s12 = inlined_call_operand.vmem [shape: f32[1024,512], index: 12, kind: input, shape index: {}]
  %s13 = inlined_call_operand.vmem [shape: f32[8,512], index: 13, kind: output, shape index: {}]
  %s14 = sld [smem:[#allocation0]]
  $region122: #{text_gru_forward.1} parent=0
    _
  %s16 = ssub.s32 1, %s14
  %s17 = scalar_select 0, %s16, %s14
  // Predicated region
  $region2: #{text_gru_forward.1} parent=0 // pred_check
    _
  $region3: #{text_gru_forward.1} parent=0 // pred_check_branch
    %19 = sbr.rel (0) target = $region5
  $region4: #{text_gru_forward.1} parent=0 // pred_region
    _
  $region5: #{text_gru_forward.1} parent=0 // pred_fallthru
    _
  // Predicated region
  $region6: #{text_gru_forward.1} parent=0 // pred_check
    _
  $region7: #{text_gru_forward.1} parent=0 // pred_check_branch
    %21 = sbr.rel (0) target = $region9
  $region8: #{text_gru_forward.1} parent=0 // pred_region
    _
  $region9: #{text_gru_forward.1} parent=0 // pred_fallthru
    _
  // Predicated region
  $region10: #{text_gru_forward.1} parent=0 // pred_check
    _
  $region11: #{text_gru_forward.1} parent=0 // pred_check_branch
    %23 = sbr.rel (0) target = $region13
  $region12: #{text_gru_forward.1} parent=0 // pred_region
    _
  $region13: #{text_gru_forward.1} parent=0 // pred_fallthru
    _
  // Predicated region
  $region14: #{text_gru_forward.1} parent=0 // pred_check
    _
  $region15: #{text_gru_forward.1} parent=0 // pred_check_branch
    %25 = sbr.rel (0) target = $region17
  $region16: #{text_gru_forward.1} parent=0 // pred_region
    _
  $region17: #{text_gru_forward.1} parent=0 // pred_fallthru
    _
  // Predicated region
  $region18: #{text_gru_forward.1} parent=0 // pred_check
    _
  $region19: #{text_gru_forward.1} parent=0 // pred_check_branch
    %27 = sbr.rel (0) target = $region21
  $region20: #{text_gru_forward.1} parent=0 // pred_region
    _
  $region21: #{text_gru_forward.1} parent=0 // pred_fallthru
    _
  // Predicated region
  $region22: #{text_gru_forward.1} parent=0 // pred_check
    _
  $region23: #{text_gru_forward.1} parent=0 // pred_check_branch
    %29 = sbr.rel (0) target = $region25
  $region24: #{text_gru_forward.1} parent=0 // pred_region
    _
  $region25: #{text_gru_forward.1} parent=0 // pred_fallthru
    _
  // Predicated region
  $region26: #{text_gru_forward.1} parent=0 // pred_check
    _
  $region27: #{text_gru_forward.1} parent=0 // pred_check_branch
    %31 = sbr.rel (0) target = $region29
  $region28: #{text_gru_forward.1} parent=0 // pred_region
    _
  $region29: #{text_gru_forward.1} parent=0 // pred_fallthru
    _
  // Predicated region
  $region30: #{text_gru_forward.1} parent=0 // pred_check
    _
  $region31: #{text_gru_forward.1} parent=0 // pred_check_branch
    %33 = sbr.rel (0) target = $region33
  $region32: #{text_gru_forward.1} parent=0 // pred_region
    _
  $region33: #{text_gru_forward.1} parent=0 // pred_fallthru
    _
  // Predicated region
  $region34: #{text_gru_forward.1} parent=0 // pred_check
    _
  $region35: #{text_gru_forward.1} parent=0 // pred_check_branch
    %35 = sbr.rel (0) target = $region37
  $region36: #{text_gru_forward.1} parent=0 // pred_region
    _
  $region37: #{text_gru_forward.1} parent=0 // pred_fallthru
    _
  // Predicated region
  $region38: #{text_gru_forward.1} parent=0 // pred_check
    _
  $region39: #{text_gru_forward.1} parent=0 // pred_check_branch
    %37 = sbr.rel (0) target = $region41
  $region40: #{text_gru_forward.1} parent=0 // pred_region
    _
  $region41: #{text_gru_forward.1} parent=0 // pred_fallthru
    _
  // Predicated region
  $region42: #{text_gru_forward.1} parent=0 // pred_check
    _
  $region43: #{text_gru_forward.1} parent=0 // pred_check_branch
    %39 = sbr.rel (0) target = $region45
  $region44: #{text_gru_forward.1} parent=0 // pred_region
    _
  $region45: #{text_gru_forward.1} parent=0 // pred_fallthru
    _
  %p41 = scmp.lt.u32.totalorder 1024, 8
  %p42 = pneg %p41
  // Predicated region
  $region46: #{text_gru_forward.1} parent=0 // pred_check
    _
  $region47: #{text_gru_forward.1} parent=0 // pred_check_branch
    %44 = sbr.rel (%p41) target = $region49
  $region48: #{text_gru_forward.1} parent=0 // pred_region
    %s59 = sand.u32 1024, 7
    %p60 = scmp.eq.s32.totalorder %s59, 0
    // Predicated region
    $region61: #{text_gru_forward.1} parent=48 // pred_check
      %p61 = pneg %p60
    $region62: #{text_gru_forward.1} parent=48 // pred_check_branch
      %63 = sbr.rel (%p61) target = $region64
    $region63: #{text_gru_forward.1} parent=48 // pred_region
      loop: start=0, step=1, limit=1
      $region65: #{text_gru_forward.1} parent=63 // loop_pre_header
        _
      $region66: #{text_gru_forward.1} parent=63 // loop_header
        %s65 = sphi 0, %s69
        %p66 = scmp.ge.s32.totalorder %s65, 1
        %s70 = sphi %s11, %s11
        %s71 = sphi [#allocation3], [#allocation3]
      $region67: #{text_gru_forward.1} parent=63 // loop_header_branch
        %68 = sbr.rel (%p66) target = $region71
      $region68: #{text_gru_forward.1} parent=63 // loop_body
        %v72 = vld [vmem:[%s70] sm:$0xff]
        %73 = vst [vmem:[%s71] sm:$0xff] %v72
        %v74 = vld [vmem:[%s70 + $0x8] sm:$0xff]
        %75 = vst [vmem:[%s71 + $0x8] sm:$0xff] %v74
        %v76 = vld [vmem:[%s70 + $0x10] sm:$0xff]
        %77 = vst [vmem:[%s71 + $0x10] sm:$0xff] %v76
        %v78 = vld [vmem:[%s70 + $0x18] sm:$0xff]
        %79 = vst [vmem:[%s71 + $0x18] sm:$0xff] %v78
        %v80 = vld [vmem:[%s70 + $0x20] sm:$0xff]
        %81 = vst [vmem:[%s71 + $0x20] sm:$0xff] %v80
        %v82 = vld [vmem:[%s70 + $0x28] sm:$0xff]
        %83 = vst [vmem:[%s71 + $0x28] sm:$0xff] %v82
        %v84 = vld [vmem:[%s70 + $0x30] sm:$0xff]
        %85 = vst [vmem:[%s71 + $0x30] sm:$0xff] %v84
        %v86 = vld [vmem:[%s70 + $0x38] sm:$0xff]
        %87 = vst [vmem:[%s71 + $0x38] sm:$0xff] %v86
        %v88 = vld [vmem:[%s70 + $0x40] sm:$0xff]
        %89 = vst [vmem:[%s71 + $0x40] sm:$0xff] %v88
        %v90 = vld [vmem:[%s70 + $0x48] sm:$0xff]
        %91 = vst [vmem:[%s71 + $0x48] sm:$0xff] %v90
        %v92 = vld [vmem:[%s70 + $0x50] sm:$0xff]
        %93 = vst [vmem:[%s71 + $0x50] sm:$0xff] %v92
        %v94 = vld [vmem:[%s70 + $0x58] sm:$0xff]
        %95 = vst [vmem:[%s71 + $0x58] sm:$0xff] %v94
        %v96 = vld [vmem:[%s70 + $0x60] sm:$0xff]
        %97 = vst [vmem:[%s71 + $0x60] sm:$0xff] %v96
        %v98 = vld [vmem:[%s70 + $0x68] sm:$0xff]
        %99 = vst [vmem:[%s71 + $0x68] sm:$0xff] %v98
        %v100 = vld [vmem:[%s70 + $0x70] sm:$0xff]
        %101 = vst [vmem:[%s71 + $0x70] sm:$0xff] %v100
        %v102 = vld [vmem:[%s70 + $0x78] sm:$0xff]
        %103 = vst [vmem:[%s71 + $0x78] sm:$0xff] %v102
        %v104 = vld [vmem:[%s70 + $0x80] sm:$0xff]
        %105 = vst [vmem:[%s71 + $0x80] sm:$0xff] %v104
        %v106 = vld [vmem:[%s70 + $0x88] sm:$0xff]
        %107 = vst [vmem:[%s71 + $0x88] sm:$0xff] %v106
        %v108 = vld [vmem:[%s70 + $0x90] sm:$0xff]
        %109 = vst [vmem:[%s71 + $0x90] sm:$0xff] %v108
        %v110 = vld [vmem:[%s70 + $0x98] sm:$0xff]
        %111 = vst [vmem:[%s71 + $0x98] sm:$0xff] %v110
        %v112 = vld [vmem:[%s70 + $0xa0] sm:$0xff]
        %113 = vst [vmem:[%s71 + $0xa0] sm:$0xff] %v112
        %v114 = vld [vmem:[%s70 + $0xa8] sm:$0xff]
        %115 = vst [vmem:[%s71 + $0xa8] sm:$0xff] %v114
        %v116 = vld [vmem:[%s70 + $0xb0] sm:$0xff]
        %117 = vst [vmem:[%s71 + $0xb0] sm:$0xff] %v116
        %v118 = vld [vmem:[%s70 + $0xb8] sm:$0xff]
        %119 = vst [vmem:[%s71 + $0xb8] sm:$0xff] %v118
        %v120 = vld [vmem:[%s70 + $0xc0] sm:$0xff]
        %121 = vst [vmem:[%s71 + $0xc0] sm:$0xff] %v120
        %v122 = vld [vmem:[%s70 + $0xc8] sm:$0xff]
        %123 = vst [vmem:[%s71 + $0xc8] sm:$0xff] %v122
        %v124 = vld [vmem:[%s70 + $0xd0] sm:$0xff]
        %125 = vst [vmem:[%s71 + $0xd0] sm:$0xff] %v124
        %v126 = vld [vmem:[%s70 + $0xd8] sm:$0xff]
        %127 = vst [vmem:[%s71 + $0xd8] sm:$0xff] %v126
        %v128 = vld [vmem:[%s70 + $0xe0] sm:$0xff]
        %129 = vst [vmem:[%s71 + $0xe0] sm:$0xff] %v128
        %v130 = vld [vmem:[%s70 + $0xe8] sm:$0xff]
        %131 = vst [vmem:[%s71 + $0xe8] sm:$0xff] %v130
        %v132 = vld [vmem:[%s70 + $0xf0] sm:$0xff]
        %133 = vst [vmem:[%s71 + $0xf0] sm:$0xff] %v132
        %v134 = vld [vmem:[%s70 + $0xf8] sm:$0xff]
        %135 = vst [vmem:[%s71 + $0xf8] sm:$0xff] %v134
        %v136 = vld [vmem:[%s70 + $0x100] sm:$0xff]
        %137 = vst [vmem:[%s71 + $0x100] sm:$0xff] %v136
        %v138 = vld [vmem:[%s70 + $0x108] sm:$0xff]
        %139 = vst [vmem:[%s71 + $0x108] sm:$0xff] %v138
        %v140 = vld [vmem:[%s70 + $0x110] sm:$0xff]
        %141 = vst [vmem:[%s71 + $0x110] sm:$0xff] %v140
        %v142 = vld [vmem:[%s70 + $0x118] sm:$0xff]
        %143 = vst [vmem:[%s71 + $0x118] sm:$0xff] %v142
        %v144 = vld [vmem:[%s70 + $0x120] sm:$0xff]
        %145 = vst [vmem:[%s71 + $0x120] sm:$0xff] %v144
        %v146 = vld [vmem:[%s70 + $0x128] sm:$0xff]
        %147 = vst [vmem:[%s71 + $0x128] sm:$0xff] %v146
        %v148 = vld [vmem:[%s70 + $0x130] sm:$0xff]
        %149 = vst [vmem:[%s71 + $0x130] sm:$0xff] %v148
        %v150 = vld [vmem:[%s70 + $0x138] sm:$0xff]
        %151 = vst [vmem:[%s71 + $0x138] sm:$0xff] %v150
        %v152 = vld [vmem:[%s70 + $0x140] sm:$0xff]
        %153 = vst [vmem:[%s71 + $0x140] sm:$0xff] %v152
        %v154 = vld [vmem:[%s70 + $0x148] sm:$0xff]
        %155 = vst [vmem:[%s71 + $0x148] sm:$0xff] %v154
        %v156 = vld [vmem:[%s70 + $0x150] sm:$0xff]
        %157 = vst [vmem:[%s71 + $0x150] sm:$0xff] %v156
        %v158 = vld [vmem:[%s70 + $0x158] sm:$0xff]
        %159 = vst [vmem:[%s71 + $0x158] sm:$0xff] %v158
        %v160 = vld [vmem:[%s70 + $0x160] sm:$0xff]
        %161 = vst [vmem:[%s71 + $0x160] sm:$0xff] %v160
        %v162 = vld [vmem:[%s70 + $0x168] sm:$0xff]
        %163 = vst [vmem:[%s71 + $0x168] sm:$0xff] %v162
        %v164 = vld [vmem:[%s70 + $0x170] sm:$0xff]
        %165 = vst [vmem:[%s71 + $0x170] sm:$0xff] %v164
        %v166 = vld [vmem:[%s70 + $0x178] sm:$0xff]
        %167 = vst [vmem:[%s71 + $0x178] sm:$0xff] %v166
        %v168 = vld [vmem:[%s70 + $0x180] sm:$0xff]
        %169 = vst [vmem:[%s71 + $0x180] sm:$0xff] %v168
        %v170 = vld [vmem:[%s70 + $0x188] sm:$0xff]
        %171 = vst [vmem:[%s71 + $0x188] sm:$0xff] %v170
        %v172 = vld [vmem:[%s70 + $0x190] sm:$0xff]
        %173 = vst [vmem:[%s71 + $0x190] sm:$0xff] %v172
        %v174 = vld [vmem:[%s70 + $0x198] sm:$0xff]
        %175 = vst [vmem:[%s71 + $0x198] sm:$0xff] %v174
        %v176 = vld [vmem:[%s70 + $0x1a0] sm:$0xff]
        %177 = vst [vmem:[%s71 + $0x1a0] sm:$0xff] %v176
        %v178 = vld [vmem:[%s70 + $0x1a8] sm:$0xff]
        %179 = vst [vmem:[%s71 + $0x1a8] sm:$0xff] %v178
        %v180 = vld [vmem:[%s70 + $0x1b0] sm:$0xff]
        %181 = vst [vmem:[%s71 + $0x1b0] sm:$0xff] %v180
        %v182 = vld [vmem:[%s70 + $0x1b8] sm:$0xff]
        %183 = vst [vmem:[%s71 + $0x1b8] sm:$0xff] %v182
        %v184 = vld [vmem:[%s70 + $0x1c0] sm:$0xff]
        %185 = vst [vmem:[%s71 + $0x1c0] sm:$0xff] %v184
        %v186 = vld [vmem:[%s70 + $0x1c8] sm:$0xff]
        %187 = vst [vmem:[%s71 + $0x1c8] sm:$0xff] %v186
        %v188 = vld [vmem:[%s70 + $0x1d0] sm:$0xff]
        %189 = vst [vmem:[%s71 + $0x1d0] sm:$0xff] %v188
        %v190 = vld [vmem:[%s70 + $0x1d8] sm:$0xff]
        %191 = vst [vmem:[%s71 + $0x1d8] sm:$0xff] %v190
        %v192 = vld [vmem:[%s70 + $0x1e0] sm:$0xff]
        %193 = vst [vmem:[%s71 + $0x1e0] sm:$0xff] %v192
        %v194 = vld [vmem:[%s70 + $0x1e8] sm:$0xff]
        %195 = vst [vmem:[%s71 + $0x1e8] sm:$0xff] %v194
        %v196 = vld [vmem:[%s70 + $0x1f0] sm:$0xff]
        %197 = vst [vmem:[%s71 + $0x1f0] sm:$0xff] %v196
        %v198 = vld [vmem:[%s70 + $0x1f8] sm:$0xff]
        %199 = vst [vmem:[%s71 + $0x1f8] sm:$0xff] %v198
        %v200 = vld [vmem:[%s70 + $0x200] sm:$0xff]
        %201 = vst [vmem:[%s71 + $0x200] sm:$0xff] %v200
        %v202 = vld [vmem:[%s70 + $0x208] sm:$0xff]
        %203 = vst [vmem:[%s71 + $0x208] sm:$0xff] %v202
        %v204 = vld [vmem:[%s70 + $0x210] sm:$0xff]
        %205 = vst [vmem:[%s71 + $0x210] sm:$0xff] %v204
        %v206 = vld [vmem:[%s70 + $0x218] sm:$0xff]
        %207 = vst [vmem:[%s71 + $0x218] sm:$0xff] %v206
        %v208 = vld [vmem:[%s70 + $0x220] sm:$0xff]
        %209 = vst [vmem:[%s71 + $0x220] sm:$0xff] %v208
        %v210 = vld [vmem:[%s70 + $0x228] sm:$0xff]
        %211 = vst [vmem:[%s71 + $0x228] sm:$0xff] %v210
        %v212 = vld [vmem:[%s70 + $0x230] sm:$0xff]
        %213 = vst [vmem:[%s71 + $0x230] sm:$0xff] %v212
        %v214 = vld [vmem:[%s70 + $0x238] sm:$0xff]
        %215 = vst [vmem:[%s71 + $0x238] sm:$0xff] %v214
        %v216 = vld [vmem:[%s70 + $0x240] sm:$0xff]
        %217 = vst [vmem:[%s71 + $0x240] sm:$0xff] %v216
        %v218 = vld [vmem:[%s70 + $0x248] sm:$0xff]
        %219 = vst [vmem:[%s71 + $0x248] sm:$0xff] %v218
        %v220 = vld [vmem:[%s70 + $0x250] sm:$0xff]
        %221 = vst [vmem:[%s71 + $0x250] sm:$0xff] %v220
        %v222 = vld [vmem:[%s70 + $0x258] sm:$0xff]
        %223 = vst [vmem:[%s71 + $0x258] sm:$0xff] %v222
        %v224 = vld [vmem:[%s70 + $0x260] sm:$0xff]
        %225 = vst [vmem:[%s71 + $0x260] sm:$0xff] %v224
        %v226 = vld [vmem:[%s70 + $0x268] sm:$0xff]
        %227 = vst [vmem:[%s71 + $0x268] sm:$0xff] %v226
        %v228 = vld [vmem:[%s70 + $0x270] sm:$0xff]
        %229 = vst [vmem:[%s71 + $0x270] sm:$0xff] %v228
        %v230 = vld [vmem:[%s70 + $0x278] sm:$0xff]
        %231 = vst [vmem:[%s71 + $0x278] sm:$0xff] %v230
        %v232 = vld [vmem:[%s70 + $0x280] sm:$0xff]
        %233 = vst [vmem:[%s71 + $0x280] sm:$0xff] %v232
        %v234 = vld [vmem:[%s70 + $0x288] sm:$0xff]
        %235 = vst [vmem:[%s71 + $0x288] sm:$0xff] %v234
        %v236 = vld [vmem:[%s70 + $0x290] sm:$0xff]
        %237 = vst [vmem:[%s71 + $0x290] sm:$0xff] %v236
        %v238 = vld [vmem:[%s70 + $0x298] sm:$0xff]
        %239 = vst [vmem:[%s71 + $0x298] sm:$0xff] %v238
        %v240 = vld [vmem:[%s70 + $0x2a0] sm:$0xff]
        %241 = vst [vmem:[%s71 + $0x2a0] sm:$0xff] %v240
        %v242 = vld [vmem:[%s70 + $0x2a8] sm:$0xff]
        %243 = vst [vmem:[%s71 + $0x2a8] sm:$0xff] %v242
        %v244 = vld [vmem:[%s70 + $0x2b0] sm:$0xff]
        %245 = vst [vmem:[%s71 + $0x2b0] sm:$0xff] %v244
        %v246 = vld [vmem:[%s70 + $0x2b8] sm:$0xff]
        %247 = vst [vmem:[%s71 + $0x2b8] sm:$0xff] %v246
        %v248 = vld [vmem:[%s70 + $0x2c0] sm:$0xff]
        %249 = vst [vmem:[%s71 + $0x2c0] sm:$0xff] %v248
        %v250 = vld [vmem:[%s70 + $0x2c8] sm:$0xff]
        %251 = vst [vmem:[%s71 + $0x2c8] sm:$0xff] %v250
        %v252 = vld [vmem:[%s70 + $0x2d0] sm:$0xff]
        %253 = vst [vmem:[%s71 + $0x2d0] sm:$0xff] %v252
        %v254 = vld [vmem:[%s70 + $0x2d8] sm:$0xff]
        %255 = vst [vmem:[%s71 + $0x2d8] sm:$0xff] %v254
        %v256 = vld [vmem:[%s70 + $0x2e0] sm:$0xff]
        %257 = vst [vmem:[%s71 + $0x2e0] sm:$0xff] %v256
        %v258 = vld [vmem:[%s70 + $0x2e8] sm:$0xff]
        %259 = vst [vmem:[%s71 + $0x2e8] sm:$0xff] %v258
        %v260 = vld [vmem:[%s70 + $0x2f0] sm:$0xff]
        %261 = vst [vmem:[%s71 + $0x2f0] sm:$0xff] %v260
        %v262 = vld [vmem:[%s70 + $0x2f8] sm:$0xff]
        %263 = vst [vmem:[%s71 + $0x2f8] sm:$0xff] %v262
        %v264 = vld [vmem:[%s70 + $0x300] sm:$0xff]
        %265 = vst [vmem:[%s71 + $0x300] sm:$0xff] %v264
        %v266 = vld [vmem:[%s70 + $0x308] sm:$0xff]
        %267 = vst [vmem:[%s71 + $0x308] sm:$0xff] %v266
        %v268 = vld [vmem:[%s70 + $0x310] sm:$0xff]
        %269 = vst [vmem:[%s71 + $0x310] sm:$0xff] %v268
        %v270 = vld [vmem:[%s70 + $0x318] sm:$0xff]
        %271 = vst [vmem:[%s71 + $0x318] sm:$0xff] %v270
        %v272 = vld [vmem:[%s70 + $0x320] sm:$0xff]
        %273 = vst [vmem:[%s71 + $0x320] sm:$0xff] %v272
        %v274 = vld [vmem:[%s70 + $0x328] sm:$0xff]
        %275 = vst [vmem:[%s71 + $0x328] sm:$0xff] %v274
        %v276 = vld [vmem:[%s70 + $0x330] sm:$0xff]
        %277 = vst [vmem:[%s71 + $0x330] sm:$0xff] %v276
        %v278 = vld [vmem:[%s70 + $0x338] sm:$0xff]
        %279 = vst [vmem:[%s71 + $0x338] sm:$0xff] %v278
        %v280 = vld [vmem:[%s70 + $0x340] sm:$0xff]
        %281 = vst [vmem:[%s71 + $0x340] sm:$0xff] %v280
        %v282 = vld [vmem:[%s70 + $0x348] sm:$0xff]
        %283 = vst [vmem:[%s71 + $0x348] sm:$0xff] %v282
        %v284 = vld [vmem:[%s70 + $0x350] sm:$0xff]
        %285 = vst [vmem:[%s71 + $0x350] sm:$0xff] %v284
        %v286 = vld [vmem:[%s70 + $0x358] sm:$0xff]
        %287 = vst [vmem:[%s71 + $0x358] sm:$0xff] %v286
        %v288 = vld [vmem:[%s70 + $0x360] sm:$0xff]
        %289 = vst [vmem:[%s71 + $0x360] sm:$0xff] %v288
        %v290 = vld [vmem:[%s70 + $0x368] sm:$0xff]
        %291 = vst [vmem:[%s71 + $0x368] sm:$0xff] %v290
        %v292 = vld [vmem:[%s70 + $0x370] sm:$0xff]
        %293 = vst [vmem:[%s71 + $0x370] sm:$0xff] %v292
        %v294 = vld [vmem:[%s70 + $0x378] sm:$0xff]
        %295 = vst [vmem:[%s71 + $0x378] sm:$0xff] %v294
        %v296 = vld [vmem:[%s70 + $0x380] sm:$0xff]
        %297 = vst [vmem:[%s71 + $0x380] sm:$0xff] %v296
        %v298 = vld [vmem:[%s70 + $0x388] sm:$0xff]
        %299 = vst [vmem:[%s71 + $0x388] sm:$0xff] %v298
        %v300 = vld [vmem:[%s70 + $0x390] sm:$0xff]
        %301 = vst [vmem:[%s71 + $0x390] sm:$0xff] %v300
        %v302 = vld [vmem:[%s70 + $0x398] sm:$0xff]
        %303 = vst [vmem:[%s71 + $0x398] sm:$0xff] %v302
        %v304 = vld [vmem:[%s70 + $0x3a0] sm:$0xff]
        %305 = vst [vmem:[%s71 + $0x3a0] sm:$0xff] %v304
        %v306 = vld [vmem:[%s70 + $0x3a8] sm:$0xff]
        %307 = vst [vmem:[%s71 + $0x3a8] sm:$0xff] %v306
        %v308 = vld [vmem:[%s70 + $0x3b0] sm:$0xff]
        %309 = vst [vmem:[%s71 + $0x3b0] sm:$0xff] %v308
        %v310 = vld [vmem:[%s70 + $0x3b8] sm:$0xff]
        %311 = vst [vmem:[%s71 + $0x3b8] sm:$0xff] %v310
        %v312 = vld [vmem:[%s70 + $0x3c0] sm:$0xff]
        %313 = vst [vmem:[%s71 + $0x3c0] sm:$0xff] %v312
        %v314 = vld [vmem:[%s70 + $0x3c8] sm:$0xff]
        %315 = vst [vmem:[%s71 + $0x3c8] sm:$0xff] %v314
        %v316 = vld [vmem:[%s70 + $0x3d0] sm:$0xff]
        %317 = vst [vmem:[%s71 + $0x3d0] sm:$0xff] %v316
        %v318 = vld [vmem:[%s70 + $0x3d8] sm:$0xff]
        %319 = vst [vmem:[%s71 + $0x3d8] sm:$0xff] %v318
        %v320 = vld [vmem:[%s70 + $0x3e0] sm:$0xff]
        %321 = vst [vmem:[%s71 + $0x3e0] sm:$0xff] %v320
        %v322 = vld [vmem:[%s70 + $0x3e8] sm:$0xff]
        %323 = vst [vmem:[%s71 + $0x3e8] sm:$0xff] %v322
        %v324 = vld [vmem:[%s70 + $0x3f0] sm:$0xff]
        %325 = vst [vmem:[%s71 + $0x3f0] sm:$0xff] %v324
        %v326 = vld [vmem:[%s70 + $0x3f8] sm:$0xff]
        %327 = vst [vmem:[%s71 + $0x3f8] sm:$0xff] %v326
      $region69: #{text_gru_forward.1} parent=63 // loop_footer
        %s69 = sadd.s32 1, %s65
      $region70: #{text_gru_forward.1} parent=63 // loop_footer_branch
        %64 = sbr.rel target = $region66
      $region71: #{text_gru_forward.1} parent=63 // loop_exit
        _
    $region64: #{text_gru_forward.1} parent=48 // pred_fallthru
      _
    %p328 = pneg %p60
    // Predicated region
    $region72: #{text_gru_forward.1} parent=48 // pred_check
      _
    $region73: #{text_gru_forward.1} parent=48 // pred_check_branch
      %330 = sbr.rel (%p60) target = $region75
    $region74: #{text_gru_forward.1} parent=48 // pred_region
      %s331 = sand.u32 1024, 7
    $region75: #{text_gru_forward.1} parent=48 // pred_fallthru
      _
  $region49: #{text_gru_forward.1} parent=0 // pred_fallthru
    _
  // Predicated region
  $region50: #{text_gru_forward.1} parent=0 // pred_check
    %p45 = pneg %p41
  $region51: #{text_gru_forward.1} parent=0 // pred_check_branch
    %47 = sbr.rel (%p45) target = $region53
  $region52: #{text_gru_forward.1} parent=0 // pred_region
    %s48 = sshllo.u32 0, 1024
    loop: start=0, step=1, limit=1
    $region54: #{text_gru_forward.1} parent=52 // loop_pre_header
      _
    $region55: #{text_gru_forward.1} parent=52 // loop_header
      %s50 = sphi 0, %s54
      %p51 = scmp.ge.s32.totalorder %s50, 1
      %s55 = sphi %s11, %s11
      %s56 = sphi [#allocation3], [#allocation3]
    $region56: #{text_gru_forward.1} parent=52 // loop_header_branch
      %53 = sbr.rel (%p51) target = $region60
    $region57: #{text_gru_forward.1} parent=52 // loop_body
      %v57 = vld [vmem:[%s55] sm:%s48]
      %58 = vst [vmem:[%s56] sm:%s48] %v57
    $region58: #{text_gru_forward.1} parent=52 // loop_footer
      %s54 = sadd.s32 1, %s50
    $region59: #{text_gru_forward.1} parent=52 // loop_footer_branch
      %49 = sbr.rel target = $region55
    $region60: #{text_gru_forward.1} parent=52 // loop_exit
      _
  $region53: #{text_gru_forward.1} parent=0 // pred_fallthru
    _
  // Predicated region
  $region76: #{text_gru_forward.1} parent=0 // pred_check
    _
  $region77: #{text_gru_forward.1} parent=0 // pred_check_branch
    %334 = sbr.rel (0) target = $region79
  $region78: #{text_gru_forward.1} parent=0 // pred_region
    %335 = vsyncadd [#allocation5], 16384
  $region79: #{text_gru_forward.1} parent=0 // pred_fallthru
    _
  %s336 = scalar_lea.sflag [#allocation5], 1
  %p338 = scmp.lt.u32.totalorder 4096, 8
  %p339 = pneg %p338
  // Predicated region
  $region80: #{text_gru_forward.1} parent=0 // pred_check
    _
  $region81: #{text_gru_forward.1} parent=0 // pred_check_branch
    %341 = sbr.rel (%p338) target = $region83
  $region82: #{text_gru_forward.1} parent=0 // pred_region
    %s356 = sand.u32 4096, 7
    %p357 = scmp.eq.s32.totalorder %s356, 0
    // Predicated region
    $region95: #{text_gru_forward.1} parent=82 // pred_check
      %p358 = pneg %p357
    $region96: #{text_gru_forward.1} parent=82 // pred_check_branch
      %360 = sbr.rel (%p358) target = $region98
    $region97: #{text_gru_forward.1} parent=82 // pred_region
      loop: start=0, step=1, limit=1
      $region99: #{text_gru_forward.1} parent=97 // loop_pre_header
        _
      $region100: #{text_gru_forward.1} parent=97 // loop_header
        %s362 = sphi 0, %s366
        %p363 = scmp.ge.s32.totalorder %s362, 1
        %s367 = sphi %s12, %s12
        %s368 = sphi [#allocation4], [#allocation4]
      $region101: #{text_gru_forward.1} parent=97 // loop_header_branch
        %365 = sbr.rel (%p363) target = $region105
      $region102: #{text_gru_forward.1} parent=97 // loop_body
        %v369 = vld [vmem:[%s367] sm:$0xff]
        %370 = vst [vmem:[%s368] sm:$0xff] %v369
        %v371 = vld [vmem:[%s367 + $0x8] sm:$0xff]
        %372 = vst [vmem:[%s368 + $0x8] sm:$0xff] %v371
        %v373 = vld [vmem:[%s367 + $0x10] sm:$0xff]
        %374 = vst [vmem:[%s368 + $0x10] sm:$0xff] %v373
        %v375 = vld [vmem:[%s367 + $0x18] sm:$0xff]
        %376 = vst [vmem:[%s368 + $0x18] sm:$0xff] %v375
        %v377 = vld [vmem:[%s367 + $0x20] sm:$0xff]
        %378 = vst [vmem:[%s368 + $0x20] sm:$0xff] %v377
        %v379 = vld [vmem:[%s367 + $0x28] sm:$0xff]
        %380 = vst [vmem:[%s368 + $0x28] sm:$0xff] %v379
        %v381 = vld [vmem:[%s367 + $0x30] sm:$0xff]
        %382 = vst [vmem:[%s368 + $0x30] sm:$0xff] %v381
        %v383 = vld [vmem:[%s367 + $0x38] sm:$0xff]
        %384 = vst [vmem:[%s368 + $0x38] sm:$0xff] %v383
        %v385 = vld [vmem:[%s367 + $0x40] sm:$0xff]
        %386 = vst [vmem:[%s368 + $0x40] sm:$0xff] %v385
        %v387 = vld [vmem:[%s367 + $0x48] sm:$0xff]
        %388 = vst [vmem:[%s368 + $0x48] sm:$0xff] %v387
        %v389 = vld [vmem:[%s367 + $0x50] sm:$0xff]
        %390 = vst [vmem:[%s368 + $0x50] sm:$0xff] %v389
        %v391 = vld [vmem:[%s367 + $0x58] sm:$0xff]
        %392 = vst [vmem:[%s368 + $0x58] sm:$0xff] %v391
        %v393 = vld [vmem:[%s367 + $0x60] sm:$0xff]
        %394 = vst [vmem:[%s368 + $0x60] sm:$0xff] %v393
        %v395 = vld [vmem:[%s367 + $0x68] sm:$0xff]
        %396 = vst [vmem:[%s368 + $0x68] sm:$0xff] %v395
        %v397 = vld [vmem:[%s367 + $0x70] sm:$0xff]
        %398 = vst [vmem:[%s368 + $0x70] sm:$0xff] %v397
        %v399 = vld [vmem:[%s367 + $0x78] sm:$0xff]
        %400 = vst [vmem:[%s368 + $0x78] sm:$0xff] %v399
        %v401 = vld [vmem:[%s367 + $0x80] sm:$0xff]
        %402 = vst [vmem:[%s368 + $0x80] sm:$0xff] %v401
        %v403 = vld [vmem:[%s367 + $0x88] sm:$0xff]
        %404 = vst [vmem:[%s368 + $0x88] sm:$0xff] %v403
        %v405 = vld [vmem:[%s367 + $0x90] sm:$0xff]
        %406 = vst [vmem:[%s368 + $0x90] sm:$0xff] %v405
        %v407 = vld [vmem:[%s367 + $0x98] sm:$0xff]
        %408 = vst [vmem:[%s368 + $0x98] sm:$0xff] %v407
        %v409 = vld [vmem:[%s367 + $0xa0] sm:$0xff]
        %410 = vst [vmem:[%s368 + $0xa0] sm:$0xff] %v409
        %v411 = vld [vmem:[%s367 + $0xa8] sm:$0xff]
        %412 = vst [vmem:[%s368 + $0xa8] sm:$0xff] %v411
        %v413 = vld [vmem:[%s367 + $0xb0] sm:$0xff]
        %414 = vst [vmem:[%s368 + $0xb0] sm:$0xff] %v413
        %v415 = vld [vmem:[%s367 + $0xb8] sm:$0xff]
        %416 = vst [vmem:[%s368 + $0xb8] sm:$0xff] %v415
        %v417 = vld [vmem:[%s367 + $0xc0] sm:$0xff]
        %418 = vst [vmem:[%s368 + $0xc0] sm:$0xff] %v417
        %v419 = vld [vmem:[%s367 + $0xc8] sm:$0xff]
        %420 = vst [vmem:[%s368 + $0xc8] sm:$0xff] %v419
        %v421 = vld [vmem:[%s367 + $0xd0] sm:$0xff]
        %422 = vst [vmem:[%s368 + $0xd0] sm:$0xff] %v421
        %v423 = vld [vmem:[%s367 + $0xd8] sm:$0xff]
        %424 = vst [vmem:[%s368 + $0xd8] sm:$0xff] %v423
        %v425 = vld [vmem:[%s367 + $0xe0] sm:$0xff]
        %426 = vst [vmem:[%s368 + $0xe0] sm:$0xff] %v425
        %v427 = vld [vmem:[%s367 + $0xe8] sm:$0xff]
        %428 = vst [vmem:[%s368 + $0xe8] sm:$0xff] %v427
        %v429 = vld [vmem:[%s367 + $0xf0] sm:$0xff]
        %430 = vst [vmem:[%s368 + $0xf0] sm:$0xff] %v429
        %v431 = vld [vmem:[%s367 + $0xf8] sm:$0xff]
        %432 = vst [vmem:[%s368 + $0xf8] sm:$0xff] %v431
        %v433 = vld [vmem:[%s367 + $0x100] sm:$0xff]
        %434 = vst [vmem:[%s368 + $0x100] sm:$0xff] %v433
        %v435 = vld [vmem:[%s367 + $0x108] sm:$0xff]
        %436 = vst [vmem:[%s368 + $0x108] sm:$0xff] %v435
        %v437 = vld [vmem:[%s367 + $0x110] sm:$0xff]
        %438 = vst [vmem:[%s368 + $0x110] sm:$0xff] %v437
        %v439 = vld [vmem:[%s367 + $0x118] sm:$0xff]
        %440 = vst [vmem:[%s368 + $0x118] sm:$0xff] %v439
        %v441 = vld [vmem:[%s367 + $0x120] sm:$0xff]
        %442 = vst [vmem:[%s368 + $0x120] sm:$0xff] %v441
        %v443 = vld [vmem:[%s367 + $0x128] sm:$0xff]
        %444 = vst [vmem:[%s368 + $0x128] sm:$0xff] %v443
        %v445 = vld [vmem:[%s367 + $0x130] sm:$0xff]
        %446 = vst [vmem:[%s368 + $0x130] sm:$0xff] %v445
        %v447 = vld [vmem:[%s367 + $0x138] sm:$0xff]
        %448 = vst [vmem:[%s368 + $0x138] sm:$0xff] %v447
        %v449 = vld [vmem:[%s367 + $0x140] sm:$0xff]
        %450 = vst [vmem:[%s368 + $0x140] sm:$0xff] %v449
        %v451 = vld [vmem:[%s367 + $0x148] sm:$0xff]
        %452 = vst [vmem:[%s368 + $0x148] sm:$0xff] %v451
        %v453 = vld [vmem:[%s367 + $0x150] sm:$0xff]
        %454 = vst [vmem:[%s368 + $0x150] sm:$0xff] %v453
        %v455 = vld [vmem:[%s367 + $0x158] sm:$0xff]
        %456 = vst [vmem:[%s368 + $0x158] sm:$0xff] %v455
        %v457 = vld [vmem:[%s367 + $0x160] sm:$0xff]
        %458 = vst [vmem:[%s368 + $0x160] sm:$0xff] %v457
        %v459 = vld [vmem:[%s367 + $0x168] sm:$0xff]
        %460 = vst [vmem:[%s368 + $0x168] sm:$0xff] %v459
        %v461 = vld [vmem:[%s367 + $0x170] sm:$0xff]
        %462 = vst [vmem:[%s368 + $0x170] sm:$0xff] %v461
        %v463 = vld [vmem:[%s367 + $0x178] sm:$0xff]
        %464 = vst [vmem:[%s368 + $0x178] sm:$0xff] %v463
        %v465 = vld [vmem:[%s367 + $0x180] sm:$0xff]
        %466 = vst [vmem:[%s368 + $0x180] sm:$0xff] %v465
        %v467 = vld [vmem:[%s367 + $0x188] sm:$0xff]
        %468 = vst [vmem:[%s368 + $0x188] sm:$0xff] %v467
        %v469 = vld [vmem:[%s367 + $0x190] sm:$0xff]
        %470 = vst [vmem:[%s368 + $0x190] sm:$0xff] %v469
        %v471 = vld [vmem:[%s367 + $0x198] sm:$0xff]
        %472 = vst [vmem:[%s368 + $0x198] sm:$0xff] %v471
        %v473 = vld [vmem:[%s367 + $0x1a0] sm:$0xff]
        %474 = vst [vmem:[%s368 + $0x1a0] sm:$0xff] %v473
        %v475 = vld [vmem:[%s367 + $0x1a8] sm:$0xff]
        %476 = vst [vmem:[%s368 + $0x1a8] sm:$0xff] %v475
        %v477 = vld [vmem:[%s367 + $0x1b0] sm:$0xff]
        %478 = vst [vmem:[%s368 + $0x1b0] sm:$0xff] %v477
        %v479 = vld [vmem:[%s367 + $0x1b8] sm:$0xff]
        %480 = vst [vmem:[%s368 + $0x1b8] sm:$0xff] %v479
        %v481 = vld [vmem:[%s367 + $0x1c0] sm:$0xff]
        %482 = vst [vmem:[%s368 + $0x1c0] sm:$0xff] %v481
        %v483 = vld [vmem:[%s367 + $0x1c8] sm:$0xff]
        %484 = vst [vmem:[%s368 + $0x1c8] sm:$0xff] %v483
        %v485 = vld [vmem:[%s367 + $0x1d0] sm:$0xff]
        %486 = vst [vmem:[%s368 + $0x1d0] sm:$0xff] %v485
        %v487 = vld [vmem:[%s367 + $0x1d8] sm:$0xff]
        %488 = vst [vmem:[%s368 + $0x1d8] sm:$0xff] %v487
        %v489 = vld [vmem:[%s367 + $0x1e0] sm:$0xff]
        %490 = vst [vmem:[%s368 + $0x1e0] sm:$0xff] %v489
        %v491 = vld [vmem:[%s367 + $0x1e8] sm:$0xff]
        %492 = vst [vmem:[%s368 + $0x1e8] sm:$0xff] %v491
        %v493 = vld [vmem:[%s367 + $0x1f0] sm:$0xff]
        %494 = vst [vmem:[%s368 + $0x1f0] sm:$0xff] %v493
        %v495 = vld [vmem:[%s367 + $0x1f8] sm:$0xff]
        %496 = vst [vmem:[%s368 + $0x1f8] sm:$0xff] %v495
        %v497 = vld [vmem:[%s367 + $0x200] sm:$0xff]
        %498 = vst [vmem:[%s368 + $0x200] sm:$0xff] %v497
        %v499 = vld [vmem:[%s367 + $0x208] sm:$0xff]
        %500 = vst [vmem:[%s368 + $0x208] sm:$0xff] %v499
        %v501 = vld [vmem:[%s367 + $0x210] sm:$0xff]
        %502 = vst [vmem:[%s368 + $0x210] sm:$0xff] %v501
        %v503 = vld [vmem:[%s367 + $0x218] sm:$0xff]
        %504 = vst [vmem:[%s368 + $0x218] sm:$0xff] %v503
        %v505 = vld [vmem:[%s367 + $0x220] sm:$0xff]
        %506 = vst [vmem:[%s368 + $0x220] sm:$0xff] %v505
        %v507 = vld [vmem:[%s367 + $0x228] sm:$0xff]
        %508 = vst [vmem:[%s368 + $0x228] sm:$0xff] %v507
        %v509 = vld [vmem:[%s367 + $0x230] sm:$0xff]
        %510 = vst [vmem:[%s368 + $0x230] sm:$0xff] %v509
        %v511 = vld [vmem:[%s367 + $0x238] sm:$0xff]
        %512 = vst [vmem:[%s368 + $0x238] sm:$0xff] %v511
        %v513 = vld [vmem:[%s367 + $0x240] sm:$0xff]
        %514 = vst [vmem:[%s368 + $0x240] sm:$0xff] %v513
        %v515 = vld [vmem:[%s367 + $0x248] sm:$0xff]
        %516 = vst [vmem:[%s368 + $0x248] sm:$0xff] %v515
        %v517 = vld [vmem:[%s367 + $0x250] sm:$0xff]
        %518 = vst [vmem:[%s368 + $0x250] sm:$0xff] %v517
        %v519 = vld [vmem:[%s367 + $0x258] sm:$0xff]
        %520 = vst [vmem:[%s368 + $0x258] sm:$0xff] %v519
        %v521 = vld [vmem:[%s367 + $0x260] sm:$0xff]
        %522 = vst [vmem:[%s368 + $0x260] sm:$0xff] %v521
        %v523 = vld [vmem:[%s367 + $0x268] sm:$0xff]
        %524 = vst [vmem:[%s368 + $0x268] sm:$0xff] %v523
        %v525 = vld [vmem:[%s367 + $0x270] sm:$0xff]
        %526 = vst [vmem:[%s368 + $0x270] sm:$0xff] %v525
        %v527 = vld [vmem:[%s367 + $0x278] sm:$0xff]
        %528 = vst [vmem:[%s368 + $0x278] sm:$0xff] %v527
        %v529 = vld [vmem:[%s367 + $0x280] sm:$0xff]
        %530 = vst [vmem:[%s368 + $0x280] sm:$0xff] %v529
        %v531 = vld [vmem:[%s367 + $0x288] sm:$0xff]
        %532 = vst [vmem:[%s368 + $0x288] sm:$0xff] %v531
        %v533 = vld [vmem:[%s367 + $0x290] sm:$0xff]
        %534 = vst [vmem:[%s368 + $0x290] sm:$0xff] %v533
        %v535 = vld [vmem:[%s367 + $0x298] sm:$0xff]
        %536 = vst [vmem:[%s368 + $0x298] sm:$0xff] %v535
        %v537 = vld [vmem:[%s367 + $0x2a0] sm:$0xff]
        %538 = vst [vmem:[%s368 + $0x2a0] sm:$0xff] %v537
        %v539 = vld [vmem:[%s367 + $0x2a8] sm:$0xff]
        %540 = vst [vmem:[%s368 + $0x2a8] sm:$0xff] %v539
        %v541 = vld [vmem:[%s367 + $0x2b0] sm:$0xff]
        %542 = vst [vmem:[%s368 + $0x2b0] sm:$0xff] %v541
        %v543 = vld [vmem:[%s367 + $0x2b8] sm:$0xff]
        %544 = vst [vmem:[%s368 + $0x2b8] sm:$0xff] %v543
        %v545 = vld [vmem:[%s367 + $0x2c0] sm:$0xff]
        %546 = vst [vmem:[%s368 + $0x2c0] sm:$0xff] %v545
        %v547 = vld [vmem:[%s367 + $0x2c8] sm:$0xff]
        %548 = vst [vmem:[%s368 + $0x2c8] sm:$0xff] %v547
        %v549 = vld [vmem:[%s367 + $0x2d0] sm:$0xff]
        %550 = vst [vmem:[%s368 + $0x2d0] sm:$0xff] %v549
        %v551 = vld [vmem:[%s367 + $0x2d8] sm:$0xff]
        %552 = vst [vmem:[%s368 + $0x2d8] sm:$0xff] %v551
        %v553 = vld [vmem:[%s367 + $0x2e0] sm:$0xff]
        %554 = vst [vmem:[%s368 + $0x2e0] sm:$0xff] %v553
        %v555 = vld [vmem:[%s367 + $0x2e8] sm:$0xff]
        %556 = vst [vmem:[%s368 + $0x2e8] sm:$0xff] %v555
        %v557 = vld [vmem:[%s367 + $0x2f0] sm:$0xff]
        %558 = vst [vmem:[%s368 + $0x2f0] sm:$0xff] %v557
        %v559 = vld [vmem:[%s367 + $0x2f8] sm:$0xff]
        %560 = vst [vmem:[%s368 + $0x2f8] sm:$0xff] %v559
        %v561 = vld [vmem:[%s367 + $0x300] sm:$0xff]
        %562 = vst [vmem:[%s368 + $0x300] sm:$0xff] %v561
        %v563 = vld [vmem:[%s367 + $0x308] sm:$0xff]
        %564 = vst [vmem:[%s368 + $0x308] sm:$0xff] %v563
        %v565 = vld [vmem:[%s367 + $0x310] sm:$0xff]
        %566 = vst [vmem:[%s368 + $0x310] sm:$0xff] %v565
        %v567 = vld [vmem:[%s367 + $0x318] sm:$0xff]
        %568 = vst [vmem:[%s368 + $0x318] sm:$0xff] %v567
        %v569 = vld [vmem:[%s367 + $0x320] sm:$0xff]
        %570 = vst [vmem:[%s368 + $0x320] sm:$0xff] %v569
        %v571 = vld [vmem:[%s367 + $0x328] sm:$0xff]
        %572 = vst [vmem:[%s368 + $0x328] sm:$0xff] %v571
        %v573 = vld [vmem:[%s367 + $0x330] sm:$0xff]
        %574 = vst [vmem:[%s368 + $0x330] sm:$0xff] %v573
        %v575 = vld [vmem:[%s367 + $0x338] sm:$0xff]
        %576 = vst [vmem:[%s368 + $0x338] sm:$0xff] %v575
        %v577 = vld [vmem:[%s367 + $0x340] sm:$0xff]
        %578 = vst [vmem:[%s368 + $0x340] sm:$0xff] %v577
        %v579 = vld [vmem:[%s367 + $0x348] sm:$0xff]
        %580 = vst [vmem:[%s368 + $0x348] sm:$0xff] %v579
        %v581 = vld [vmem:[%s367 + $0x350] sm:$0xff]
        %582 = vst [vmem:[%s368 + $0x350] sm:$0xff] %v581
        %v583 = vld [vmem:[%s367 + $0x358] sm:$0xff]
        %584 = vst [vmem:[%s368 + $0x358] sm:$0xff] %v583
        %v585 = vld [vmem:[%s367 + $0x360] sm:$0xff]
        %586 = vst [vmem:[%s368 + $0x360] sm:$0xff] %v585
        %v587 = vld [vmem:[%s367 + $0x368] sm:$0xff]
        %588 = vst [vmem:[%s368 + $0x368] sm:$0xff] %v587
        %v589 = vld [vmem:[%s367 + $0x370] sm:$0xff]
        %590 = vst [vmem:[%s368 + $0x370] sm:$0xff] %v589
        %v591 = vld [vmem:[%s367 + $0x378] sm:$0xff]
        %592 = vst [vmem:[%s368 + $0x378] sm:$0xff] %v591
        %v593 = vld [vmem:[%s367 + $0x380] sm:$0xff]
        %594 = vst [vmem:[%s368 + $0x380] sm:$0xff] %v593
        %v595 = vld [vmem:[%s367 + $0x388] sm:$0xff]
        %596 = vst [vmem:[%s368 + $0x388] sm:$0xff] %v595
        %v597 = vld [vmem:[%s367 + $0x390] sm:$0xff]
        %598 = vst [vmem:[%s368 + $0x390] sm:$0xff] %v597
        %v599 = vld [vmem:[%s367 + $0x398] sm:$0xff]
        %600 = vst [vmem:[%s368 + $0x398] sm:$0xff] %v599
        %v601 = vld [vmem:[%s367 + $0x3a0] sm:$0xff]
        %602 = vst [vmem:[%s368 + $0x3a0] sm:$0xff] %v601
        %v603 = vld [vmem:[%s367 + $0x3a8] sm:$0xff]
        %604 = vst [vmem:[%s368 + $0x3a8] sm:$0xff] %v603
        %v605 = vld [vmem:[%s367 + $0x3b0] sm:$0xff]
        %606 = vst [vmem:[%s368 + $0x3b0] sm:$0xff] %v605
        %v607 = vld [vmem:[%s367 + $0x3b8] sm:$0xff]
        %608 = vst [vmem:[%s368 + $0x3b8] sm:$0xff] %v607
        %v609 = vld [vmem:[%s367 + $0x3c0] sm:$0xff]
        %610 = vst [vmem:[%s368 + $0x3c0] sm:$0xff] %v609
        %v611 = vld [vmem:[%s367 + $0x3c8] sm:$0xff]
        %612 = vst [vmem:[%s368 + $0x3c8] sm:$0xff] %v611
        %v613 = vld [vmem:[%s367 + $0x3d0] sm:$0xff]
        %614 = vst [vmem:[%s368 + $0x3d0] sm:$0xff] %v613
        %v615 = vld [vmem:[%s367 + $0x3d8] sm:$0xff]
        %616 = vst [vmem:[%s368 + $0x3d8] sm:$0xff] %v615
        %v617 = vld [vmem:[%s367 + $0x3e0] sm:$0xff]
        %618 = vst [vmem:[%s368 + $0x3e0] sm:$0xff] %v617
        %v619 = vld [vmem:[%s367 + $0x3e8] sm:$0xff]
        %620 = vst [vmem:[%s368 + $0x3e8] sm:$0xff] %v619
        %v621 = vld [vmem:[%s367 + $0x3f0] sm:$0xff]
        %622 = vst [vmem:[%s368 + $0x3f0] sm:$0xff] %v621
        %v623 = vld [vmem:[%s367 + $0x3f8] sm:$0xff]
        %624 = vst [vmem:[%s368 + $0x3f8] sm:$0xff] %v623
        %v625 = vld [vmem:[%s367 + $0x400] sm:$0xff]
        %626 = vst [vmem:[%s368 + $0x400] sm:$0xff] %v625
        %v627 = vld [vmem:[%s367 + $0x408] sm:$0xff]
        %628 = vst [vmem:[%s368 + $0x408] sm:$0xff] %v627
        %v629 = vld [vmem:[%s367 + $0x410] sm:$0xff]
        %630 = vst [vmem:[%s368 + $0x410] sm:$0xff] %v629
        %v631 = vld [vmem:[%s367 + $0x418] sm:$0xff]
        %632 = vst [vmem:[%s368 + $0x418] sm:$0xff] %v631
        %v633 = vld [vmem:[%s367 + $0x420] sm:$0xff]
        %634 = vst [vmem:[%s368 + $0x420] sm:$0xff] %v633
        %v635 = vld [vmem:[%s367 + $0x428] sm:$0xff]
        %636 = vst [vmem:[%s368 + $0x428] sm:$0xff] %v635
        %v637 = vld [vmem:[%s367 + $0x430] sm:$0xff]
        %638 = vst [vmem:[%s368 + $0x430] sm:$0xff] %v637
        %v639 = vld [vmem:[%s367 + $0x438] sm:$0xff]
        %640 = vst [vmem:[%s368 + $0x438] sm:$0xff] %v639
        %v641 = vld [vmem:[%s367 + $0x440] sm:$0xff]
        %642 = vst [vmem:[%s368 + $0x440] sm:$0xff] %v641
        %v643 = vld [vmem:[%s367 + $0x448] sm:$0xff]
        %644 = vst [vmem:[%s368 + $0x448] sm:$0xff] %v643
        %v645 = vld [vmem:[%s367 + $0x450] sm:$0xff]
        %646 = vst [vmem:[%s368 + $0x450] sm:$0xff] %v645
        %v647 = vld [vmem:[%s367 + $0x458] sm:$0xff]
        %648 = vst [vmem:[%s368 + $0x458] sm:$0xff] %v647
        %v649 = vld [vmem:[%s367 + $0x460] sm:$0xff]
        %650 = vst [vmem:[%s368 + $0x460] sm:$0xff] %v649
        %v651 = vld [vmem:[%s367 + $0x468] sm:$0xff]
        %652 = vst [vmem:[%s368 + $0x468] sm:$0xff] %v651
        %v653 = vld [vmem:[%s367 + $0x470] sm:$0xff]
        %654 = vst [vmem:[%s368 + $0x470] sm:$0xff] %v653
        %v655 = vld [vmem:[%s367 + $0x478] sm:$0xff]
        %656 = vst [vmem:[%s368 + $0x478] sm:$0xff] %v655
        %v657 = vld [vmem:[%s367 + $0x480] sm:$0xff]
        %658 = vst [vmem:[%s368 + $0x480] sm:$0xff] %v657
        %v659 = vld [vmem:[%s367 + $0x488] sm:$0xff]
        %660 = vst [vmem:[%s368 + $0x488] sm:$0xff] %v659
        %v661 = vld [vmem:[%s367 + $0x490] sm:$0xff]
        %662 = vst [vmem:[%s368 + $0x490] sm:$0xff] %v661
        %v663 = vld [vmem:[%s367 + $0x498] sm:$0xff]
        %664 = vst [vmem:[%s368 + $0x498] sm:$0xff] %v663
        %v665 = vld [vmem:[%s367 + $0x4a0] sm:$0xff]
        %666 = vst [vmem:[%s368 + $0x4a0] sm:$0xff] %v665
        %v667 = vld [vmem:[%s367 + $0x4a8] sm:$0xff]
        %668 = vst [vmem:[%s368 + $0x4a8] sm:$0xff] %v667
        %v669 = vld [vmem:[%s367 + $0x4b0] sm:$0xff]
        %670 = vst [vmem:[%s368 + $0x4b0] sm:$0xff] %v669
        %v671 = vld [vmem:[%s367 + $0x4b8] sm:$0xff]
        %672 = vst [vmem:[%s368 + $0x4b8] sm:$0xff] %v671
        %v673 = vld [vmem:[%s367 + $0x4c0] sm:$0xff]
        %674 = vst [vmem:[%s368 + $0x4c0] sm:$0xff] %v673
        %v675 = vld [vmem:[%s367 + $0x4c8] sm:$0xff]
        %676 = vst [vmem:[%s368 + $0x4c8] sm:$0xff] %v675
        %v677 = vld [vmem:[%s367 + $0x4d0] sm:$0xff]
        %678 = vst [vmem:[%s368 + $0x4d0] sm:$0xff] %v677
        %v679 = vld [vmem:[%s367 + $0x4d8] sm:$0xff]
        %680 = vst [vmem:[%s368 + $0x4d8] sm:$0xff] %v679
        %v681 = vld [vmem:[%s367 + $0x4e0] sm:$0xff]
        %682 = vst [vmem:[%s368 + $0x4e0] sm:$0xff] %v681
        %v683 = vld [vmem:[%s367 + $0x4e8] sm:$0xff]
        %684 = vst [vmem:[%s368 + $0x4e8] sm:$0xff] %v683
        %v685 = vld [vmem:[%s367 + $0x4f0] sm:$0xff]
        %686 = vst [vmem:[%s368 + $0x4f0] sm:$0xff] %v685
        %v687 = vld [vmem:[%s367 + $0x4f8] sm:$0xff]
        %688 = vst [vmem:[%s368 + $0x4f8] sm:$0xff] %v687
        %v689 = vld [vmem:[%s367 + $0x500] sm:$0xff]
        %690 = vst [vmem:[%s368 + $0x500] sm:$0xff] %v689
        %v691 = vld [vmem:[%s367 + $0x508] sm:$0xff]
        %692 = vst [vmem:[%s368 + $0x508] sm:$0xff] %v691
        %v693 = vld [vmem:[%s367 + $0x510] sm:$0xff]
        %694 = vst [vmem:[%s368 + $0x510] sm:$0xff] %v693
        %v695 = vld [vmem:[%s367 + $0x518] sm:$0xff]
        %696 = vst [vmem:[%s368 + $0x518] sm:$0xff] %v695
        %v697 = vld [vmem:[%s367 + $0x520] sm:$0xff]
        %698 = vst [vmem:[%s368 + $0x520] sm:$0xff] %v697
        %v699 = vld [vmem:[%s367 + $0x528] sm:$0xff]
        %700 = vst [vmem:[%s368 + $0x528] sm:$0xff] %v699
        %v701 = vld [vmem:[%s367 + $0x530] sm:$0xff]
        %702 = vst [vmem:[%s368 + $0x530] sm:$0xff] %v701
        %v703 = vld [vmem:[%s367 + $0x538] sm:$0xff]
        %704 = vst [vmem:[%s368 + $0x538] sm:$0xff] %v703
        %v705 = vld [vmem:[%s367 + $0x540] sm:$0xff]
        %706 = vst [vmem:[%s368 + $0x540] sm:$0xff] %v705
        %v707 = vld [vmem:[%s367 + $0x548] sm:$0xff]
        %708 = vst [vmem:[%s368 + $0x548] sm:$0xff] %v707
        %v709 = vld [vmem:[%s367 + $0x550] sm:$0xff]
        %710 = vst [vmem:[%s368 + $0x550] sm:$0xff] %v709
        %v711 = vld [vmem:[%s367 + $0x558] sm:$0xff]
        %712 = vst [vmem:[%s368 + $0x558] sm:$0xff] %v711
        %v713 = vld [vmem:[%s367 + $0x560] sm:$0xff]
        %714 = vst [vmem:[%s368 + $0x560] sm:$0xff] %v713
        %v715 = vld [vmem:[%s367 + $0x568] sm:$0xff]
        %716 = vst [vmem:[%s368 + $0x568] sm:$0xff] %v715
        %v717 = vld [vmem:[%s367 + $0x570] sm:$0xff]
        %718 = vst [vmem:[%s368 + $0x570] sm:$0xff] %v717
        %v719 = vld [vmem:[%s367 + $0x578] sm:$0xff]
        %720 = vst [vmem:[%s368 + $0x578] sm:$0xff] %v719
        %v721 = vld [vmem:[%s367 + $0x580] sm:$0xff]
        %722 = vst [vmem:[%s368 + $0x580] sm:$0xff] %v721
        %v723 = vld [vmem:[%s367 + $0x588] sm:$0xff]
        %724 = vst [vmem:[%s368 + $0x588] sm:$0xff] %v723
        %v725 = vld [vmem:[%s367 + $0x590] sm:$0xff]
        %726 = vst [vmem:[%s368 + $0x590] sm:$0xff] %v725
        %v727 = vld [vmem:[%s367 + $0x598] sm:$0xff]
        %728 = vst [vmem:[%s368 + $0x598] sm:$0xff] %v727
        %v729 = vld [vmem:[%s367 + $0x5a0] sm:$0xff]
        %730 = vst [vmem:[%s368 + $0x5a0] sm:$0xff] %v729
        %v731 = vld [vmem:[%s367 + $0x5a8] sm:$0xff]
        %732 = vst [vmem:[%s368 + $0x5a8] sm:$0xff] %v731
        %v733 = vld [vmem:[%s367 + $0x5b0] sm:$0xff]
        %734 = vst [vmem:[%s368 + $0x5b0] sm:$0xff] %v733
        %v735 = vld [vmem:[%s367 + $0x5b8] sm:$0xff]
        %736 = vst [vmem:[%s368 + $0x5b8] sm:$0xff] %v735
        %v737 = vld [vmem:[%s367 + $0x5c0] sm:$0xff]
        %738 = vst [vmem:[%s368 + $0x5c0] sm:$0xff] %v737
        %v739 = vld [vmem:[%s367 + $0x5c8] sm:$0xff]
        %740 = vst [vmem:[%s368 + $0x5c8] sm:$0xff] %v739
        %v741 = vld [vmem:[%s367 + $0x5d0] sm:$0xff]
        %742 = vst [vmem:[%s368 + $0x5d0] sm:$0xff] %v741
        %v743 = vld [vmem:[%s367 + $0x5d8] sm:$0xff]
        %744 = vst [vmem:[%s368 + $0x5d8] sm:$0xff] %v743
        %v745 = vld [vmem:[%s367 + $0x5e0] sm:$0xff]
        %746 = vst [vmem:[%s368 + $0x5e0] sm:$0xff] %v745
        %v747 = vld [vmem:[%s367 + $0x5e8] sm:$0xff]
        %748 = vst [vmem:[%s368 + $0x5e8] sm:$0xff] %v747
        %v749 = vld [vmem:[%s367 + $0x5f0] sm:$0xff]
        %750 = vst [vmem:[%s368 + $0x5f0] sm:$0xff] %v749
        %v751 = vld [vmem:[%s367 + $0x5f8] sm:$0xff]
        %752 = vst [vmem:[%s368 + $0x5f8] sm:$0xff] %v751
        %v753 = vld [vmem:[%s367 + $0x600] sm:$0xff]
        %754 = vst [vmem:[%s368 + $0x600] sm:$0xff] %v753
        %v755 = vld [vmem:[%s367 + $0x608] sm:$0xff]
        %756 = vst [vmem:[%s368 + $0x608] sm:$0xff] %v755
        %v757 = vld [vmem:[%s367 + $0x610] sm:$0xff]
        %758 = vst [vmem:[%s368 + $0x610] sm:$0xff] %v757
        %v759 = vld [vmem:[%s367 + $0x618] sm:$0xff]
        %760 = vst [vmem:[%s368 + $0x618] sm:$0xff] %v759
        %v761 = vld [vmem:[%s367 + $0x620] sm:$0xff]
        %762 = vst [vmem:[%s368 + $0x620] sm:$0xff] %v761
        %v763 = vld [vmem:[%s367 + $0x628] sm:$0xff]
        %764 = vst [vmem:[%s368 + $0x628] sm:$0xff] %v763
        %v765 = vld [vmem:[%s367 + $0x630] sm:$0xff]
        %766 = vst [vmem:[%s368 + $0x630] sm:$0xff] %v765
        %v767 = vld [vmem:[%s367 + $0x638] sm:$0xff]
        %768 = vst [vmem:[%s368 + $0x638] sm:$0xff] %v767
        %v769 = vld [vmem:[%s367 + $0x640] sm:$0xff]
        %770 = vst [vmem:[%s368 + $0x640] sm:$0xff] %v769
        %v771 = vld [vmem:[%s367 + $0x648] sm:$0xff]
        %772 = vst [vmem:[%s368 + $0x648] sm:$0xff] %v771
        %v773 = vld [vmem:[%s367 + $0x650] sm:$0xff]
        %774 = vst [vmem:[%s368 + $0x650] sm:$0xff] %v773
        %v775 = vld [vmem:[%s367 + $0x658] sm:$0xff]
        %776 = vst [vmem:[%s368 + $0x658] sm:$0xff] %v775
        %v777 = vld [vmem:[%s367 + $0x660] sm:$0xff]
        %778 = vst [vmem:[%s368 + $0x660] sm:$0xff] %v777
        %v779 = vld [vmem:[%s367 + $0x668] sm:$0xff]
        %780 = vst [vmem:[%s368 + $0x668] sm:$0xff] %v779
        %v781 = vld [vmem:[%s367 + $0x670] sm:$0xff]
        %782 = vst [vmem:[%s368 + $0x670] sm:$0xff] %v781
        %v783 = vld [vmem:[%s367 + $0x678] sm:$0xff]
        %784 = vst [vmem:[%s368 + $0x678] sm:$0xff] %v783
        %v785 = vld [vmem:[%s367 + $0x680] sm:$0xff]
        %786 = vst [vmem:[%s368 + $0x680] sm:$0xff] %v785
        %v787 = vld [vmem:[%s367 + $0x688] sm:$0xff]
        %788 = vst [vmem:[%s368 + $0x688] sm:$0xff] %v787
        %v789 = vld [vmem:[%s367 + $0x690] sm:$0xff]
        %790 = vst [vmem:[%s368 + $0x690] sm:$0xff] %v789
        %v791 = vld [vmem:[%s367 + $0x698] sm:$0xff]
        %792 = vst [vmem:[%s368 + $0x698] sm:$0xff] %v791
        %v793 = vld [vmem:[%s367 + $0x6a0] sm:$0xff]
        %794 = vst [vmem:[%s368 + $0x6a0] sm:$0xff] %v793
        %v795 = vld [vmem:[%s367 + $0x6a8] sm:$0xff]
        %796 = vst [vmem:[%s368 + $0x6a8] sm:$0xff] %v795
        %v797 = vld [vmem:[%s367 + $0x6b0] sm:$0xff]
        %798 = vst [vmem:[%s368 + $0x6b0] sm:$0xff] %v797
        %v799 = vld [vmem:[%s367 + $0x6b8] sm:$0xff]
        %800 = vst [vmem:[%s368 + $0x6b8] sm:$0xff] %v799
        %v801 = vld [vmem:[%s367 + $0x6c0] sm:$0xff]
        %802 = vst [vmem:[%s368 + $0x6c0] sm:$0xff] %v801
        %v803 = vld [vmem:[%s367 + $0x6c8] sm:$0xff]
        %804 = vst [vmem:[%s368 + $0x6c8] sm:$0xff] %v803
        %v805 = vld [vmem:[%s367 + $0x6d0] sm:$0xff]
        %806 = vst [vmem:[%s368 + $0x6d0] sm:$0xff] %v805
        %v807 = vld [vmem:[%s367 + $0x6d8] sm:$0xff]
        %808 = vst [vmem:[%s368 + $0x6d8] sm:$0xff] %v807
        %v809 = vld [vmem:[%s367 + $0x6e0] sm:$0xff]
        %810 = vst [vmem:[%s368 + $0x6e0] sm:$0xff] %v809
        %v811 = vld [vmem:[%s367 + $0x6e8] sm:$0xff]
        %812 = vst [vmem:[%s368 + $0x6e8] sm:$0xff] %v811
        %v813 = vld [vmem:[%s367 + $0x6f0] sm:$0xff]
        %814 = vst [vmem:[%s368 + $0x6f0] sm:$0xff] %v813
        %v815 = vld [vmem:[%s367 + $0x6f8] sm:$0xff]
        %816 = vst [vmem:[%s368 + $0x6f8] sm:$0xff] %v815
        %v817 = vld [vmem:[%s367 + $0x700] sm:$0xff]
        %818 = vst [vmem:[%s368 + $0x700] sm:$0xff] %v817
        %v819 = vld [vmem:[%s367 + $0x708] sm:$0xff]
        %820 = vst [vmem:[%s368 + $0x708] sm:$0xff] %v819
        %v821 = vld [vmem:[%s367 + $0x710] sm:$0xff]
        %822 = vst [vmem:[%s368 + $0x710] sm:$0xff] %v821
        %v823 = vld [vmem:[%s367 + $0x718] sm:$0xff]
        %824 = vst [vmem:[%s368 + $0x718] sm:$0xff] %v823
        %v825 = vld [vmem:[%s367 + $0x720] sm:$0xff]
        %826 = vst [vmem:[%s368 + $0x720] sm:$0xff] %v825
        %v827 = vld [vmem:[%s367 + $0x728] sm:$0xff]
        %828 = vst [vmem:[%s368 + $0x728] sm:$0xff] %v827
        %v829 = vld [vmem:[%s367 + $0x730] sm:$0xff]
        %830 = vst [vmem:[%s368 + $0x730] sm:$0xff] %v829
        %v831 = vld [vmem:[%s367 + $0x738] sm:$0xff]
        %832 = vst [vmem:[%s368 + $0x738] sm:$0xff] %v831
        %v833 = vld [vmem:[%s367 + $0x740] sm:$0xff]
        %834 = vst [vmem:[%s368 + $0x740] sm:$0xff] %v833
        %v835 = vld [vmem:[%s367 + $0x748] sm:$0xff]
        %836 = vst [vmem:[%s368 + $0x748] sm:$0xff] %v835
        %v837 = vld [vmem:[%s367 + $0x750] sm:$0xff]
        %838 = vst [vmem:[%s368 + $0x750] sm:$0xff] %v837
        %v839 = vld [vmem:[%s367 + $0x758] sm:$0xff]
        %840 = vst [vmem:[%s368 + $0x758] sm:$0xff] %v839
        %v841 = vld [vmem:[%s367 + $0x760] sm:$0xff]
        %842 = vst [vmem:[%s368 + $0x760] sm:$0xff] %v841
        %v843 = vld [vmem:[%s367 + $0x768] sm:$0xff]
        %844 = vst [vmem:[%s368 + $0x768] sm:$0xff] %v843
        %v845 = vld [vmem:[%s367 + $0x770] sm:$0xff]
        %846 = vst [vmem:[%s368 + $0x770] sm:$0xff] %v845
        %v847 = vld [vmem:[%s367 + $0x778] sm:$0xff]
        %848 = vst [vmem:[%s368 + $0x778] sm:$0xff] %v847
        %v849 = vld [vmem:[%s367 + $0x780] sm:$0xff]
        %850 = vst [vmem:[%s368 + $0x780] sm:$0xff] %v849
        %v851 = vld [vmem:[%s367 + $0x788] sm:$0xff]
        %852 = vst [vmem:[%s368 + $0x788] sm:$0xff] %v851
        %v853 = vld [vmem:[%s367 + $0x790] sm:$0xff]
        %854 = vst [vmem:[%s368 + $0x790] sm:$0xff] %v853
        %v855 = vld [vmem:[%s367 + $0x798] sm:$0xff]
        %856 = vst [vmem:[%s368 + $0x798] sm:$0xff] %v855
        %v857 = vld [vmem:[%s367 + $0x7a0] sm:$0xff]
        %858 = vst [vmem:[%s368 + $0x7a0] sm:$0xff] %v857
        %v859 = vld [vmem:[%s367 + $0x7a8] sm:$0xff]
        %860 = vst [vmem:[%s368 + $0x7a8] sm:$0xff] %v859
        %v861 = vld [vmem:[%s367 + $0x7b0] sm:$0xff]
        %862 = vst [vmem:[%s368 + $0x7b0] sm:$0xff] %v861
        %v863 = vld [vmem:[%s367 + $0x7b8] sm:$0xff]
        %864 = vst [vmem:[%s368 + $0x7b8] sm:$0xff] %v863
        %v865 = vld [vmem:[%s367 + $0x7c0] sm:$0xff]
        %866 = vst [vmem:[%s368 + $0x7c0] sm:$0xff] %v865
        %v867 = vld [vmem:[%s367 + $0x7c8] sm:$0xff]
        %868 = vst [vmem:[%s368 + $0x7c8] sm:$0xff] %v867
        %v869 = vld [vmem:[%s367 + $0x7d0] sm:$0xff]
        %870 = vst [vmem:[%s368 + $0x7d0] sm:$0xff] %v869
        %v871 = vld [vmem:[%s367 + $0x7d8] sm:$0xff]
        %872 = vst [vmem:[%s368 + $0x7d8] sm:$0xff] %v871
        %v873 = vld [vmem:[%s367 + $0x7e0] sm:$0xff]
        %874 = vst [vmem:[%s368 + $0x7e0] sm:$0xff] %v873
        %v875 = vld [vmem:[%s367 + $0x7e8] sm:$0xff]
        %876 = vst [vmem:[%s368 + $0x7e8] sm:$0xff] %v875
        %v877 = vld [vmem:[%s367 + $0x7f0] sm:$0xff]
        %878 = vst [vmem:[%s368 + $0x7f0] sm:$0xff] %v877
        %v879 = vld [vmem:[%s367 + $0x7f8] sm:$0xff]
        %880 = vst [vmem:[%s368 + $0x7f8] sm:$0xff] %v879
        %v881 = vld [vmem:[%s367 + $0x800] sm:$0xff]
        %882 = vst [vmem:[%s368 + $0x800] sm:$0xff] %v881
        %v883 = vld [vmem:[%s367 + $0x808] sm:$0xff]
        %884 = vst [vmem:[%s368 + $0x808] sm:$0xff] %v883
        %v885 = vld [vmem:[%s367 + $0x810] sm:$0xff]
        %886 = vst [vmem:[%s368 + $0x810] sm:$0xff] %v885
        %v887 = vld [vmem:[%s367 + $0x818] sm:$0xff]
        %888 = vst [vmem:[%s368 + $0x818] sm:$0xff] %v887
        %v889 = vld [vmem:[%s367 + $0x820] sm:$0xff]
        %890 = vst [vmem:[%s368 + $0x820] sm:$0xff] %v889
        %v891 = vld [vmem:[%s367 + $0x828] sm:$0xff]
        %892 = vst [vmem:[%s368 + $0x828] sm:$0xff] %v891
        %v893 = vld [vmem:[%s367 + $0x830] sm:$0xff]
        %894 = vst [vmem:[%s368 + $0x830] sm:$0xff] %v893
        %v895 = vld [vmem:[%s367 + $0x838] sm:$0xff]
        %896 = vst [vmem:[%s368 + $0x838] sm:$0xff] %v895
        %v897 = vld [vmem:[%s367 + $0x840] sm:$0xff]
        %898 = vst [vmem:[%s368 + $0x840] sm:$0xff] %v897
        %v899 = vld [vmem:[%s367 + $0x848] sm:$0xff]
        %900 = vst [vmem:[%s368 + $0x848] sm:$0xff] %v899
        %v901 = vld [vmem:[%s367 + $0x850] sm:$0xff]
        %902 = vst [vmem:[%s368 + $0x850] sm:$0xff] %v901
        %v903 = vld [vmem:[%s367 + $0x858] sm:$0xff]
        %904 = vst [vmem:[%s368 + $0x858] sm:$0xff] %v903
        %v905 = vld [vmem:[%s367 + $0x860] sm:$0xff]
        %906 = vst [vmem:[%s368 + $0x860] sm:$0xff] %v905
        %v907 = vld [vmem:[%s367 + $0x868] sm:$0xff]
        %908 = vst [vmem:[%s368 + $0x868] sm:$0xff] %v907
        %v909 = vld [vmem:[%s367 + $0x870] sm:$0xff]
        %910 = vst [vmem:[%s368 + $0x870] sm:$0xff] %v909
        %v911 = vld [vmem:[%s367 + $0x878] sm:$0xff]
        %912 = vst [vmem:[%s368 + $0x878] sm:$0xff] %v911
        %v913 = vld [vmem:[%s367 + $0x880] sm:$0xff]
        %914 = vst [vmem:[%s368 + $0x880] sm:$0xff] %v913
        %v915 = vld [vmem:[%s367 + $0x888] sm:$0xff]
        %916 = vst [vmem:[%s368 + $0x888] sm:$0xff] %v915
        %v917 = vld [vmem:[%s367 + $0x890] sm:$0xff]
        %918 = vst [vmem:[%s368 + $0x890] sm:$0xff] %v917
        %v919 = vld [vmem:[%s367 + $0x898] sm:$0xff]
        %920 = vst [vmem:[%s368 + $0x898] sm:$0xff] %v919
        %v921 = vld [vmem:[%s367 + $0x8a0] sm:$0xff]
        %922 = vst [vmem:[%s368 + $0x8a0] sm:$0xff] %v921
        %v923 = vld [vmem:[%s367 + $0x8a8] sm:$0xff]
        %924 = vst [vmem:[%s368 + $0x8a8] sm:$0xff] %v923
        %v925 = vld [vmem:[%s367 + $0x8b0] sm:$0xff]
        %926 = vst [vmem:[%s368 + $0x8b0] sm:$0xff] %v925
        %v927 = vld [vmem:[%s367 + $0x8b8] sm:$0xff]
        %928 = vst [vmem:[%s368 + $0x8b8] sm:$0xff] %v927
        %v929 = vld [vmem:[%s367 + $0x8c0] sm:$0xff]
        %930 = vst [vmem:[%s368 + $0x8c0] sm:$0xff] %v929
        %v931 = vld [vmem:[%s367 + $0x8c8] sm:$0xff]
        %932 = vst [vmem:[%s368 + $0x8c8] sm:$0xff] %v931
        %v933 = vld [vmem:[%s367 + $0x8d0] sm:$0xff]
        %934 = vst [vmem:[%s368 + $0x8d0] sm:$0xff] %v933
        %v935 = vld [vmem:[%s367 + $0x8d8] sm:$0xff]
        %936 = vst [vmem:[%s368 + $0x8d8] sm:$0xff] %v935
        %v937 = vld [vmem:[%s367 + $0x8e0] sm:$0xff]
        %938 = vst [vmem:[%s368 + $0x8e0] sm:$0xff] %v937
        %v939 = vld [vmem:[%s367 + $0x8e8] sm:$0xff]
        %940 = vst [vmem:[%s368 + $0x8e8] sm:$0xff] %v939
        %v941 = vld [vmem:[%s367 + $0x8f0] sm:$0xff]
        %942 = vst [vmem:[%s368 + $0x8f0] sm:$0xff] %v941
        %v943 = vld [vmem:[%s367 + $0x8f8] sm:$0xff]
        %944 = vst [vmem:[%s368 + $0x8f8] sm:$0xff] %v943
        %v945 = vld [vmem:[%s367 + $0x900] sm:$0xff]
        %946 = vst [vmem:[%s368 + $0x900] sm:$0xff] %v945
        %v947 = vld [vmem:[%s367 + $0x908] sm:$0xff]
        %948 = vst [vmem:[%s368 + $0x908] sm:$0xff] %v947
        %v949 = vld [vmem:[%s367 + $0x910] sm:$0xff]
        %950 = vst [vmem:[%s368 + $0x910] sm:$0xff] %v949
        %v951 = vld [vmem:[%s367 + $0x918] sm:$0xff]
        %952 = vst [vmem:[%s368 + $0x918] sm:$0xff] %v951
        %v953 = vld [vmem:[%s367 + $0x920] sm:$0xff]
        %954 = vst [vmem:[%s368 + $0x920] sm:$0xff] %v953
        %v955 = vld [vmem:[%s367 + $0x928] sm:$0xff]
        %956 = vst [vmem:[%s368 + $0x928] sm:$0xff] %v955
        %v957 = vld [vmem:[%s367 + $0x930] sm:$0xff]
        %958 = vst [vmem:[%s368 + $0x930] sm:$0xff] %v957
        %v959 = vld [vmem:[%s367 + $0x938] sm:$0xff]
        %960 = vst [vmem:[%s368 + $0x938] sm:$0xff] %v959
        %v961 = vld [vmem:[%s367 + $0x940] sm:$0xff]
        %962 = vst [vmem:[%s368 + $0x940] sm:$0xff] %v961
        %v963 = vld [vmem:[%s367 + $0x948] sm:$0xff]
        %964 = vst [vmem:[%s368 + $0x948] sm:$0xff] %v963
        %v965 = vld [vmem:[%s367 + $0x950] sm:$0xff]
        %966 = vst [vmem:[%s368 + $0x950] sm:$0xff] %v965
        %v967 = vld [vmem:[%s367 + $0x958] sm:$0xff]
        %968 = vst [vmem:[%s368 + $0x958] sm:$0xff] %v967
        %v969 = vld [vmem:[%s367 + $0x960] sm:$0xff]
        %970 = vst [vmem:[%s368 + $0x960] sm:$0xff] %v969
        %v971 = vld [vmem:[%s367 + $0x968] sm:$0xff]
        %972 = vst [vmem:[%s368 + $0x968] sm:$0xff] %v971
        %v973 = vld [vmem:[%s367 + $0x970] sm:$0xff]
        %974 = vst [vmem:[%s368 + $0x970] sm:$0xff] %v973
        %v975 = vld [vmem:[%s367 + $0x978] sm:$0xff]
        %976 = vst [vmem:[%s368 + $0x978] sm:$0xff] %v975
        %v977 = vld [vmem:[%s367 + $0x980] sm:$0xff]
        %978 = vst [vmem:[%s368 + $0x980] sm:$0xff] %v977
        %v979 = vld [vmem:[%s367 + $0x988] sm:$0xff]
        %980 = vst [vmem:[%s368 + $0x988] sm:$0xff] %v979
        %v981 = vld [vmem:[%s367 + $0x990] sm:$0xff]
        %982 = vst [vmem:[%s368 + $0x990] sm:$0xff] %v981
        %v983 = vld [vmem:[%s367 + $0x998] sm:$0xff]
        %984 = vst [vmem:[%s368 + $0x998] sm:$0xff] %v983
        %v985 = vld [vmem:[%s367 + $0x9a0] sm:$0xff]
        %986 = vst [vmem:[%s368 + $0x9a0] sm:$0xff] %v985
        %v987 = vld [vmem:[%s367 + $0x9a8] sm:$0xff]
        %988 = vst [vmem:[%s368 + $0x9a8] sm:$0xff] %v987
        %v989 = vld [vmem:[%s367 + $0x9b0] sm:$0xff]
        %990 = vst [vmem:[%s368 + $0x9b0] sm:$0xff] %v989
        %v991 = vld [vmem:[%s367 + $0x9b8] sm:$0xff]
        %992 = vst [vmem:[%s368 + $0x9b8] sm:$0xff] %v991
        %v993 = vld [vmem:[%s367 + $0x9c0] sm:$0xff]
        %994 = vst [vmem:[%s368 + $0x9c0] sm:$0xff] %v993
        %v995 = vld [vmem:[%s367 + $0x9c8] sm:$0xff]
        %996 = vst [vmem:[%s368 + $0x9c8] sm:$0xff] %v995
        %v997 = vld [vmem:[%s367 + $0x9d0] sm:$0xff]
        %998 = vst [vmem:[%s368 + $0x9d0] sm:$0xff] %v997
        %v999 = vld [vmem:[%s367 + $0x9d8] sm:$0xff]
        %1000 = vst [vmem:[%s368 + $0x9d8] sm:$0xff] %v999
        %v1001 = vld [vmem:[%s367 + $0x9e0] sm:$0xff]
        %1002 = vst [vmem:[%s368 + $0x9e0] sm:$0xff] %v1001
        %v1003 = vld [vmem:[%s367 + $0x9e8] sm:$0xff]
        %1004 = vst [vmem:[%s368 + $0x9e8] sm:$0xff] %v1003
        %v1005 = vld [vmem:[%s367 + $0x9f0] sm:$0xff]
        %1006 = vst [vmem:[%s368 + $0x9f0] sm:$0xff] %v1005
        %v1007 = vld [vmem:[%s367 + $0x9f8] sm:$0xff]
        %1008 = vst [vmem:[%s368 + $0x9f8] sm:$0xff] %v1007
        %v1009 = vld [vmem:[%s367 + $0xa00] sm:$0xff]
        %1010 = vst [vmem:[%s368 + $0xa00] sm:$0xff] %v1009
        %v1011 = vld [vmem:[%s367 + $0xa08] sm:$0xff]
        %1012 = vst [vmem:[%s368 + $0xa08] sm:$0xff] %v1011
        %v1013 = vld [vmem:[%s367 + $0xa10] sm:$0xff]
        %1014 = vst [vmem:[%s368 + $0xa10] sm:$0xff] %v1013
        %v1015 = vld [vmem:[%s367 + $0xa18] sm:$0xff]
        %1016 = vst [vmem:[%s368 + $0xa18] sm:$0xff] %v1015
        %v1017 = vld [vmem:[%s367 + $0xa20] sm:$0xff]
        %1018 = vst [vmem:[%s368 + $0xa20] sm:$0xff] %v1017
        %v1019 = vld [vmem:[%s367 + $0xa28] sm:$0xff]
        %1020 = vst [vmem:[%s368 + $0xa28] sm:$0xff] %v1019
        %v1021 = vld [vmem:[%s367 + $0xa30] sm:$0xff]
        %1022 = vst [vmem:[%s368 + $0xa30] sm:$0xff] %v1021
        %v1023 = vld [vmem:[%s367 + $0xa38] sm:$0xff]
        %1024 = vst [vmem:[%s368 + $0xa38] sm:$0xff] %v1023
        %v1025 = vld [vmem:[%s367 + $0xa40] sm:$0xff]
        %1026 = vst [vmem:[%s368 + $0xa40] sm:$0xff] %v1025
        %v1027 = vld [vmem:[%s367 + $0xa48] sm:$0xff]
        %1028 = vst [vmem:[%s368 + $0xa48] sm:$0xff] %v1027
        %v1029 = vld [vmem:[%s367 + $0xa50] sm:$0xff]
        %1030 = vst [vmem:[%s368 + $0xa50] sm:$0xff] %v1029
        %v1031 = vld [vmem:[%s367 + $0xa58] sm:$0xff]
        %1032 = vst [vmem:[%s368 + $0xa58] sm:$0xff] %v1031
        %v1033 = vld [vmem:[%s367 + $0xa60] sm:$0xff]
        %1034 = vst [vmem:[%s368 + $0xa60] sm:$0xff] %v1033
        %v1035 = vld [vmem:[%s367 + $0xa68] sm:$0xff]
        %1036 = vst [vmem:[%s368 + $0xa68] sm:$0xff] %v1035
        %v1037 = vld [vmem:[%s367 + $0xa70] sm:$0xff]
        %1038 = vst [vmem:[%s368 + $0xa70] sm:$0xff] %v1037
        %v1039 = vld [vmem:[%s367 + $0xa78] sm:$0xff]
        %1040 = vst [vmem:[%s368 + $0xa78] sm:$0xff] %v1039
        %v1041 = vld [vmem:[%s367 + $0xa80] sm:$0xff]
        %1042 = vst [vmem:[%s368 + $0xa80] sm:$0xff] %v1041
        %v1043 = vld [vmem:[%s367 + $0xa88] sm:$0xff]
        %1044 = vst [vmem:[%s368 + $0xa88] sm:$0xff] %v1043
        %v1045 = vld [vmem:[%s367 + $0xa90] sm:$0xff]
        %1046 = vst [vmem:[%s368 + $0xa90] sm:$0xff] %v1045
        %v1047 = vld [vmem:[%s367 + $0xa98] sm:$0xff]
        %1048 = vst [vmem:[%s368 + $0xa98] sm:$0xff] %v1047
        %v1049 = vld [vmem:[%s367 + $0xaa0] sm:$0xff]
        %1050 = vst [vmem:[%s368 + $0xaa0] sm:$0xff] %v1049
        %v1051 = vld [vmem:[%s367 + $0xaa8] sm:$0xff]
        %1052 = vst [vmem:[%s368 + $0xaa8] sm:$0xff] %v1051
        %v1053 = vld [vmem:[%s367 + $0xab0] sm:$0xff]
        %1054 = vst [vmem:[%s368 + $0xab0] sm:$0xff] %v1053
        %v1055 = vld [vmem:[%s367 + $0xab8] sm:$0xff]
        %1056 = vst [vmem:[%s368 + $0xab8] sm:$0xff] %v1055
        %v1057 = vld [vmem:[%s367 + $0xac0] sm:$0xff]
        %1058 = vst [vmem:[%s368 + $0xac0] sm:$0xff] %v1057
        %v1059 = vld [vmem:[%s367 + $0xac8] sm:$0xff]
        %1060 = vst [vmem:[%s368 + $0xac8] sm:$0xff] %v1059
        %v1061 = vld [vmem:[%s367 + $0xad0] sm:$0xff]
        %1062 = vst [vmem:[%s368 + $0xad0] sm:$0xff] %v1061
        %v1063 = vld [vmem:[%s367 + $0xad8] sm:$0xff]
        %1064 = vst [vmem:[%s368 + $0xad8] sm:$0xff] %v1063
        %v1065 = vld [vmem:[%s367 + $0xae0] sm:$0xff]
        %1066 = vst [vmem:[%s368 + $0xae0] sm:$0xff] %v1065
        %v1067 = vld [vmem:[%s367 + $0xae8] sm:$0xff]
        %1068 = vst [vmem:[%s368 + $0xae8] sm:$0xff] %v1067
        %v1069 = vld [vmem:[%s367 + $0xaf0] sm:$0xff]
        %1070 = vst [vmem:[%s368 + $0xaf0] sm:$0xff] %v1069
        %v1071 = vld [vmem:[%s367 + $0xaf8] sm:$0xff]
        %1072 = vst [vmem:[%s368 + $0xaf8] sm:$0xff] %v1071
        %v1073 = vld [vmem:[%s367 + $0xb00] sm:$0xff]
        %1074 = vst [vmem:[%s368 + $0xb00] sm:$0xff] %v1073
        %v1075 = vld [vmem:[%s367 + $0xb08] sm:$0xff]
        %1076 = vst [vmem:[%s368 + $0xb08] sm:$0xff] %v1075
        %v1077 = vld [vmem:[%s367 + $0xb10] sm:$0xff]
        %1078 = vst [vmem:[%s368 + $0xb10] sm:$0xff] %v1077
        %v1079 = vld [vmem:[%s367 + $0xb18] sm:$0xff]
        %1080 = vst [vmem:[%s368 + $0xb18] sm:$0xff] %v1079
        %v1081 = vld [vmem:[%s367 + $0xb20] sm:$0xff]
        %1082 = vst [vmem:[%s368 + $0xb20] sm:$0xff] %v1081
        %v1083 = vld [vmem:[%s367 + $0xb28] sm:$0xff]
        %1084 = vst [vmem:[%s368 + $0xb28] sm:$0xff] %v1083
        %v1085 = vld [vmem:[%s367 + $0xb30] sm:$0xff]
        %1086 = vst [vmem:[%s368 + $0xb30] sm:$0xff] %v1085
        %v1087 = vld [vmem:[%s367 + $0xb38] sm:$0xff]
        %1088 = vst [vmem:[%s368 + $0xb38] sm:$0xff] %v1087
        %v1089 = vld [vmem:[%s367 + $0xb40] sm:$0xff]
        %1090 = vst [vmem:[%s368 + $0xb40] sm:$0xff] %v1089
        %v1091 = vld [vmem:[%s367 + $0xb48] sm:$0xff]
        %1092 = vst [vmem:[%s368 + $0xb48] sm:$0xff] %v1091
        %v1093 = vld [vmem:[%s367 + $0xb50] sm:$0xff]
        %1094 = vst [vmem:[%s368 + $0xb50] sm:$0xff] %v1093
        %v1095 = vld [vmem:[%s367 + $0xb58] sm:$0xff]
        %1096 = vst [vmem:[%s368 + $0xb58] sm:$0xff] %v1095
        %v1097 = vld [vmem:[%s367 + $0xb60] sm:$0xff]
        %1098 = vst [vmem:[%s368 + $0xb60] sm:$0xff] %v1097
        %v1099 = vld [vmem:[%s367 + $0xb68] sm:$0xff]
        %1100 = vst [vmem:[%s368 + $0xb68] sm:$0xff] %v1099
        %v1101 = vld [vmem:[%s367 + $0xb70] sm:$0xff]
        %1102 = vst [vmem:[%s368 + $0xb70] sm:$0xff] %v1101
        %v1103 = vld [vmem:[%s367 + $0xb78] sm:$0xff]
        %1104 = vst [vmem:[%s368 + $0xb78] sm:$0xff] %v1103
        %v1105 = vld [vmem:[%s367 + $0xb80] sm:$0xff]
        %1106 = vst [vmem:[%s368 + $0xb80] sm:$0xff] %v1105
        %v1107 = vld [vmem:[%s367 + $0xb88] sm:$0xff]
        %1108 = vst [vmem:[%s368 + $0xb88] sm:$0xff] %v1107
        %v1109 = vld [vmem:[%s367 + $0xb90] sm:$0xff]
        %1110 = vst [vmem:[%s368 + $0xb90] sm:$0xff] %v1109
        %v1111 = vld [vmem:[%s367 + $0xb98] sm:$0xff]
        %1112 = vst [vmem:[%s368 + $0xb98] sm:$0xff] %v1111
        %v1113 = vld [vmem:[%s367 + $0xba0] sm:$0xff]
        %1114 = vst [vmem:[%s368 + $0xba0] sm:$0xff] %v1113
        %v1115 = vld [vmem:[%s367 + $0xba8] sm:$0xff]
        %1116 = vst [vmem:[%s368 + $0xba8] sm:$0xff] %v1115
        %v1117 = vld [vmem:[%s367 + $0xbb0] sm:$0xff]
        %1118 = vst [vmem:[%s368 + $0xbb0] sm:$0xff] %v1117
        %v1119 = vld [vmem:[%s367 + $0xbb8] sm:$0xff]
        %1120 = vst [vmem:[%s368 + $0xbb8] sm:$0xff] %v1119
        %v1121 = vld [vmem:[%s367 + $0xbc0] sm:$0xff]
        %1122 = vst [vmem:[%s368 + $0xbc0] sm:$0xff] %v1121
        %v1123 = vld [vmem:[%s367 + $0xbc8] sm:$0xff]
        %1124 = vst [vmem:[%s368 + $0xbc8] sm:$0xff] %v1123
        %v1125 = vld [vmem:[%s367 + $0xbd0] sm:$0xff]
        %1126 = vst [vmem:[%s368 + $0xbd0] sm:$0xff] %v1125
        %v1127 = vld [vmem:[%s367 + $0xbd8] sm:$0xff]
        %1128 = vst [vmem:[%s368 + $0xbd8] sm:$0xff] %v1127
        %v1129 = vld [vmem:[%s367 + $0xbe0] sm:$0xff]
        %1130 = vst [vmem:[%s368 + $0xbe0] sm:$0xff] %v1129
        %v1131 = vld [vmem:[%s367 + $0xbe8] sm:$0xff]
        %1132 = vst [vmem:[%s368 + $0xbe8] sm:$0xff] %v1131
        %v1133 = vld [vmem:[%s367 + $0xbf0] sm:$0xff]
        %1134 = vst [vmem:[%s368 + $0xbf0] sm:$0xff] %v1133
        %v1135 = vld [vmem:[%s367 + $0xbf8] sm:$0xff]
        %1136 = vst [vmem:[%s368 + $0xbf8] sm:$0xff] %v1135
        %v1137 = vld [vmem:[%s367 + $0xc00] sm:$0xff]
        %1138 = vst [vmem:[%s368 + $0xc00] sm:$0xff] %v1137
        %v1139 = vld [vmem:[%s367 + $0xc08] sm:$0xff]
        %1140 = vst [vmem:[%s368 + $0xc08] sm:$0xff] %v1139
        %v1141 = vld [vmem:[%s367 + $0xc10] sm:$0xff]
        %1142 = vst [vmem:[%s368 + $0xc10] sm:$0xff] %v1141
        %v1143 = vld [vmem:[%s367 + $0xc18] sm:$0xff]
        %1144 = vst [vmem:[%s368 + $0xc18] sm:$0xff] %v1143
        %v1145 = vld [vmem:[%s367 + $0xc20] sm:$0xff]
        %1146 = vst [vmem:[%s368 + $0xc20] sm:$0xff] %v1145
        %v1147 = vld [vmem:[%s367 + $0xc28] sm:$0xff]
        %1148 = vst [vmem:[%s368 + $0xc28] sm:$0xff] %v1147
        %v1149 = vld [vmem:[%s367 + $0xc30] sm:$0xff]
        %1150 = vst [vmem:[%s368 + $0xc30] sm:$0xff] %v1149
        %v1151 = vld [vmem:[%s367 + $0xc38] sm:$0xff]
        %1152 = vst [vmem:[%s368 + $0xc38] sm:$0xff] %v1151
        %v1153 = vld [vmem:[%s367 + $0xc40] sm:$0xff]
        %1154 = vst [vmem:[%s368 + $0xc40] sm:$0xff] %v1153
        %v1155 = vld [vmem:[%s367 + $0xc48] sm:$0xff]
        %1156 = vst [vmem:[%s368 + $0xc48] sm:$0xff] %v1155
        %v1157 = vld [vmem:[%s367 + $0xc50] sm:$0xff]
        %1158 = vst [vmem:[%s368 + $0xc50] sm:$0xff] %v1157
        %v1159 = vld [vmem:[%s367 + $0xc58] sm:$0xff]
        %1160 = vst [vmem:[%s368 + $0xc58] sm:$0xff] %v1159
        %v1161 = vld [vmem:[%s367 + $0xc60] sm:$0xff]
        %1162 = vst [vmem:[%s368 + $0xc60] sm:$0xff] %v1161
        %v1163 = vld [vmem:[%s367 + $0xc68] sm:$0xff]
        %1164 = vst [vmem:[%s368 + $0xc68] sm:$0xff] %v1163
        %v1165 = vld [vmem:[%s367 + $0xc70] sm:$0xff]
        %1166 = vst [vmem:[%s368 + $0xc70] sm:$0xff] %v1165
        %v1167 = vld [vmem:[%s367 + $0xc78] sm:$0xff]
        %1168 = vst [vmem:[%s368 + $0xc78] sm:$0xff] %v1167
        %v1169 = vld [vmem:[%s367 + $0xc80] sm:$0xff]
        %1170 = vst [vmem:[%s368 + $0xc80] sm:$0xff] %v1169
        %v1171 = vld [vmem:[%s367 + $0xc88] sm:$0xff]
        %1172 = vst [vmem:[%s368 + $0xc88] sm:$0xff] %v1171
        %v1173 = vld [vmem:[%s367 + $0xc90] sm:$0xff]
        %1174 = vst [vmem:[%s368 + $0xc90] sm:$0xff] %v1173
        %v1175 = vld [vmem:[%s367 + $0xc98] sm:$0xff]
        %1176 = vst [vmem:[%s368 + $0xc98] sm:$0xff] %v1175
        %v1177 = vld [vmem:[%s367 + $0xca0] sm:$0xff]
        %1178 = vst [vmem:[%s368 + $0xca0] sm:$0xff] %v1177
        %v1179 = vld [vmem:[%s367 + $0xca8] sm:$0xff]
        %1180 = vst [vmem:[%s368 + $0xca8] sm:$0xff] %v1179
        %v1181 = vld [vmem:[%s367 + $0xcb0] sm:$0xff]
        %1182 = vst [vmem:[%s368 + $0xcb0] sm:$0xff] %v1181
        %v1183 = vld [vmem:[%s367 + $0xcb8] sm:$0xff]
        %1184 = vst [vmem:[%s368 + $0xcb8] sm:$0xff] %v1183
        %v1185 = vld [vmem:[%s367 + $0xcc0] sm:$0xff]
        %1186 = vst [vmem:[%s368 + $0xcc0] sm:$0xff] %v1185
        %v1187 = vld [vmem:[%s367 + $0xcc8] sm:$0xff]
        %1188 = vst [vmem:[%s368 + $0xcc8] sm:$0xff] %v1187
        %v1189 = vld [vmem:[%s367 + $0xcd0] sm:$0xff]
        %1190 = vst [vmem:[%s368 + $0xcd0] sm:$0xff] %v1189
        %v1191 = vld [vmem:[%s367 + $0xcd8] sm:$0xff]
        %1192 = vst [vmem:[%s368 + $0xcd8] sm:$0xff] %v1191
        %v1193 = vld [vmem:[%s367 + $0xce0] sm:$0xff]
        %1194 = vst [vmem:[%s368 + $0xce0] sm:$0xff] %v1193
        %v1195 = vld [vmem:[%s367 + $0xce8] sm:$0xff]
        %1196 = vst [vmem:[%s368 + $0xce8] sm:$0xff] %v1195
        %v1197 = vld [vmem:[%s367 + $0xcf0] sm:$0xff]
        %1198 = vst [vmem:[%s368 + $0xcf0] sm:$0xff] %v1197
        %v1199 = vld [vmem:[%s367 + $0xcf8] sm:$0xff]
        %1200 = vst [vmem:[%s368 + $0xcf8] sm:$0xff] %v1199
        %v1201 = vld [vmem:[%s367 + $0xd00] sm:$0xff]
        %1202 = vst [vmem:[%s368 + $0xd00] sm:$0xff] %v1201
        %v1203 = vld [vmem:[%s367 + $0xd08] sm:$0xff]
        %1204 = vst [vmem:[%s368 + $0xd08] sm:$0xff] %v1203
        %v1205 = vld [vmem:[%s367 + $0xd10] sm:$0xff]
        %1206 = vst [vmem:[%s368 + $0xd10] sm:$0xff] %v1205
        %v1207 = vld [vmem:[%s367 + $0xd18] sm:$0xff]
        %1208 = vst [vmem:[%s368 + $0xd18] sm:$0xff] %v1207
        %v1209 = vld [vmem:[%s367 + $0xd20] sm:$0xff]
        %1210 = vst [vmem:[%s368 + $0xd20] sm:$0xff] %v1209
        %v1211 = vld [vmem:[%s367 + $0xd28] sm:$0xff]
        %1212 = vst [vmem:[%s368 + $0xd28] sm:$0xff] %v1211
        %v1213 = vld [vmem:[%s367 + $0xd30] sm:$0xff]
        %1214 = vst [vmem:[%s368 + $0xd30] sm:$0xff] %v1213
        %v1215 = vld [vmem:[%s367 + $0xd38] sm:$0xff]
        %1216 = vst [vmem:[%s368 + $0xd38] sm:$0xff] %v1215
        %v1217 = vld [vmem:[%s367 + $0xd40] sm:$0xff]
        %1218 = vst [vmem:[%s368 + $0xd40] sm:$0xff] %v1217
        %v1219 = vld [vmem:[%s367 + $0xd48] sm:$0xff]
        %1220 = vst [vmem:[%s368 + $0xd48] sm:$0xff] %v1219
        %v1221 = vld [vmem:[%s367 + $0xd50] sm:$0xff]
        %1222 = vst [vmem:[%s368 + $0xd50] sm:$0xff] %v1221
        %v1223 = vld [vmem:[%s367 + $0xd58] sm:$0xff]
        %1224 = vst [vmem:[%s368 + $0xd58] sm:$0xff] %v1223
        %v1225 = vld [vmem:[%s367 + $0xd60] sm:$0xff]
        %1226 = vst [vmem:[%s368 + $0xd60] sm:$0xff] %v1225
        %v1227 = vld [vmem:[%s367 + $0xd68] sm:$0xff]
        %1228 = vst [vmem:[%s368 + $0xd68] sm:$0xff] %v1227
        %v1229 = vld [vmem:[%s367 + $0xd70] sm:$0xff]
        %1230 = vst [vmem:[%s368 + $0xd70] sm:$0xff] %v1229
        %v1231 = vld [vmem:[%s367 + $0xd78] sm:$0xff]
        %1232 = vst [vmem:[%s368 + $0xd78] sm:$0xff] %v1231
        %v1233 = vld [vmem:[%s367 + $0xd80] sm:$0xff]
        %1234 = vst [vmem:[%s368 + $0xd80] sm:$0xff] %v1233
        %v1235 = vld [vmem:[%s367 + $0xd88] sm:$0xff]
        %1236 = vst [vmem:[%s368 + $0xd88] sm:$0xff] %v1235
        %v1237 = vld [vmem:[%s367 + $0xd90] sm:$0xff]
        %1238 = vst [vmem:[%s368 + $0xd90] sm:$0xff] %v1237
        %v1239 = vld [vmem:[%s367 + $0xd98] sm:$0xff]
        %1240 = vst [vmem:[%s368 + $0xd98] sm:$0xff] %v1239
        %v1241 = vld [vmem:[%s367 + $0xda0] sm:$0xff]
        %1242 = vst [vmem:[%s368 + $0xda0] sm:$0xff] %v1241
        %v1243 = vld [vmem:[%s367 + $0xda8] sm:$0xff]
        %1244 = vst [vmem:[%s368 + $0xda8] sm:$0xff] %v1243
        %v1245 = vld [vmem:[%s367 + $0xdb0] sm:$0xff]
        %1246 = vst [vmem:[%s368 + $0xdb0] sm:$0xff] %v1245
        %v1247 = vld [vmem:[%s367 + $0xdb8] sm:$0xff]
        %1248 = vst [vmem:[%s368 + $0xdb8] sm:$0xff] %v1247
        %v1249 = vld [vmem:[%s367 + $0xdc0] sm:$0xff]
        %1250 = vst [vmem:[%s368 + $0xdc0] sm:$0xff] %v1249
        %v1251 = vld [vmem:[%s367 + $0xdc8] sm:$0xff]
        %1252 = vst [vmem:[%s368 + $0xdc8] sm:$0xff] %v1251
        %v1253 = vld [vmem:[%s367 + $0xdd0] sm:$0xff]
        %1254 = vst [vmem:[%s368 + $0xdd0] sm:$0xff] %v1253
        %v1255 = vld [vmem:[%s367 + $0xdd8] sm:$0xff]
        %1256 = vst [vmem:[%s368 + $0xdd8] sm:$0xff] %v1255
        %v1257 = vld [vmem:[%s367 + $0xde0] sm:$0xff]
        %1258 = vst [vmem:[%s368 + $0xde0] sm:$0xff] %v1257
        %v1259 = vld [vmem:[%s367 + $0xde8] sm:$0xff]
        %1260 = vst [vmem:[%s368 + $0xde8] sm:$0xff] %v1259
        %v1261 = vld [vmem:[%s367 + $0xdf0] sm:$0xff]
        %1262 = vst [vmem:[%s368 + $0xdf0] sm:$0xff] %v1261
        %v1263 = vld [vmem:[%s367 + $0xdf8] sm:$0xff]
        %1264 = vst [vmem:[%s368 + $0xdf8] sm:$0xff] %v1263
        %v1265 = vld [vmem:[%s367 + $0xe00] sm:$0xff]
        %1266 = vst [vmem:[%s368 + $0xe00] sm:$0xff] %v1265
        %v1267 = vld [vmem:[%s367 + $0xe08] sm:$0xff]
        %1268 = vst [vmem:[%s368 + $0xe08] sm:$0xff] %v1267
        %v1269 = vld [vmem:[%s367 + $0xe10] sm:$0xff]
        %1270 = vst [vmem:[%s368 + $0xe10] sm:$0xff] %v1269
        %v1271 = vld [vmem:[%s367 + $0xe18] sm:$0xff]
        %1272 = vst [vmem:[%s368 + $0xe18] sm:$0xff] %v1271
        %v1273 = vld [vmem:[%s367 + $0xe20] sm:$0xff]
        %1274 = vst [vmem:[%s368 + $0xe20] sm:$0xff] %v1273
        %v1275 = vld [vmem:[%s367 + $0xe28] sm:$0xff]
        %1276 = vst [vmem:[%s368 + $0xe28] sm:$0xff] %v1275
        %v1277 = vld [vmem:[%s367 + $0xe30] sm:$0xff]
        %1278 = vst [vmem:[%s368 + $0xe30] sm:$0xff] %v1277
        %v1279 = vld [vmem:[%s367 + $0xe38] sm:$0xff]
        %1280 = vst [vmem:[%s368 + $0xe38] sm:$0xff] %v1279
        %v1281 = vld [vmem:[%s367 + $0xe40] sm:$0xff]
        %1282 = vst [vmem:[%s368 + $0xe40] sm:$0xff] %v1281
        %v1283 = vld [vmem:[%s367 + $0xe48] sm:$0xff]
        %1284 = vst [vmem:[%s368 + $0xe48] sm:$0xff] %v1283
        %v1285 = vld [vmem:[%s367 + $0xe50] sm:$0xff]
        %1286 = vst [vmem:[%s368 + $0xe50] sm:$0xff] %v1285
        %v1287 = vld [vmem:[%s367 + $0xe58] sm:$0xff]
        %1288 = vst [vmem:[%s368 + $0xe58] sm:$0xff] %v1287
        %v1289 = vld [vmem:[%s367 + $0xe60] sm:$0xff]
        %1290 = vst [vmem:[%s368 + $0xe60] sm:$0xff] %v1289
        %v1291 = vld [vmem:[%s367 + $0xe68] sm:$0xff]
        %1292 = vst [vmem:[%s368 + $0xe68] sm:$0xff] %v1291
        %v1293 = vld [vmem:[%s367 + $0xe70] sm:$0xff]
        %1294 = vst [vmem:[%s368 + $0xe70] sm:$0xff] %v1293
        %v1295 = vld [vmem:[%s367 + $0xe78] sm:$0xff]
        %1296 = vst [vmem:[%s368 + $0xe78] sm:$0xff] %v1295
        %v1297 = vld [vmem:[%s367 + $0xe80] sm:$0xff]
        %1298 = vst [vmem:[%s368 + $0xe80] sm:$0xff] %v1297
        %v1299 = vld [vmem:[%s367 + $0xe88] sm:$0xff]
        %1300 = vst [vmem:[%s368 + $0xe88] sm:$0xff] %v1299
        %v1301 = vld [vmem:[%s367 + $0xe90] sm:$0xff]
        %1302 = vst [vmem:[%s368 + $0xe90] sm:$0xff] %v1301
        %v1303 = vld [vmem:[%s367 + $0xe98] sm:$0xff]
        %1304 = vst [vmem:[%s368 + $0xe98] sm:$0xff] %v1303
        %v1305 = vld [vmem:[%s367 + $0xea0] sm:$0xff]
        %1306 = vst [vmem:[%s368 + $0xea0] sm:$0xff] %v1305
        %v1307 = vld [vmem:[%s367 + $0xea8] sm:$0xff]
        %1308 = vst [vmem:[%s368 + $0xea8] sm:$0xff] %v1307
        %v1309 = vld [vmem:[%s367 + $0xeb0] sm:$0xff]
        %1310 = vst [vmem:[%s368 + $0xeb0] sm:$0xff] %v1309
        %v1311 = vld [vmem:[%s367 + $0xeb8] sm:$0xff]
        %1312 = vst [vmem:[%s368 + $0xeb8] sm:$0xff] %v1311
        %v1313 = vld [vmem:[%s367 + $0xec0] sm:$0xff]
        %1314 = vst [vmem:[%s368 + $0xec0] sm:$0xff] %v1313
        %v1315 = vld [vmem:[%s367 + $0xec8] sm:$0xff]
        %1316 = vst [vmem:[%s368 + $0xec8] sm:$0xff] %v1315
        %v1317 = vld [vmem:[%s367 + $0xed0] sm:$0xff]
        %1318 = vst [vmem:[%s368 + $0xed0] sm:$0xff] %v1317
        %v1319 = vld [vmem:[%s367 + $0xed8] sm:$0xff]
        %1320 = vst [vmem:[%s368 + $0xed8] sm:$0xff] %v1319
        %v1321 = vld [vmem:[%s367 + $0xee0] sm:$0xff]
        %1322 = vst [vmem:[%s368 + $0xee0] sm:$0xff] %v1321
        %v1323 = vld [vmem:[%s367 + $0xee8] sm:$0xff]
        %1324 = vst [vmem:[%s368 + $0xee8] sm:$0xff] %v1323
        %v1325 = vld [vmem:[%s367 + $0xef0] sm:$0xff]
        %1326 = vst [vmem:[%s368 + $0xef0] sm:$0xff] %v1325
        %v1327 = vld [vmem:[%s367 + $0xef8] sm:$0xff]
        %1328 = vst [vmem:[%s368 + $0xef8] sm:$0xff] %v1327
        %v1329 = vld [vmem:[%s367 + $0xf00] sm:$0xff]
        %1330 = vst [vmem:[%s368 + $0xf00] sm:$0xff] %v1329
        %v1331 = vld [vmem:[%s367 + $0xf08] sm:$0xff]
        %1332 = vst [vmem:[%s368 + $0xf08] sm:$0xff] %v1331
        %v1333 = vld [vmem:[%s367 + $0xf10] sm:$0xff]
        %1334 = vst [vmem:[%s368 + $0xf10] sm:$0xff] %v1333
        %v1335 = vld [vmem:[%s367 + $0xf18] sm:$0xff]
        %1336 = vst [vmem:[%s368 + $0xf18] sm:$0xff] %v1335
        %v1337 = vld [vmem:[%s367 + $0xf20] sm:$0xff]
        %1338 = vst [vmem:[%s368 + $0xf20] sm:$0xff] %v1337
        %v1339 = vld [vmem:[%s367 + $0xf28] sm:$0xff]
        %1340 = vst [vmem:[%s368 + $0xf28] sm:$0xff] %v1339
        %v1341 = vld [vmem:[%s367 + $0xf30] sm:$0xff]
        %1342 = vst [vmem:[%s368 + $0xf30] sm:$0xff] %v1341
        %v1343 = vld [vmem:[%s367 + $0xf38] sm:$0xff]
        %1344 = vst [vmem:[%s368 + $0xf38] sm:$0xff] %v1343
        %v1345 = vld [vmem:[%s367 + $0xf40] sm:$0xff]
        %1346 = vst [vmem:[%s368 + $0xf40] sm:$0xff] %v1345
        %v1347 = vld [vmem:[%s367 + $0xf48] sm:$0xff]
        %1348 = vst [vmem:[%s368 + $0xf48] sm:$0xff] %v1347
        %v1349 = vld [vmem:[%s367 + $0xf50] sm:$0xff]
        %1350 = vst [vmem:[%s368 + $0xf50] sm:$0xff] %v1349
        %v1351 = vld [vmem:[%s367 + $0xf58] sm:$0xff]
        %1352 = vst [vmem:[%s368 + $0xf58] sm:$0xff] %v1351
        %v1353 = vld [vmem:[%s367 + $0xf60] sm:$0xff]
        %1354 = vst [vmem:[%s368 + $0xf60] sm:$0xff] %v1353
        %v1355 = vld [vmem:[%s367 + $0xf68] sm:$0xff]
        %1356 = vst [vmem:[%s368 + $0xf68] sm:$0xff] %v1355
        %v1357 = vld [vmem:[%s367 + $0xf70] sm:$0xff]
        %1358 = vst [vmem:[%s368 + $0xf70] sm:$0xff] %v1357
        %v1359 = vld [vmem:[%s367 + $0xf78] sm:$0xff]
        %1360 = vst [vmem:[%s368 + $0xf78] sm:$0xff] %v1359
        %v1361 = vld [vmem:[%s367 + $0xf80] sm:$0xff]
        %1362 = vst [vmem:[%s368 + $0xf80] sm:$0xff] %v1361
        %v1363 = vld [vmem:[%s367 + $0xf88] sm:$0xff]
        %1364 = vst [vmem:[%s368 + $0xf88] sm:$0xff] %v1363
        %v1365 = vld [vmem:[%s367 + $0xf90] sm:$0xff]
        %1366 = vst [vmem:[%s368 + $0xf90] sm:$0xff] %v1365
        %v1367 = vld [vmem:[%s367 + $0xf98] sm:$0xff]
        %1368 = vst [vmem:[%s368 + $0xf98] sm:$0xff] %v1367
        %v1369 = vld [vmem:[%s367 + $0xfa0] sm:$0xff]
        %1370 = vst [vmem:[%s368 + $0xfa0] sm:$0xff] %v1369
        %v1371 = vld [vmem:[%s367 + $0xfa8] sm:$0xff]
        %1372 = vst [vmem:[%s368 + $0xfa8] sm:$0xff] %v1371
        %v1373 = vld [vmem:[%s367 + $0xfb0] sm:$0xff]
        %1374 = vst [vmem:[%s368 + $0xfb0] sm:$0xff] %v1373
        %v1375 = vld [vmem:[%s367 + $0xfb8] sm:$0xff]
        %1376 = vst [vmem:[%s368 + $0xfb8] sm:$0xff] %v1375
        %v1377 = vld [vmem:[%s367 + $0xfc0] sm:$0xff]
        %1378 = vst [vmem:[%s368 + $0xfc0] sm:$0xff] %v1377
        %v1379 = vld [vmem:[%s367 + $0xfc8] sm:$0xff]
        %1380 = vst [vmem:[%s368 + $0xfc8] sm:$0xff] %v1379
        %v1381 = vld [vmem:[%s367 + $0xfd0] sm:$0xff]
        %1382 = vst [vmem:[%s368 + $0xfd0] sm:$0xff] %v1381
        %v1383 = vld [vmem:[%s367 + $0xfd8] sm:$0xff]
        %1384 = vst [vmem:[%s368 + $0xfd8] sm:$0xff] %v1383
        %v1385 = vld [vmem:[%s367 + $0xfe0] sm:$0xff]
        %1386 = vst [vmem:[%s368 + $0xfe0] sm:$0xff] %v1385
        %v1387 = vld [vmem:[%s367 + $0xfe8] sm:$0xff]
        %1388 = vst [vmem:[%s368 + $0xfe8] sm:$0xff] %v1387
        %v1389 = vld [vmem:[%s367 + $0xff0] sm:$0xff]
        %1390 = vst [vmem:[%s368 + $0xff0] sm:$0xff] %v1389
        %v1391 = vld [vmem:[%s367 + $0xff8] sm:$0xff]
        %1392 = vst [vmem:[%s368 + $0xff8] sm:$0xff] %v1391
      $region103: #{text_gru_forward.1} parent=97 // loop_footer
        %s366 = sadd.s32 1, %s362
      $region104: #{text_gru_forward.1} parent=97 // loop_footer_branch
        %361 = sbr.rel target = $region100
      $region105: #{text_gru_forward.1} parent=97 // loop_exit
        _
    $region98: #{text_gru_forward.1} parent=82 // pred_fallthru
      _
    %p1393 = pneg %p357
    // Predicated region
    $region106: #{text_gru_forward.1} parent=82 // pred_check
      _
    $region107: #{text_gru_forward.1} parent=82 // pred_check_branch
      %1395 = sbr.rel (%p357) target = $region109
    $region108: #{text_gru_forward.1} parent=82 // pred_region
      %s1396 = sand.u32 4096, 7
    $region109: #{text_gru_forward.1} parent=82 // pred_fallthru
      _
  $region83: #{text_gru_forward.1} parent=0 // pred_fallthru
    _
  // Predicated region
  $region84: #{text_gru_forward.1} parent=0 // pred_check
    %p342 = pneg %p338
  $region85: #{text_gru_forward.1} parent=0 // pred_check_branch
    %344 = sbr.rel (%p342) target = $region87
  $region86: #{text_gru_forward.1} parent=0 // pred_region
    %s345 = sshllo.u32 0, 4096
    loop: start=0, step=1, limit=1
    $region88: #{text_gru_forward.1} parent=86 // loop_pre_header
      _
    $region89: #{text_gru_forward.1} parent=86 // loop_header
      %s347 = sphi 0, %s351
      %p348 = scmp.ge.s32.totalorder %s347, 1
      %s352 = sphi %s12, %s12
      %s353 = sphi [#allocation4], [#allocation4]
    $region90: #{text_gru_forward.1} parent=86 // loop_header_branch
      %350 = sbr.rel (%p348) target = $region94
    $region91: #{text_gru_forward.1} parent=86 // loop_body
      %v354 = vld [vmem:[%s352] sm:%s345]
      %355 = vst [vmem:[%s353] sm:%s345] %v354
    $region92: #{text_gru_forward.1} parent=86 // loop_footer
      %s351 = sadd.s32 1, %s347
    $region93: #{text_gru_forward.1} parent=86 // loop_footer_branch
      %346 = sbr.rel target = $region89
    $region94: #{text_gru_forward.1} parent=86 // loop_exit
      _
  $region87: #{text_gru_forward.1} parent=0 // pred_fallthru
    _
  // Predicated region
  $region110: #{text_gru_forward.1} parent=0 // pred_check
    _
  $region111: #{text_gru_forward.1} parent=0 // pred_check_branch
    %1399 = sbr.rel (0) target = $region113
  $region112: #{text_gru_forward.1} parent=0 // pred_region
    %1400 = vsyncadd %s336, 65536
  $region113: #{text_gru_forward.1} parent=0 // pred_fallthru
    _
  %v1401 = vld [vmem:[%s0] sm:$0xff]
  %v1402 = vld [vmem:[%s0 + $0x8] sm:$0xff]
  %v1403 = vld [vmem:[%s0 + $0x10] sm:$0xff]
  %v1404 = vld [vmem:[%s0 + $0x18] sm:$0xff]
  %v1405 = vld [vmem:[%s0 + $0x20] sm:$0xff]
  %v1406 = vld [vmem:[%s0 + $0x28] sm:$0xff]
  %v1407 = vld [vmem:[%s0 + $0x30] sm:$0xff]
  %v1408 = vld [vmem:[%s0 + $0x38] sm:$0xff]
  %v1409 = vld [vmem:[%s1] sm:$0xff]
  %v1410 = vld [vmem:[%s1 + $0x8] sm:$0xff]
  %v1411 = vld [vmem:[%s1 + $0x10] sm:$0xff]
  %v1412 = vld [vmem:[%s1 + $0x18] sm:$0xff]
  %v1413 = vld [vmem:[%s1 + $0x20] sm:$0xff]
  %v1414 = vld [vmem:[%s1 + $0x28] sm:$0xff]
  %v1415 = vld [vmem:[%s1 + $0x30] sm:$0xff]
  %v1416 = vld [vmem:[%s1 + $0x38] sm:$0xff]
  %v1417 = vld [vmem:[%s1 + $0x40] sm:$0xff]
  %v1418 = vld [vmem:[%s1 + $0x48] sm:$0xff]
  %v1419 = vld [vmem:[%s1 + $0x50] sm:$0xff]
  %v1420 = vld [vmem:[%s1 + $0x58] sm:$0xff]
  %v1421 = vld [vmem:[%s3] sm:$0x7]
  %v1423 = vlaneseq
  %v1424 = vshrl.u32 %v1423, 7
  %v1425 = vsub.s32 0, %v1424
  %v1426 = vrot.slane %v1421, %v1425
  %v1427 = vlaneseq
  %v1428 = vshrl.u32 %v1427, 7
  %v1429 = vsub.s32 1, %v1428
  %v1430 = vrot.slane %v1421, %v1429
  %v1431 = vlaneseq
  %v1432 = vshrl.u32 %v1431, 7
  %v1433 = vsub.s32 2, %v1432
  %v1434 = vrot.slane %v1421, %v1433
  %vm1438 = vcmask 261120
  %v1440 = vsel %vm1438, %v1401, 0
  %v1443 = vsel %vm1438, %v1402, 0
  %v1446 = vsel %vm1438, %v1403, 0
  %v1449 = vsel %vm1438, %v1404, 0
  %v1452 = vsel %vm1438, %v1405, 0
  %v1455 = vsel %vm1438, %v1406, 0
  %v1458 = vsel %vm1438, %v1407, 0
  %v1461 = vsel %vm1438, %v1408, 0
  %1463 = vmatprep.subr.mxu0 %v1410
  %1464 = vmatpush1.msra.mxu0 %v1409
  %1465 = vmatprep.subr.mxu0 %v1413
  %1466 = vmatpush1.msra.mxu0 %v1412
  %1467 = vmatprep.subr.mxu0 %v1416
  %1468 = vmatpush1.msra.mxu0 %v1415
  %1469 = vmatprep.subr.mxu0 %v1419
  %1470 = vmatpush1.msra.mxu0 %v1418
  %1471 = vmatprep.subr.mxu0 0.0
  %1472 = vmatpush1.msra.mxu0 0.0
  %1473 = vmatprep.subr.mxu0 0.0
  %1474 = vmatpush1.msra.mxu0 0.0
  %1475 = vmatprep.subr.mxu0 0.0
  %1476 = vmatpush1.msra.mxu0 0.0
  %1477 = vmatprep.subr.mxu0 0.0
  %1478 = vmatpush1.msra.mxu0 0.0
  %1479 = vmatprep.subr.mxu0 0.0
  %1480 = vmatpush1.msra.mxu0 0.0
  %1481 = vmatprep.subr.mxu0 0.0
  %1482 = vmatpush1.msra.mxu0 0.0
  %1483 = vmatprep.subr.mxu0 0.0
  %1484 = vmatpush1.msra.mxu0 0.0
  %1485 = vmatprep.subr.mxu0 0.0
  %1486 = vmatpush1.msra.mxu0 0.0
  %1487 = vmatprep.subr.mxu0 0.0
  %1488 = vmatpush1.msra.mxu0 0.0
  %1489 = vmatprep.subr.mxu0 0.0
  %1490 = vmatpush1.msra.mxu0 0.0
  %1491 = vmatprep.subr.mxu0 0.0
  %1492 = vmatpush1.msra.mxu0 0.0
  %1493 = vmatprep.subr.mxu0 0.0
  %1494 = vmatpush1.msra.mxu0 0.0
  %1495 = vmatprep.subr.mxu0 0.0
  %1496 = vmatpush1.msra.mxu0 0.0
  %1497 = vmatprep.subr.mxu0 0.0
  %1498 = vmatpush1.msra.mxu0 0.0
  %1499 = vmatprep.subr.mxu0 0.0
  %1500 = vmatpush1.msra.mxu0 0.0
  %1501 = vmatprep.subr.mxu0 0.0
  %1502 = vmatpush1.msra.mxu0 0.0
  %1503 = vmatprep.subr.mxu0 0.0
  %1504 = vmatpush1.msra.mxu0 0.0
  %1505 = vmatprep.subr.mxu0 0.0
  %1506 = vmatpush1.msra.mxu0 0.0
  %1507 = vmatprep.subr.mxu0 0.0
  %1508 = vmatpush1.msra.mxu0 0.0
  %1509 = vmatprep.subr.mxu0 0.0
  %1510 = vmatpush1.msra.mxu0 0.0
  %1511 = vmatprep.subr.mxu0 0.0
  %1512 = vmatpush1.msra.mxu0 0.0
  %1513 = vmatprep.subr.mxu0 0.0
  %1514 = vmatpush1.msra.mxu0 0.0
  %1515 = vmatprep.subr.mxu0 0.0
  %1516 = vmatpush1.msra.mxu0 0.0
  %1517 = vmatprep.subr.mxu0 0.0
  %1518 = vmatpush1.msra.mxu0 0.0
  %1519 = vmatprep.subr.mxu0 0.0
  %1520 = vmatpush1.msra.mxu0 0.0
  %1521 = vmatprep.subr.mxu0 0.0
  %1522 = vmatpush1.msra.mxu0 0.0
  %1523 = vmatprep.subr.mxu0 0.0
  %1524 = vmatpush1.msra.mxu0 0.0
  %1525 = vmatprep.subr.mxu0 0.0
  %1526 = vmatpush1.msra.mxu0 0.0
  %1527 = vmatprep.mubr.f32.mxu0 0.0
  %1528 = vmatmul.mubr.f32.gmra.mrb[0].mxu0 %v1440
  %v1529 = vpop.f32.mrb[0].mxu0
  %v1530 = vadd.f32 %v1426, %v1529
  %v1531 = vpop.f32.mrb[0].mxu0
  %v1532 = vadd.f32 %v1430, %v1531
  %1533 = vmatprep.mubr.f32.mxu0 0.0
  %1534 = vmatmul.mubr.f32.gmra.mrb[0].mxu0 %v1443
  %v1535 = vpop.f32.mrb[0].mxu0
  %v1536 = vadd.f32 %v1426, %v1535
  %v1537 = vpop.f32.mrb[0].mxu0
  %v1538 = vadd.f32 %v1430, %v1537
  %1539 = vmatprep.mubr.f32.mxu0 0.0
  %1540 = vmatmul.mubr.f32.gmra.mrb[0].mxu0 %v1446
  %v1541 = vpop.f32.mrb[0].mxu0
  %v1542 = vadd.f32 %v1426, %v1541
  %v1543 = vpop.f32.mrb[0].mxu0
  %v1544 = vadd.f32 %v1430, %v1543
  %1545 = vmatprep.mubr.f32.mxu0 0.0
  %1546 = vmatmul.mubr.f32.gmra.mrb[0].mxu0 %v1449
  %v1547 = vpop.f32.mrb[0].mxu0
  %v1548 = vadd.f32 %v1426, %v1547
  %v1549 = vpop.f32.mrb[0].mxu0
  %v1550 = vadd.f32 %v1430, %v1549
  %1551 = vmatprep.mubr.f32.mxu0 0.0
  %1552 = vmatmul.mubr.f32.gmra.mrb[0].mxu0 %v1452
  %v1553 = vpop.f32.mrb[0].mxu0
  %v1554 = vadd.f32 %v1426, %v1553
  %v1555 = vpop.f32.mrb[0].mxu0
  %v1556 = vadd.f32 %v1430, %v1555
  %1557 = vmatprep.mubr.f32.mxu0 0.0
  %1558 = vmatmul.mubr.f32.gmra.mrb[0].mxu0 %v1455
  %v1559 = vpop.f32.mrb[0].mxu0
  %v1560 = vadd.f32 %v1426, %v1559
  %v1561 = vpop.f32.mrb[0].mxu0
  %v1562 = vadd.f32 %v1430, %v1561
  %1563 = vmatprep.mubr.f32.mxu0 0.0
  %1564 = vmatmul.mubr.f32.gmra.mrb[0].mxu0 %v1458
  %v1565 = vpop.f32.mrb[0].mxu0
  %v1566 = vadd.f32 %v1426, %v1565
  %v1567 = vpop.f32.mrb[0].mxu0
  %v1568 = vadd.f32 %v1430, %v1567
  %1569 = vmatprep.mubr.f32.mxu0 0.0
  %1570 = vmatmul.mubr.f32.gmra.mrb[0].mxu0 %v1461
  %v1571 = vpop.f32.mrb[0].mxu0
  %v1572 = vadd.f32 %v1426, %v1571
  %v1573 = vpop.f32.mrb[0].mxu0
  %v1574 = vadd.f32 %v1430, %v1573
  %1575 = vdwg.mxu0
  %1576 = vmatprep.subr.mxu0 0.0
  %1577 = vmatpush1.msra.mxu0 %v1411
  %1578 = vmatprep.subr.mxu0 0.0
  %1579 = vmatpush1.msra.mxu0 %v1414
  %1580 = vmatprep.subr.mxu0 0.0
  %1581 = vmatpush1.msra.mxu0 %v1417
  %1582 = vmatprep.subr.mxu0 0.0
  %1583 = vmatpush1.msra.mxu0 %v1420
  %1584 = vmatprep.subr.mxu0 0.0
  %1585 = vmatpush1.msra.mxu0 0.0
  %1586 = vmatprep.subr.mxu0 0.0
  %1587 = vmatpush1.msra.mxu0 0.0
  %1588 = vmatprep.subr.mxu0 0.0
  %1589 = vmatpush1.msra.mxu0 0.0
  %1590 = vmatprep.subr.mxu0 0.0
  %1591 = vmatpush1.msra.mxu0 0.0
  %1592 = vmatprep.subr.mxu0 0.0
  %1593 = vmatpush1.msra.mxu0 0.0
  %1594 = vmatprep.subr.mxu0 0.0
  %1595 = vmatpush1.msra.mxu0 0.0
  %1596 = vmatprep.subr.mxu0 0.0
  %1597 = vmatpush1.msra.mxu0 0.0
  %1598 = vmatprep.subr.mxu0 0.0
  %1599 = vmatpush1.msra.mxu0 0.0
  %1600 = vmatprep.subr.mxu0 0.0
  %1601 = vmatpush1.msra.mxu0 0.0
  %1602 = vmatprep.subr.mxu0 0.0
  %1603 = vmatpush1.msra.mxu0 0.0
  %1604 = vmatprep.subr.mxu0 0.0
  %1605 = vmatpush1.msra.mxu0 0.0
  %1606 = vmatprep.subr.mxu0 0.0
  %1607 = vmatpush1.msra.mxu0 0.0
  %1608 = vmatprep.subr.mxu0 0.0
  %1609 = vmatpush1.msra.mxu0 0.0
  %1610 = vmatprep.subr.mxu0 0.0
  %1611 = vmatpush1.msra.mxu0 0.0
  %1612 = vmatprep.subr.mxu0 0.0
  %1613 = vmatpush1.msra.mxu0 0.0
  %1614 = vmatprep.subr.mxu0 0.0
  %1615 = vmatpush1.msra.mxu0 0.0
  %1616 = vmatprep.subr.mxu0 0.0
  %1617 = vmatpush1.msra.mxu0 0.0
  %1618 = vmatprep.subr.mxu0 0.0
  %1619 = vmatpush1.msra.mxu0 0.0
  %1620 = vmatprep.subr.mxu0 0.0
  %1621 = vmatpush1.msra.mxu0 0.0
  %1622 = vmatprep.subr.mxu0 0.0
  %1623 = vmatpush1.msra.mxu0 0.0
  %1624 = vmatprep.subr.mxu0 0.0
  %1625 = vmatpush1.msra.mxu0 0.0
  %1626 = vmatprep.subr.mxu0 0.0
  %1627 = vmatpush1.msra.mxu0 0.0
  %1628 = vmatprep.subr.mxu0 0.0
  %1629 = vmatpush1.msra.mxu0 0.0
  %1630 = vmatprep.subr.mxu0 0.0
  %1631 = vmatpush1.msra.mxu0 0.0
  %1632 = vmatprep.subr.mxu0 0.0
  %1633 = vmatpush1.msra.mxu0 0.0
  %1634 = vmatprep.subr.mxu0 0.0
  %1635 = vmatpush1.msra.mxu0 0.0
  %1636 = vmatprep.subr.mxu0 0.0
  %1637 = vmatpush1.msra.mxu0 0.0
  %1638 = vmatprep.subr.mxu0 0.0
  %1639 = vmatpush1.msra.mxu0 0.0
  %1640 = vmatprep.mubr.f32.mxu0 0.0
  %1641 = vmatmul.mubr.f32.gmra.mrb[0].mxu0 %v1440
  %v1642 = vpop.f32.mrb[0].mxu0
  %v1643 = vadd.f32 %v1434, %v1642
  %v1644 = vpop.f32.mrb[0].mxu0
  %1645 = vmatprep.mubr.f32.mxu0 0.0
  %1646 = vmatmul.mubr.f32.gmra.mrb[0].mxu0 %v1443
  %v1647 = vpop.f32.mrb[0].mxu0
  %v1648 = vadd.f32 %v1434, %v1647
  %v1649 = vpop.f32.mrb[0].mxu0
  %1650 = vmatprep.mubr.f32.mxu0 0.0
  %1651 = vmatmul.mubr.f32.gmra.mrb[0].mxu0 %v1446
  %v1652 = vpop.f32.mrb[0].mxu0
  %v1653 = vadd.f32 %v1434, %v1652
  %v1654 = vpop.f32.mrb[0].mxu0
  %1655 = vmatprep.mubr.f32.mxu0 0.0
  %1656 = vmatmul.mubr.f32.gmra.mrb[0].mxu0 %v1449
  %v1657 = vpop.f32.mrb[0].mxu0
  %v1658 = vadd.f32 %v1434, %v1657
  %v1659 = vpop.f32.mrb[0].mxu0
  %1660 = vmatprep.mubr.f32.mxu0 0.0
  %1661 = vmatmul.mubr.f32.gmra.mrb[0].mxu0 %v1452
  %v1662 = vpop.f32.mrb[0].mxu0
  %v1663 = vadd.f32 %v1434, %v1662
  %v1664 = vpop.f32.mrb[0].mxu0
  %1665 = vmatprep.mubr.f32.mxu0 0.0
  %1666 = vmatmul.mubr.f32.gmra.mrb[0].mxu0 %v1455
  %v1667 = vpop.f32.mrb[0].mxu0
  %v1668 = vadd.f32 %v1434, %v1667
  %v1669 = vpop.f32.mrb[0].mxu0
  %1670 = vmatprep.mubr.f32.mxu0 0.0
  %1671 = vmatmul.mubr.f32.gmra.mrb[0].mxu0 %v1458
  %v1672 = vpop.f32.mrb[0].mxu0
  %v1673 = vadd.f32 %v1434, %v1672
  %v1674 = vpop.f32.mrb[0].mxu0
  %1675 = vmatprep.mubr.f32.mxu0 0.0
  %1676 = vmatmul.mubr.f32.gmra.mrb[0].mxu0 %v1461
  %v1677 = vpop.f32.mrb[0].mxu0
  %v1678 = vadd.f32 %v1434, %v1677
  %v1679 = vpop.f32.mrb[0].mxu0
  %1680 = vdwg.mxu0
  %1681 = vst [vmem:[#allocation2] sm:$0xff] %v1530
  %1682 = vst [vmem:[#allocation2 + $0x8] sm:$0xff] %v1532
  %1683 = vst [vmem:[#allocation2 + $0x10] sm:$0xff] %v1643
  %1684 = vst [vmem:[#allocation2 + $0x18] sm:$0xff] %v1536
  %1685 = vst [vmem:[#allocation2 + $0x20] sm:$0xff] %v1538
  %1686 = vst [vmem:[#allocation2 + $0x28] sm:$0xff] %v1648
  %1687 = vst [vmem:[#allocation2 + $0x30] sm:$0xff] %v1542
  %1688 = vst [vmem:[#allocation2 + $0x38] sm:$0xff] %v1544
  %1689 = vst [vmem:[#allocation2 + $0x40] sm:$0xff] %v1653
  %1690 = vst [vmem:[#allocation2 + $0x48] sm:$0xff] %v1548
  %1691 = vst [vmem:[#allocation2 + $0x50] sm:$0xff] %v1550
  %1692 = vst [vmem:[#allocation2 + $0x58] sm:$0xff] %v1658
  %1693 = vst [vmem:[#allocation2 + $0x60] sm:$0xff] %v1554
  %1694 = vst [vmem:[#allocation2 + $0x68] sm:$0xff] %v1556
  %1695 = vst [vmem:[#allocation2 + $0x70] sm:$0xff] %v1663
  %1696 = vst [vmem:[#allocation2 + $0x78] sm:$0xff] %v1560
  %1697 = vst [vmem:[#allocation2 + $0x80] sm:$0xff] %v1562
  %1698 = vst [vmem:[#allocation2 + $0x88] sm:$0xff] %v1668
  %1699 = vst [vmem:[#allocation2 + $0x90] sm:$0xff] %v1566
  %1700 = vst [vmem:[#allocation2 + $0x98] sm:$0xff] %v1568
  %1701 = vst [vmem:[#allocation2 + $0xa0] sm:$0xff] %v1673
  %1702 = vst [vmem:[#allocation2 + $0xa8] sm:$0xff] %v1572
  %1703 = vst [vmem:[#allocation2 + $0xb0] sm:$0xff] %v1574
  %1704 = vst [vmem:[#allocation2 + $0xb8] sm:$0xff] %v1678
  %v1705 = vld [vmem:[%s2] sm:$0xff]
  %v1706 = vld [vmem:[%s2 + $0x8] sm:$0xff]
  %v1707 = vld [vmem:[%s2 + $0x10] sm:$0xff]
  %v1708 = vld [vmem:[%s2 + $0x18] sm:$0xff]
  %v1709 = vld [vmem:[%s2 + $0x20] sm:$0xff]
  %v1710 = vld [vmem:[%s2 + $0x28] sm:$0xff]
  %v1711 = vld [vmem:[%s2 + $0x30] sm:$0xff]
  %v1712 = vld [vmem:[%s2 + $0x38] sm:$0xff]
  %v1713 = vld [vmem:[%s2 + $0x40] sm:$0xff]
  %v1714 = vld [vmem:[%s2 + $0x48] sm:$0xff]
  %v1715 = vld [vmem:[%s2 + $0x50] sm:$0xff]
  %v1716 = vld [vmem:[%s2 + $0x58] sm:$0xff]
  %v1717 = vld [vmem:[%s2 + $0x60] sm:$0xff]
  %v1718 = vld [vmem:[%s2 + $0x68] sm:$0xff]
  %v1719 = vld [vmem:[%s2 + $0x70] sm:$0xff]
  %v1720 = vld [vmem:[%s2 + $0x78] sm:$0xff]
  %v1721 = vld [vmem:[%s2 + $0x80] sm:$0xff]
  %v1722 = vld [vmem:[%s2 + $0x88] sm:$0xff]
  %v1723 = vld [vmem:[%s2 + $0x90] sm:$0xff]
  %v1724 = vld [vmem:[%s2 + $0x98] sm:$0xff]
  %v1725 = vld [vmem:[%s2 + $0xa0] sm:$0xff]
  %v1726 = vld [vmem:[%s2 + $0xa8] sm:$0xff]
  %v1727 = vld [vmem:[%s2 + $0xb0] sm:$0xff]
  %v1728 = vld [vmem:[%s2 + $0xb8] sm:$0xff]
  %v1729 = vld [vmem:[%s2 + $0xc0] sm:$0xff]
  %v1730 = vld [vmem:[%s2 + $0xc8] sm:$0xff]
  %v1731 = vld [vmem:[%s2 + $0xd0] sm:$0xff]
  %v1732 = vld [vmem:[%s2 + $0xd8] sm:$0xff]
  %v1733 = vld [vmem:[%s2 + $0xe0] sm:$0xff]
  %v1734 = vld [vmem:[%s2 + $0xe8] sm:$0xff]
  %v1735 = vld [vmem:[%s2 + $0xf0] sm:$0xff]
  %v1736 = vld [vmem:[%s2 + $0xf8] sm:$0xff]
  %v1737 = vld [vmem:[%s2 + $0x100] sm:$0xff]
  %v1738 = vld [vmem:[%s2 + $0x108] sm:$0xff]
  %v1739 = vld [vmem:[%s2 + $0x110] sm:$0xff]
  %v1740 = vld [vmem:[%s2 + $0x118] sm:$0xff]
  %v1741 = vld [vmem:[%s2 + $0x120] sm:$0xff]
  %v1742 = vld [vmem:[%s2 + $0x128] sm:$0xff]
  %v1743 = vld [vmem:[%s2 + $0x130] sm:$0xff]
  %v1744 = vld [vmem:[%s2 + $0x138] sm:$0xff]
  %v1745 = vld [vmem:[%s2 + $0x140] sm:$0xff]
  %v1746 = vld [vmem:[%s2 + $0x148] sm:$0xff]
  %v1747 = vld [vmem:[%s2 + $0x150] sm:$0xff]
  %v1748 = vld [vmem:[%s2 + $0x158] sm:$0xff]
  %v1749 = vld [vmem:[%s2 + $0x160] sm:$0xff]
  %v1750 = vld [vmem:[%s2 + $0x168] sm:$0xff]
  %v1751 = vld [vmem:[%s2 + $0x170] sm:$0xff]
  %v1752 = vld [vmem:[%s2 + $0x178] sm:$0xff]
  %v1753 = vld [vmem:[%s4] sm:$0x1]
  %v1754 = vld [vmem:[#allocation2] sm:$0xff]
  %v1755 = vld [vmem:[#allocation2 + $0x8] sm:$0xff]
  %v1756 = vld [vmem:[#allocation2 + $0x10] sm:$0xff]
  %v1757 = vxor.u32 %v1754, 2147483648
  %v1758 = vmul.f32 %v1757, 1.442695
  %v1759 = vpow.pop %v1758
  %v1760 = vadd.f32 %v1759, 1.0
  %v1761 = vrcp.pop %v1760
  %v1762 = vmul.f32 1.0, %v1761
  %v1763 = vxor.u32 %v1755, 2147483648
  %v1764 = vmul.f32 %v1763, 1.442695
  %v1765 = vpow.pop %v1764
  %v1766 = vadd.f32 %v1765, 1.0
  %v1767 = vrcp.pop %v1766
  %v1768 = vmul.f32 1.0, %v1767
  %v1770 = vlaneseq
  %v1771 = vshrl.u32 %v1770, 7
  %v1772 = vsub.s32 0, %v1771
  %v1773 = vrot.slane %v1753, %v1772
  %v1775 = vmul.f32 %v1762, %v1773
  %v1776 = vadd.f32 %v1756, %v1775
  %v1777 = vtanh.pop %v1776
  %v1778 = vsub.f32 1.0, %v1768
  %v1779 = vmul.f32 %v1778, %v1777
  %v1780 = vld [vmem:[#allocation2 + $0x18] sm:$0xff]
  %v1781 = vld [vmem:[#allocation2 + $0x20] sm:$0xff]
  %v1782 = vld [vmem:[#allocation2 + $0x28] sm:$0xff]
  %1783 = vmatprep.subr.mxu0 %v1706
  %1784 = vmatpush1.msra.mxu0 %v1705
  %1785 = vmatprep.subr.mxu0 %v1709
  %1786 = vmatpush1.msra.mxu0 %v1708
  %1787 = vmatprep.subr.mxu0 %v1712
  %1788 = vmatpush1.msra.mxu0 %v1711
  %1789 = vmatprep.subr.mxu0 %v1715
  %1790 = vmatpush1.msra.mxu0 %v1714
  %1791 = vmatprep.subr.mxu0 %v1718
  %1792 = vmatpush1.msra.mxu0 %v1717
  %1793 = vmatprep.subr.mxu0 %v1721
  %1794 = vmatpush1.msra.mxu0 %v1720
  %1795 = vmatprep.subr.mxu0 %v1724
  %1796 = vmatpush1.msra.mxu0 %v1723
  %1797 = vmatprep.subr.mxu0 %v1727
  %1798 = vmatpush1.msra.mxu0 %v1726
  %1799 = vmatprep.subr.mxu0 %v1730
  %1800 = vmatpush1.msra.mxu0 %v1729
  %1801 = vmatprep.subr.mxu0 %v1733
  %1802 = vmatpush1.msra.mxu0 %v1732
  %1803 = vmatprep.subr.mxu0 %v1736
  %1804 = vmatpush1.msra.mxu0 %v1735
  %1805 = vmatprep.subr.mxu0 %v1739
  %1806 = vmatpush1.msra.mxu0 %v1738
  %1807 = vmatprep.subr.mxu0 %v1742
  %1808 = vmatpush1.msra.mxu0 %v1741
  %1809 = vmatprep.subr.mxu0 %v1745
  %1810 = vmatpush1.msra.mxu0 %v1744
  %1811 = vmatprep.subr.mxu0 %v1748
  %1812 = vmatpush1.msra.mxu0 %v1747
  %1813 = vmatprep.subr.mxu0 %v1751
  %1814 = vmatpush1.msra.mxu0 %v1750
  %1815 = vmatprep.subr.mxu0 0.0
  %1816 = vmatpush1.msra.mxu0 0.0
  %1817 = vmatprep.subr.mxu0 0.0
  %1818 = vmatpush1.msra.mxu0 0.0
  %1819 = vmatprep.subr.mxu0 0.0
  %1820 = vmatpush1.msra.mxu0 0.0
  %1821 = vmatprep.subr.mxu0 0.0
  %1822 = vmatpush1.msra.mxu0 0.0
  %1823 = vmatprep.subr.mxu0 0.0
  %1824 = vmatpush1.msra.mxu0 0.0
  %1825 = vmatprep.subr.mxu0 0.0
  %1826 = vmatpush1.msra.mxu0 0.0
  %1827 = vmatprep.subr.mxu0 0.0
  %1828 = vmatpush1.msra.mxu0 0.0
  %1829 = vmatprep.subr.mxu0 0.0
  %1830 = vmatpush1.msra.mxu0 0.0
  %1831 = vmatprep.subr.mxu0 0.0
  %1832 = vmatpush1.msra.mxu0 0.0
  %1833 = vmatprep.subr.mxu0 0.0
  %1834 = vmatpush1.msra.mxu0 0.0
  %1835 = vmatprep.subr.mxu0 0.0
  %1836 = vmatpush1.msra.mxu0 0.0
  %1837 = vmatprep.subr.mxu0 0.0
  %1838 = vmatpush1.msra.mxu0 0.0
  %1839 = vmatprep.subr.mxu0 0.0
  %1840 = vmatpush1.msra.mxu0 0.0
  %1841 = vmatprep.subr.mxu0 0.0
  %1842 = vmatpush1.msra.mxu0 0.0
  %1843 = vmatprep.subr.mxu0 0.0
  %1844 = vmatpush1.msra.mxu0 0.0
  %1845 = vmatprep.subr.mxu0 0.0
  %1846 = vmatpush1.msra.mxu0 0.0
  %1847 = vmatprep.mubr.f32.mxu0 0.0
  %1848 = vmatmul.mubr.f32.gmra.mrb[0].mxu0 %v1779
  %v1849 = vpop.f32.mrb[0].mxu0
  %v1850 = vadd.f32 0.0, %v1849
  %v1851 = vpop.f32.mrb[0].mxu0
  %v1852 = vadd.f32 0.0, %v1851
  %1853 = vdwg.mxu0
  %1854 = vmatprep.subr.mxu0 0.0
  %1855 = vmatpush1.msra.mxu0 %v1707
  %1856 = vmatprep.subr.mxu0 0.0
  %1857 = vmatpush1.msra.mxu0 %v1710
  %1858 = vmatprep.subr.mxu0 0.0
  %1859 = vmatpush1.msra.mxu0 %v1713
  %1860 = vmatprep.subr.mxu0 0.0
  %1861 = vmatpush1.msra.mxu0 %v1716
  %1862 = vmatprep.subr.mxu0 0.0
  %1863 = vmatpush1.msra.mxu0 %v1719
  %1864 = vmatprep.subr.mxu0 0.0
  %1865 = vmatpush1.msra.mxu0 %v1722
  %1866 = vmatprep.subr.mxu0 0.0
  %1867 = vmatpush1.msra.mxu0 %v1725
  %1868 = vmatprep.subr.mxu0 0.0
  %1869 = vmatpush1.msra.mxu0 %v1728
  %1870 = vmatprep.subr.mxu0 0.0
  %1871 = vmatpush1.msra.mxu0 %v1731
  %1872 = vmatprep.subr.mxu0 0.0
  %1873 = vmatpush1.msra.mxu0 %v1734
  %1874 = vmatprep.subr.mxu0 0.0
  %1875 = vmatpush1.msra.mxu0 %v1737
  %1876 = vmatprep.subr.mxu0 0.0
  %1877 = vmatpush1.msra.mxu0 %v1740
  %1878 = vmatprep.subr.mxu0 0.0
  %1879 = vmatpush1.msra.mxu0 %v1743
  %1880 = vmatprep.subr.mxu0 0.0
  %1881 = vmatpush1.msra.mxu0 %v1746
  %1882 = vmatprep.subr.mxu0 0.0
  %1883 = vmatpush1.msra.mxu0 %v1749
  %1884 = vmatprep.subr.mxu0 0.0
  %1885 = vmatpush1.msra.mxu0 %v1752
  %1886 = vmatprep.subr.mxu0 0.0
  %1887 = vmatpush1.msra.mxu0 0.0
  %1888 = vmatprep.subr.mxu0 0.0
  %1889 = vmatpush1.msra.mxu0 0.0
  %1890 = vmatprep.subr.mxu0 0.0
  %1891 = vmatpush1.msra.mxu0 0.0
  %1892 = vmatprep.subr.mxu0 0.0
  %1893 = vmatpush1.msra.mxu0 0.0
  %1894 = vmatprep.subr.mxu0 0.0
  %1895 = vmatpush1.msra.mxu0 0.0
  %1896 = vmatprep.subr.mxu0 0.0
  %1897 = vmatpush1.msra.mxu0 0.0
  %1898 = vmatprep.subr.mxu0 0.0
  %1899 = vmatpush1.msra.mxu0 0.0
  %1900 = vmatprep.subr.mxu0 0.0
  %1901 = vmatpush1.msra.mxu0 0.0
  %1902 = vmatprep.subr.mxu0 0.0
  %1903 = vmatpush1.msra.mxu0 0.0
  %1904 = vmatprep.subr.mxu0 0.0
  %1905 = vmatpush1.msra.mxu0 0.0
  %1906 = vmatprep.subr.mxu0 0.0
  %1907 = vmatpush1.msra.mxu0 0.0
  %1908 = vmatprep.subr.mxu0 0.0
  %1909 = vmatpush1.msra.mxu0 0.0
  %1910 = vmatprep.subr.mxu0 0.0
  %1911 = vmatpush1.msra.mxu0 0.0
  %1912 = vmatprep.subr.mxu0 0.0
  %1913 = vmatpush1.msra.mxu0 0.0
  %1914 = vmatprep.subr.mxu0 0.0
  %1915 = vmatpush1.msra.mxu0 0.0
  %1916 = vmatprep.subr.mxu0 0.0
  %1917 = vmatpush1.msra.mxu0 0.0
  %1918 = vmatprep.mubr.f32.mxu0 0.0
  %1919 = vmatmul.mubr.f32.gmra.mrb[0].mxu0 %v1779
  %v1920 = vpop.f32.mrb[0].mxu0
  %v1921 = vadd.f32 0.0, %v1920
  %v1922 = vpop.f32.mrb[0].mxu0
  %1923 = vdwg.mxu0
  %v1924 = vadd.f32 %v1780, %v1850
  %v1925 = vadd.f32 %v1781, %v1852
  %v1926 = vxor.u32 %v1924, 2147483648
  %v1927 = vxor.u32 %v1925, 2147483648
  %v1928 = vmul.f32 %v1926, 1.442695
  %v1929 = vpow.pop %v1928
  %v1930 = vmul.f32 %v1927, 1.442695
  %v1931 = vpow.pop %v1930
  %v1932 = vadd.f32 %v1929, 1.0
  %v1933 = vadd.f32 %v1931, 1.0
  %v1934 = vrcp.pop %v1932
  %v1935 = vmul.f32 1.0, %v1934
  %v1936 = vrcp.pop %v1933
  %v1937 = vmul.f32 1.0, %v1936
  %v1938 = vadd.f32 %v1921, %v1773
  %v1939 = vmul.f32 %v1935, %v1938
  %v1940 = vadd.f32 %v1782, %v1939
  %v1941 = vtanh.pop %v1940
  %v1942 = vsub.f32 1.0, %v1937
  %v1943 = vmul.f32 %v1942, %v1941
  %v1944 = vmul.f32 %v1937, %v1779
  %v1945 = vadd.f32 %v1943, %v1944
  %v1946 = vld [vmem:[#allocation2 + $0x30] sm:$0xff]
  %v1947 = vld [vmem:[#allocation2 + $0x38] sm:$0xff]
  %v1948 = vld [vmem:[#allocation2 + $0x40] sm:$0xff]
  %1949 = vmatprep.subr.mxu0 %v1706
  %1950 = vmatpush1.msra.mxu0 %v1705
  %1951 = vmatprep.subr.mxu0 %v1709
  %1952 = vmatpush1.msra.mxu0 %v1708
  %1953 = vmatprep.subr.mxu0 %v1712
  %1954 = vmatpush1.msra.mxu0 %v1711
  %1955 = vmatprep.subr.mxu0 %v1715
  %1956 = vmatpush1.msra.mxu0 %v1714
  %1957 = vmatprep.subr.mxu0 %v1718
  %1958 = vmatpush1.msra.mxu0 %v1717
  %1959 = vmatprep.subr.mxu0 %v1721
  %1960 = vmatpush1.msra.mxu0 %v1720
  %1961 = vmatprep.subr.mxu0 %v1724
  %1962 = vmatpush1.msra.mxu0 %v1723
  %1963 = vmatprep.subr.mxu0 %v1727
  %1964 = vmatpush1.msra.mxu0 %v1726
  %1965 = vmatprep.subr.mxu0 %v1730
  %1966 = vmatpush1.msra.mxu0 %v1729
  %1967 = vmatprep.subr.mxu0 %v1733
  %1968 = vmatpush1.msra.mxu0 %v1732
  %1969 = vmatprep.subr.mxu0 %v1736
  %1970 = vmatpush1.msra.mxu0 %v1735
  %1971 = vmatprep.subr.mxu0 %v1739
  %1972 = vmatpush1.msra.mxu0 %v1738
  %1973 = vmatprep.subr.mxu0 %v1742
  %1974 = vmatpush1.msra.mxu0 %v1741
  %1975 = vmatprep.subr.mxu0 %v1745
  %1976 = vmatpush1.msra.mxu0 %v1744
  %1977 = vmatprep.subr.mxu0 %v1748
  %1978 = vmatpush1.msra.mxu0 %v1747
  %1979 = vmatprep.subr.mxu0 %v1751
  %1980 = vmatpush1.msra.mxu0 %v1750
  %1981 = vmatprep.subr.mxu0 0.0
  %1982 = vmatpush1.msra.mxu0 0.0
  %1983 = vmatprep.subr.mxu0 0.0
  %1984 = vmatpush1.msra.mxu0 0.0
  %1985 = vmatprep.subr.mxu0 0.0
  %1986 = vmatpush1.msra.mxu0 0.0
  %1987 = vmatprep.subr.mxu0 0.0
  %1988 = vmatpush1.msra.mxu0 0.0
  %1989 = vmatprep.subr.mxu0 0.0
  %1990 = vmatpush1.msra.mxu0 0.0
  %1991 = vmatprep.subr.mxu0 0.0
  %1992 = vmatpush1.msra.mxu0 0.0
  %1993 = vmatprep.subr.mxu0 0.0
  %1994 = vmatpush1.msra.mxu0 0.0
  %1995 = vmatprep.subr.mxu0 0.0
  %1996 = vmatpush1.msra.mxu0 0.0
  %1997 = vmatprep.subr.mxu0 0.0
  %1998 = vmatpush1.msra.mxu0 0.0
  %1999 = vmatprep.subr.mxu0 0.0
  %2000 = vmatpush1.msra.mxu0 0.0
  %2001 = vmatprep.subr.mxu0 0.0
  %2002 = vmatpush1.msra.mxu0 0.0
  %2003 = vmatprep.subr.mxu0 0.0
  %2004 = vmatpush1.msra.mxu0 0.0
  %2005 = vmatprep.subr.mxu0 0.0
  %2006 = vmatpush1.msra.mxu0 0.0
  %2007 = vmatprep.subr.mxu0 0.0
  %2008 = vmatpush1.msra.mxu0 0.0
  %2009 = vmatprep.subr.mxu0 0.0
  %2010 = vmatpush1.msra.mxu0 0.0
  %2011 = vmatprep.subr.mxu0 0.0
  %2012 = vmatpush1.msra.mxu0 0.0
  %2013 = vmatprep.mubr.f32.mxu0 0.0
  %2014 = vmatmul.mubr.f32.gmra.mrb[0].mxu0 %v1945
  %v2015 = vpop.f32.mrb[0].mxu0
  %v2016 = vadd.f32 0.0, %v2015
  %v2017 = vpop.f32.mrb[0].mxu0
  %v2018 = vadd.f32 0.0, %v2017
  %2019 = vdwg.mxu0
  %2020 = vmatprep.subr.mxu0 0.0
  %2021 = vmatpush1.msra.mxu0 %v1707
  %2022 = vmatprep.subr.mxu0 0.0
  %2023 = vmatpush1.msra.mxu0 %v1710
  %2024 = vmatprep.subr.mxu0 0.0
  %2025 = vmatpush1.msra.mxu0 %v1713
  %2026 = vmatprep.subr.mxu0 0.0
  %2027 = vmatpush1.msra.mxu0 %v1716
  %2028 = vmatprep.subr.mxu0 0.0
  %2029 = vmatpush1.msra.mxu0 %v1719
  %2030 = vmatprep.subr.mxu0 0.0
  %2031 = vmatpush1.msra.mxu0 %v1722
  %2032 = vmatprep.subr.mxu0 0.0
  %2033 = vmatpush1.msra.mxu0 %v1725
  %2034 = vmatprep.subr.mxu0 0.0
  %2035 = vmatpush1.msra.mxu0 %v1728
  %2036 = vmatprep.subr.mxu0 0.0
  %2037 = vmatpush1.msra.mxu0 %v1731
  %2038 = vmatprep.subr.mxu0 0.0
  %2039 = vmatpush1.msra.mxu0 %v1734
  %2040 = vmatprep.subr.mxu0 0.0
  %2041 = vmatpush1.msra.mxu0 %v1737
  %2042 = vmatprep.subr.mxu0 0.0
  %2043 = vmatpush1.msra.mxu0 %v1740
  %2044 = vmatprep.subr.mxu0 0.0
  %2045 = vmatpush1.msra.mxu0 %v1743
  %2046 = vmatprep.subr.mxu0 0.0
  %2047 = vmatpush1.msra.mxu0 %v1746
  %2048 = vmatprep.subr.mxu0 0.0
  %2049 = vmatpush1.msra.mxu0 %v1749
  %2050 = vmatprep.subr.mxu0 0.0
  %2051 = vmatpush1.msra.mxu0 %v1752
  %2052 = vmatprep.subr.mxu0 0.0
  %2053 = vmatpush1.msra.mxu0 0.0
  %2054 = vmatprep.subr.mxu0 0.0
  %2055 = vmatpush1.msra.mxu0 0.0
  %2056 = vmatprep.subr.mxu0 0.0
  %2057 = vmatpush1.msra.mxu0 0.0
  %2058 = vmatprep.subr.mxu0 0.0
  %2059 = vmatpush1.msra.mxu0 0.0
  %2060 = vmatprep.subr.mxu0 0.0
  %2061 = vmatpush1.msra.mxu0 0.0
  %2062 = vmatprep.subr.mxu0 0.0
  %2063 = vmatpush1.msra.mxu0 0.0
  %2064 = vmatprep.subr.mxu0 0.0
  %2065 = vmatpush1.msra.mxu0 0.0
  %2066 = vmatprep.subr.mxu0 0.0
  %2067 = vmatpush1.msra.mxu0 0.0
  %2068 = vmatprep.subr.mxu0 0.0
  %2069 = vmatpush1.msra.mxu0 0.0
  %2070 = vmatprep.subr.mxu0 0.0
  %2071 = vmatpush1.msra.mxu0 0.0
  %2072 = vmatprep.subr.mxu0 0.0
  %2073 = vmatpush1.msra.mxu0 0.0
  %2074 = vmatprep.subr.mxu0 0.0
  %2075 = vmatpush1.msra.mxu0 0.0
  %2076 = vmatprep.subr.mxu0 0.0
  %2077 = vmatpush1.msra.mxu0 0.0
  %2078 = vmatprep.subr.mxu0 0.0
  %2079 = vmatpush1.msra.mxu0 0.0
  %2080 = vmatprep.subr.mxu0 0.0
  %2081 = vmatpush1.msra.mxu0 0.0
  %2082 = vmatprep.subr.mxu0 0.0
  %2083 = vmatpush1.msra.mxu0 0.0
  %2084 = vmatprep.mubr.f32.mxu0 0.0
  %2085 = vmatmul.mubr.f32.gmra.mrb[0].mxu0 %v1945
  %v2086 = vpop.f32.mrb[0].mxu0
  %v2087 = vadd.f32 0.0, %v2086
  %v2088 = vpop.f32.mrb[0].mxu0
  %2089 = vdwg.mxu0
  %v2090 = vadd.f32 %v1946, %v2016
  %v2091 = vadd.f32 %v1947, %v2018
  %v2092 = vxor.u32 %v2090, 2147483648
  %v2093 = vxor.u32 %v2091, 2147483648
  %v2094 = vmul.f32 %v2092, 1.442695
  %v2095 = vpow.pop %v2094
  %v2096 = vmul.f32 %v2093, 1.442695
  %v2097 = vpow.pop %v2096
  %v2098 = vadd.f32 %v2095, 1.0
  %v2099 = vadd.f32 %v2097, 1.0
  %v2100 = vrcp.pop %v2098
  %v2101 = vmul.f32 1.0, %v2100
  %v2102 = vrcp.pop %v2099
  %v2103 = vmul.f32 1.0, %v2102
  %v2104 = vadd.f32 %v2087, %v1773
  %v2105 = vmul.f32 %v2101, %v2104
  %v2106 = vadd.f32 %v1948, %v2105
  %v2107 = vtanh.pop %v2106
  %v2108 = vsub.f32 1.0, %v2103
  %v2109 = vmul.f32 %v2108, %v2107
  %v2110 = vmul.f32 %v2103, %v1945
  %v2111 = vadd.f32 %v2109, %v2110
  %v2112 = vld [vmem:[#allocation2 + $0x48] sm:$0xff]
  %v2113 = vld [vmem:[#allocation2 + $0x50] sm:$0xff]
  %v2114 = vld [vmem:[#allocation2 + $0x58] sm:$0xff]
  %2115 = vmatprep.subr.mxu0 %v1706
  %2116 = vmatpush1.msra.mxu0 %v1705
  %2117 = vmatprep.subr.mxu0 %v1709
  %2118 = vmatpush1.msra.mxu0 %v1708
  %2119 = vmatprep.subr.mxu0 %v1712
  %2120 = vmatpush1.msra.mxu0 %v1711
  %2121 = vmatprep.subr.mxu0 %v1715
  %2122 = vmatpush1.msra.mxu0 %v1714
  %2123 = vmatprep.subr.mxu0 %v1718
  %2124 = vmatpush1.msra.mxu0 %v1717
  %2125 = vmatprep.subr.mxu0 %v1721
  %2126 = vmatpush1.msra.mxu0 %v1720
  %2127 = vmatprep.subr.mxu0 %v1724
  %2128 = vmatpush1.msra.mxu0 %v1723
  %2129 = vmatprep.subr.mxu0 %v1727
  %2130 = vmatpush1.msra.mxu0 %v1726
  %2131 = vmatprep.subr.mxu0 %v1730
  %2132 = vmatpush1.msra.mxu0 %v1729
  %2133 = vmatprep.subr.mxu0 %v1733
  %2134 = vmatpush1.msra.mxu0 %v1732
  %2135 = vmatprep.subr.mxu0 %v1736
  %2136 = vmatpush1.msra.mxu0 %v1735
  %2137 = vmatprep.subr.mxu0 %v1739
  %2138 = vmatpush1.msra.mxu0 %v1738
  %2139 = vmatprep.subr.mxu0 %v1742
  %2140 = vmatpush1.msra.mxu0 %v1741
  %2141 = vmatprep.subr.mxu0 %v1745
  %2142 = vmatpush1.msra.mxu0 %v1744
  %2143 = vmatprep.subr.mxu0 %v1748
  %2144 = vmatpush1.msra.mxu0 %v1747
  %2145 = vmatprep.subr.mxu0 %v1751
  %2146 = vmatpush1.msra.mxu0 %v1750
  %2147 = vmatprep.subr.mxu0 0.0
  %2148 = vmatpush1.msra.mxu0 0.0
  %2149 = vmatprep.subr.mxu0 0.0
  %2150 = vmatpush1.msra.mxu0 0.0
  %2151 = vmatprep.subr.mxu0 0.0
  %2152 = vmatpush1.msra.mxu0 0.0
  %2153 = vmatprep.subr.mxu0 0.0
  %2154 = vmatpush1.msra.mxu0 0.0
  %2155 = vmatprep.subr.mxu0 0.0
  %2156 = vmatpush1.msra.mxu0 0.0
  %2157 = vmatprep.subr.mxu0 0.0
  %2158 = vmatpush1.msra.mxu0 0.0
  %2159 = vmatprep.subr.mxu0 0.0
  %2160 = vmatpush1.msra.mxu0 0.0
  %2161 = vmatprep.subr.mxu0 0.0
  %2162 = vmatpush1.msra.mxu0 0.0
  %2163 = vmatprep.subr.mxu0 0.0
  %2164 = vmatpush1.msra.mxu0 0.0
  %2165 = vmatprep.subr.mxu0 0.0
  %2166 = vmatpush1.msra.mxu0 0.0
  %2167 = vmatprep.subr.mxu0 0.0
  %2168 = vmatpush1.msra.mxu0 0.0
  %2169 = vmatprep.subr.mxu0 0.0
  %2170 = vmatpush1.msra.mxu0 0.0
  %2171 = vmatprep.subr.mxu0 0.0
  %2172 = vmatpush1.msra.mxu0 0.0
  %2173 = vmatprep.subr.mxu0 0.0
  %2174 = vmatpush1.msra.mxu0 0.0
  %2175 = vmatprep.subr.mxu0 0.0
  %2176 = vmatpush1.msra.mxu0 0.0
  %2177 = vmatprep.subr.mxu0 0.0
  %2178 = vmatpush1.msra.mxu0 0.0
  %2179 = vmatprep.mubr.f32.mxu0 0.0
  %2180 = vmatmul.mubr.f32.gmra.mrb[0].mxu0 %v2111
  %v2181 = vpop.f32.mrb[0].mxu0
  %v2182 = vadd.f32 0.0, %v2181
  %v2183 = vpop.f32.mrb[0].mxu0
  %v2184 = vadd.f32 0.0, %v2183
  %2185 = vdwg.mxu0
  %2186 = vmatprep.subr.mxu0 0.0
  %2187 = vmatpush1.msra.mxu0 %v1707
  %2188 = vmatprep.subr.mxu0 0.0
  %2189 = vmatpush1.msra.mxu0 %v1710
  %2190 = vmatprep.subr.mxu0 0.0
  %2191 = vmatpush1.msra.mxu0 %v1713
  %2192 = vmatprep.subr.mxu0 0.0
  %2193 = vmatpush1.msra.mxu0 %v1716
  %2194 = vmatprep.subr.mxu0 0.0
  %2195 = vmatpush1.msra.mxu0 %v1719
  %2196 = vmatprep.subr.mxu0 0.0
  %2197 = vmatpush1.msra.mxu0 %v1722
  %2198 = vmatprep.subr.mxu0 0.0
  %2199 = vmatpush1.msra.mxu0 %v1725
  %2200 = vmatprep.subr.mxu0 0.0
  %2201 = vmatpush1.msra.mxu0 %v1728
  %2202 = vmatprep.subr.mxu0 0.0
  %2203 = vmatpush1.msra.mxu0 %v1731
  %2204 = vmatprep.subr.mxu0 0.0
  %2205 = vmatpush1.msra.mxu0 %v1734
  %2206 = vmatprep.subr.mxu0 0.0
  %2207 = vmatpush1.msra.mxu0 %v1737
  %2208 = vmatprep.subr.mxu0 0.0
  %2209 = vmatpush1.msra.mxu0 %v1740
  %2210 = vmatprep.subr.mxu0 0.0
  %2211 = vmatpush1.msra.mxu0 %v1743
  %2212 = vmatprep.subr.mxu0 0.0
  %2213 = vmatpush1.msra.mxu0 %v1746
  %2214 = vmatprep.subr.mxu0 0.0
  %2215 = vmatpush1.msra.mxu0 %v1749
  %2216 = vmatprep.subr.mxu0 0.0
  %2217 = vmatpush1.msra.mxu0 %v1752
  %2218 = vmatprep.subr.mxu0 0.0
  %2219 = vmatpush1.msra.mxu0 0.0
  %2220 = vmatprep.subr.mxu0 0.0
  %2221 = vmatpush1.msra.mxu0 0.0
  %2222 = vmatprep.subr.mxu0 0.0
  %2223 = vmatpush1.msra.mxu0 0.0
  %2224 = vmatprep.subr.mxu0 0.0
  %2225 = vmatpush1.msra.mxu0 0.0
  %2226 = vmatprep.subr.mxu0 0.0
  %2227 = vmatpush1.msra.mxu0 0.0
  %2228 = vmatprep.subr.mxu0 0.0
  %2229 = vmatpush1.msra.mxu0 0.0
  %2230 = vmatprep.subr.mxu0 0.0
  %2231 = vmatpush1.msra.mxu0 0.0
  %2232 = vmatprep.subr.mxu0 0.0
  %2233 = vmatpush1.msra.mxu0 0.0
  %2234 = vmatprep.subr.mxu0 0.0
  %2235 = vmatpush1.msra.mxu0 0.0
  %2236 = vmatprep.subr.mxu0 0.0
  %2237 = vmatpush1.msra.mxu0 0.0
  %2238 = vmatprep.subr.mxu0 0.0
  %2239 = vmatpush1.msra.mxu0 0.0
  %2240 = vmatprep.subr.mxu0 0.0
  %2241 = vmatpush1.msra.mxu0 0.0
  %2242 = vmatprep.subr.mxu0 0.0
  %2243 = vmatpush1.msra.mxu0 0.0
  %2244 = vmatprep.subr.mxu0 0.0
  %2245 = vmatpush1.msra.mxu0 0.0
  %2246 = vmatprep.subr.mxu0 0.0
  %2247 = vmatpush1.msra.mxu0 0.0
  %2248 = vmatprep.subr.mxu0 0.0
  %2249 = vmatpush1.msra.mxu0 0.0
  %2250 = vmatprep.mubr.f32.mxu0 0.0
  %2251 = vmatmul.mubr.f32.gmra.mrb[0].mxu0 %v2111
  %v2252 = vpop.f32.mrb[0].mxu0
  %v2253 = vadd.f32 0.0, %v2252
  %v2254 = vpop.f32.mrb[0].mxu0
  %2255 = vdwg.mxu0
  %v2256 = vadd.f32 %v2112, %v2182
  %v2257 = vadd.f32 %v2113, %v2184
  %v2258 = vxor.u32 %v2256, 2147483648
  %v2259 = vxor.u32 %v2257, 2147483648
  %v2260 = vmul.f32 %v2258, 1.442695
  %v2261 = vpow.pop %v2260
  %v2262 = vmul.f32 %v2259, 1.442695
  %v2263 = vpow.pop %v2262
  %v2264 = vadd.f32 %v2261, 1.0
  %v2265 = vadd.f32 %v2263, 1.0
  %v2266 = vrcp.pop %v2264
  %v2267 = vmul.f32 1.0, %v2266
  %v2268 = vrcp.pop %v2265
  %v2269 = vmul.f32 1.0, %v2268
  %v2270 = vadd.f32 %v2253, %v1773
  %v2271 = vmul.f32 %v2267, %v2270
  %v2272 = vadd.f32 %v2114, %v2271
  %v2273 = vtanh.pop %v2272
  %v2274 = vsub.f32 1.0, %v2269
  %v2275 = vmul.f32 %v2274, %v2273
  %v2276 = vmul.f32 %v2269, %v2111
  %v2277 = vadd.f32 %v2275, %v2276
  %v2278 = vld [vmem:[#allocation2 + $0x60] sm:$0xff]
  %v2279 = vld [vmem:[#allocation2 + $0x68] sm:$0xff]
  %v2280 = vld [vmem:[#allocation2 + $0x70] sm:$0xff]
  %2281 = vmatprep.subr.mxu0 %v1706
  %2282 = vmatpush1.msra.mxu0 %v1705
  %2283 = vmatprep.subr.mxu0 %v1709
  %2284 = vmatpush1.msra.mxu0 %v1708
  %2285 = vmatprep.subr.mxu0 %v1712
  %2286 = vmatpush1.msra.mxu0 %v1711
  %2287 = vmatprep.subr.mxu0 %v1715
  %2288 = vmatpush1.msra.mxu0 %v1714
  %2289 = vmatprep.subr.mxu0 %v1718
  %2290 = vmatpush1.msra.mxu0 %v1717
  %2291 = vmatprep.subr.mxu0 %v1721
  %2292 = vmatpush1.msra.mxu0 %v1720
  %2293 = vmatprep.subr.mxu0 %v1724
  %2294 = vmatpush1.msra.mxu0 %v1723
  %2295 = vmatprep.subr.mxu0 %v1727
  %2296 = vmatpush1.msra.mxu0 %v1726
  %2297 = vmatprep.subr.mxu0 %v1730
  %2298 = vmatpush1.msra.mxu0 %v1729
  %2299 = vmatprep.subr.mxu0 %v1733
  %2300 = vmatpush1.msra.mxu0 %v1732
  %2301 = vmatprep.subr.mxu0 %v1736
  %2302 = vmatpush1.msra.mxu0 %v1735
  %2303 = vmatprep.subr.mxu0 %v1739
  %2304 = vmatpush1.msra.mxu0 %v1738
  %2305 = vmatprep.subr.mxu0 %v1742
  %2306 = vmatpush1.msra.mxu0 %v1741
  %2307 = vmatprep.subr.mxu0 %v1745
  %2308 = vmatpush1.msra.mxu0 %v1744
  %2309 = vmatprep.subr.mxu0 %v1748
  %2310 = vmatpush1.msra.mxu0 %v1747
  %2311 = vmatprep.subr.mxu0 %v1751
  %2312 = vmatpush1.msra.mxu0 %v1750
  %2313 = vmatprep.subr.mxu0 0.0
  %2314 = vmatpush1.msra.mxu0 0.0
  %2315 = vmatprep.subr.mxu0 0.0
  %2316 = vmatpush1.msra.mxu0 0.0
  %2317 = vmatprep.subr.mxu0 0.0
  %2318 = vmatpush1.msra.mxu0 0.0
  %2319 = vmatprep.subr.mxu0 0.0
  %2320 = vmatpush1.msra.mxu0 0.0
  %2321 = vmatprep.subr.mxu0 0.0
  %2322 = vmatpush1.msra.mxu0 0.0
  %2323 = vmatprep.subr.mxu0 0.0
  %2324 = vmatpush1.msra.mxu0 0.0
  %2325 = vmatprep.subr.mxu0 0.0
  %2326 = vmatpush1.msra.mxu0 0.0
  %2327 = vmatprep.subr.mxu0 0.0
  %2328 = vmatpush1.msra.mxu0 0.0
  %2329 = vmatprep.subr.mxu0 0.0
  %2330 = vmatpush1.msra.mxu0 0.0
  %2331 = vmatprep.subr.mxu0 0.0
  %2332 = vmatpush1.msra.mxu0 0.0
  %2333 = vmatprep.subr.mxu0 0.0
  %2334 = vmatpush1.msra.mxu0 0.0
  %2335 = vmatprep.subr.mxu0 0.0
  %2336 = vmatpush1.msra.mxu0 0.0
  %2337 = vmatprep.subr.mxu0 0.0
  %2338 = vmatpush1.msra.mxu0 0.0
  %2339 = vmatprep.subr.mxu0 0.0
  %2340 = vmatpush1.msra.mxu0 0.0
  %2341 = vmatprep.subr.mxu0 0.0
  %2342 = vmatpush1.msra.mxu0 0.0
  %2343 = vmatprep.subr.mxu0 0.0
  %2344 = vmatpush1.msra.mxu0 0.0
  %2345 = vmatprep.mubr.f32.mxu0 0.0
  %2346 = vmatmul.mubr.f32.gmra.mrb[0].mxu0 %v2277
  %v2347 = vpop.f32.mrb[0].mxu0
  %v2348 = vadd.f32 0.0, %v2347
  %v2349 = vpop.f32.mrb[0].mxu0
  %v2350 = vadd.f32 0.0, %v2349
  %2351 = vdwg.mxu0
  %2352 = vmatprep.subr.mxu0 0.0
  %2353 = vmatpush1.msra.mxu0 %v1707
  %2354 = vmatprep.subr.mxu0 0.0
  %2355 = vmatpush1.msra.mxu0 %v1710
  %2356 = vmatprep.subr.mxu0 0.0
  %2357 = vmatpush1.msra.mxu0 %v1713
  %2358 = vmatprep.subr.mxu0 0.0
  %2359 = vmatpush1.msra.mxu0 %v1716
  %2360 = vmatprep.subr.mxu0 0.0
  %2361 = vmatpush1.msra.mxu0 %v1719
  %2362 = vmatprep.subr.mxu0 0.0
  %2363 = vmatpush1.msra.mxu0 %v1722
  %2364 = vmatprep.subr.mxu0 0.0
  %2365 = vmatpush1.msra.mxu0 %v1725
  %2366 = vmatprep.subr.mxu0 0.0
  %2367 = vmatpush1.msra.mxu0 %v1728
  %2368 = vmatprep.subr.mxu0 0.0
  %2369 = vmatpush1.msra.mxu0 %v1731
  %2370 = vmatprep.subr.mxu0 0.0
  %2371 = vmatpush1.msra.mxu0 %v1734
  %2372 = vmatprep.subr.mxu0 0.0
  %2373 = vmatpush1.msra.mxu0 %v1737
  %2374 = vmatprep.subr.mxu0 0.0
  %2375 = vmatpush1.msra.mxu0 %v1740
  %2376 = vmatprep.subr.mxu0 0.0
  %2377 = vmatpush1.msra.mxu0 %v1743
  %2378 = vmatprep.subr.mxu0 0.0
  %2379 = vmatpush1.msra.mxu0 %v1746
  %2380 = vmatprep.subr.mxu0 0.0
  %2381 = vmatpush1.msra.mxu0 %v1749
  %2382 = vmatprep.subr.mxu0 0.0
  %2383 = vmatpush1.msra.mxu0 %v1752
  %2384 = vmatprep.subr.mxu0 0.0
  %2385 = vmatpush1.msra.mxu0 0.0
  %2386 = vmatprep.subr.mxu0 0.0
  %2387 = vmatpush1.msra.mxu0 0.0
  %2388 = vmatprep.subr.mxu0 0.0
  %2389 = vmatpush1.msra.mxu0 0.0
  %2390 = vmatprep.subr.mxu0 0.0
  %2391 = vmatpush1.msra.mxu0 0.0
  %2392 = vmatprep.subr.mxu0 0.0
  %2393 = vmatpush1.msra.mxu0 0.0
  %2394 = vmatprep.subr.mxu0 0.0
  %2395 = vmatpush1.msra.mxu0 0.0
  %2396 = vmatprep.subr.mxu0 0.0
  %2397 = vmatpush1.msra.mxu0 0.0
  %2398 = vmatprep.subr.mxu0 0.0
  %2399 = vmatpush1.msra.mxu0 0.0
  %2400 = vmatprep.subr.mxu0 0.0
  %2401 = vmatpush1.msra.mxu0 0.0
  %2402 = vmatprep.subr.mxu0 0.0
  %2403 = vmatpush1.msra.mxu0 0.0
  %2404 = vmatprep.subr.mxu0 0.0
  %2405 = vmatpush1.msra.mxu0 0.0
  %2406 = vmatprep.subr.mxu0 0.0
  %2407 = vmatpush1.msra.mxu0 0.0
  %2408 = vmatprep.subr.mxu0 0.0
  %2409 = vmatpush1.msra.mxu0 0.0
  %2410 = vmatprep.subr.mxu0 0.0
  %2411 = vmatpush1.msra.mxu0 0.0
  %2412 = vmatprep.subr.mxu0 0.0
  %2413 = vmatpush1.msra.mxu0 0.0
  %2414 = vmatprep.subr.mxu0 0.0
  %2415 = vmatpush1.msra.mxu0 0.0
  %2416 = vmatprep.mubr.f32.mxu0 0.0
  %2417 = vmatmul.mubr.f32.gmra.mrb[0].mxu0 %v2277
  %v2418 = vpop.f32.mrb[0].mxu0
  %v2419 = vadd.f32 0.0, %v2418
  %v2420 = vpop.f32.mrb[0].mxu0
  %2421 = vdwg.mxu0
  %v2422 = vadd.f32 %v2278, %v2348
  %v2423 = vadd.f32 %v2279, %v2350
  %v2424 = vxor.u32 %v2422, 2147483648
  %v2425 = vxor.u32 %v2423, 2147483648
  %v2426 = vmul.f32 %v2424, 1.442695
  %v2427 = vpow.pop %v2426
  %v2428 = vmul.f32 %v2425, 1.442695
  %v2429 = vpow.pop %v2428
  %v2430 = vadd.f32 %v2427, 1.0
  %v2431 = vadd.f32 %v2429, 1.0
  %v2432 = vrcp.pop %v2430
  %v2433 = vmul.f32 1.0, %v2432
  %v2434 = vrcp.pop %v2431
  %v2435 = vmul.f32 1.0, %v2434
  %v2436 = vadd.f32 %v2419, %v1773
  %v2437 = vmul.f32 %v2433, %v2436
  %v2438 = vadd.f32 %v2280, %v2437
  %v2439 = vtanh.pop %v2438
  %v2440 = vsub.f32 1.0, %v2435
  %v2441 = vmul.f32 %v2440, %v2439
  %v2442 = vmul.f32 %v2435, %v2277
  %v2443 = vadd.f32 %v2441, %v2442
  %v2444 = vld [vmem:[#allocation2 + $0x78] sm:$0xff]
  %v2445 = vld [vmem:[#allocation2 + $0x80] sm:$0xff]
  %v2446 = vld [vmem:[#allocation2 + $0x88] sm:$0xff]
  %2447 = vmatprep.subr.mxu0 %v1706
  %2448 = vmatpush1.msra.mxu0 %v1705
  %2449 = vmatprep.subr.mxu0 %v1709
  %2450 = vmatpush1.msra.mxu0 %v1708
  %2451 = vmatprep.subr.mxu0 %v1712
  %2452 = vmatpush1.msra.mxu0 %v1711
  %2453 = vmatprep.subr.mxu0 %v1715
  %2454 = vmatpush1.msra.mxu0 %v1714
  %2455 = vmatprep.subr.mxu0 %v1718
  %2456 = vmatpush1.msra.mxu0 %v1717
  %2457 = vmatprep.subr.mxu0 %v1721
  %2458 = vmatpush1.msra.mxu0 %v1720
  %2459 = vmatprep.subr.mxu0 %v1724
  %2460 = vmatpush1.msra.mxu0 %v1723
  %2461 = vmatprep.subr.mxu0 %v1727
  %2462 = vmatpush1.msra.mxu0 %v1726
  %2463 = vmatprep.subr.mxu0 %v1730
  %2464 = vmatpush1.msra.mxu0 %v1729
  %2465 = vmatprep.subr.mxu0 %v1733
  %2466 = vmatpush1.msra.mxu0 %v1732
  %2467 = vmatprep.subr.mxu0 %v1736
  %2468 = vmatpush1.msra.mxu0 %v1735
  %2469 = vmatprep.subr.mxu0 %v1739
  %2470 = vmatpush1.msra.mxu0 %v1738
  %2471 = vmatprep.subr.mxu0 %v1742
  %2472 = vmatpush1.msra.mxu0 %v1741
  %2473 = vmatprep.subr.mxu0 %v1745
  %2474 = vmatpush1.msra.mxu0 %v1744
  %2475 = vmatprep.subr.mxu0 %v1748
  %2476 = vmatpush1.msra.mxu0 %v1747
  %2477 = vmatprep.subr.mxu0 %v1751
  %2478 = vmatpush1.msra.mxu0 %v1750
  %2479 = vmatprep.subr.mxu0 0.0
  %2480 = vmatpush1.msra.mxu0 0.0
  %2481 = vmatprep.subr.mxu0 0.0
  %2482 = vmatpush1.msra.mxu0 0.0
  %2483 = vmatprep.subr.mxu0 0.0
  %2484 = vmatpush1.msra.mxu0 0.0
  %2485 = vmatprep.subr.mxu0 0.0
  %2486 = vmatpush1.msra.mxu0 0.0
  %2487 = vmatprep.subr.mxu0 0.0
  %2488 = vmatpush1.msra.mxu0 0.0
  %2489 = vmatprep.subr.mxu0 0.0
  %2490 = vmatpush1.msra.mxu0 0.0
  %2491 = vmatprep.subr.mxu0 0.0
  %2492 = vmatpush1.msra.mxu0 0.0
  %2493 = vmatprep.subr.mxu0 0.0
  %2494 = vmatpush1.msra.mxu0 0.0
  %2495 = vmatprep.subr.mxu0 0.0
  %2496 = vmatpush1.msra.mxu0 0.0
  %2497 = vmatprep.subr.mxu0 0.0
  %2498 = vmatpush1.msra.mxu0 0.0
  %2499 = vmatprep.subr.mxu0 0.0
  %2500 = vmatpush1.msra.mxu0 0.0
  %2501 = vmatprep.subr.mxu0 0.0
  %2502 = vmatpush1.msra.mxu0 0.0
  %2503 = vmatprep.subr.mxu0 0.0
  %2504 = vmatpush1.msra.mxu0 0.0
  %2505 = vmatprep.subr.mxu0 0.0
  %2506 = vmatpush1.msra.mxu0 0.0
  %2507 = vmatprep.subr.mxu0 0.0
  %2508 = vmatpush1.msra.mxu0 0.0
  %2509 = vmatprep.subr.mxu0 0.0
  %2510 = vmatpush1.msra.mxu0 0.0
  %2511 = vmatprep.mubr.f32.mxu0 0.0
  %2512 = vmatmul.mubr.f32.gmra.mrb[0].mxu0 %v2443
  %v2513 = vpop.f32.mrb[0].mxu0
  %v2514 = vadd.f32 0.0, %v2513
  %v2515 = vpop.f32.mrb[0].mxu0
  %v2516 = vadd.f32 0.0, %v2515
  %2517 = vdwg.mxu0
  %2518 = vmatprep.subr.mxu0 0.0
  %2519 = vmatpush1.msra.mxu0 %v1707
  %2520 = vmatprep.subr.mxu0 0.0
  %2521 = vmatpush1.msra.mxu0 %v1710
  %2522 = vmatprep.subr.mxu0 0.0
  %2523 = vmatpush1.msra.mxu0 %v1713
  %2524 = vmatprep.subr.mxu0 0.0
  %2525 = vmatpush1.msra.mxu0 %v1716
  %2526 = vmatprep.subr.mxu0 0.0
  %2527 = vmatpush1.msra.mxu0 %v1719
  %2528 = vmatprep.subr.mxu0 0.0
  %2529 = vmatpush1.msra.mxu0 %v1722
  %2530 = vmatprep.subr.mxu0 0.0
  %2531 = vmatpush1.msra.mxu0 %v1725
  %2532 = vmatprep.subr.mxu0 0.0
  %2533 = vmatpush1.msra.mxu0 %v1728
  %2534 = vmatprep.subr.mxu0 0.0
  %2535 = vmatpush1.msra.mxu0 %v1731
  %2536 = vmatprep.subr.mxu0 0.0
  %2537 = vmatpush1.msra.mxu0 %v1734
  %2538 = vmatprep.subr.mxu0 0.0
  %2539 = vmatpush1.msra.mxu0 %v1737
  %2540 = vmatprep.subr.mxu0 0.0
  %2541 = vmatpush1.msra.mxu0 %v1740
  %2542 = vmatprep.subr.mxu0 0.0
  %2543 = vmatpush1.msra.mxu0 %v1743
  %2544 = vmatprep.subr.mxu0 0.0
  %2545 = vmatpush1.msra.mxu0 %v1746
  %2546 = vmatprep.subr.mxu0 0.0
  %2547 = vmatpush1.msra.mxu0 %v1749
  %2548 = vmatprep.subr.mxu0 0.0
  %2549 = vmatpush1.msra.mxu0 %v1752
  %2550 = vmatprep.subr.mxu0 0.0
  %2551 = vmatpush1.msra.mxu0 0.0
  %2552 = vmatprep.subr.mxu0 0.0
  %2553 = vmatpush1.msra.mxu0 0.0
  %2554 = vmatprep.subr.mxu0 0.0
  %2555 = vmatpush1.msra.mxu0 0.0
  %2556 = vmatprep.subr.mxu0 0.0
  %2557 = vmatpush1.msra.mxu0 0.0
  %2558 = vmatprep.subr.mxu0 0.0
  %2559 = vmatpush1.msra.mxu0 0.0
  %2560 = vmatprep.subr.mxu0 0.0
  %2561 = vmatpush1.msra.mxu0 0.0
  %2562 = vmatprep.subr.mxu0 0.0
  %2563 = vmatpush1.msra.mxu0 0.0
  %2564 = vmatprep.subr.mxu0 0.0
  %2565 = vmatpush1.msra.mxu0 0.0
  %2566 = vmatprep.subr.mxu0 0.0
  %2567 = vmatpush1.msra.mxu0 0.0
  %2568 = vmatprep.subr.mxu0 0.0
  %2569 = vmatpush1.msra.mxu0 0.0
  %2570 = vmatprep.subr.mxu0 0.0
  %2571 = vmatpush1.msra.mxu0 0.0
  %2572 = vmatprep.subr.mxu0 0.0
  %2573 = vmatpush1.msra.mxu0 0.0
  %2574 = vmatprep.subr.mxu0 0.0
  %2575 = vmatpush1.msra.mxu0 0.0
  %2576 = vmatprep.subr.mxu0 0.0
  %2577 = vmatpush1.msra.mxu0 0.0
  %2578 = vmatprep.subr.mxu0 0.0
  %2579 = vmatpush1.msra.mxu0 0.0
  %2580 = vmatprep.subr.mxu0 0.0
  %2581 = vmatpush1.msra.mxu0 0.0
  %2582 = vmatprep.mubr.f32.mxu0 0.0
  %2583 = vmatmul.mubr.f32.gmra.mrb[0].mxu0 %v2443
  %v2584 = vpop.f32.mrb[0].mxu0
  %v2585 = vadd.f32 0.0, %v2584
  %v2586 = vpop.f32.mrb[0].mxu0
  %2587 = vdwg.mxu0
  %v2588 = vadd.f32 %v2444, %v2514
  %v2589 = vadd.f32 %v2445, %v2516
  %v2590 = vxor.u32 %v2588, 2147483648
  %v2591 = vxor.u32 %v2589, 2147483648
  %v2592 = vmul.f32 %v2590, 1.442695
  %v2593 = vpow.pop %v2592
  %v2594 = vmul.f32 %v2591, 1.442695
  %v2595 = vpow.pop %v2594
  %v2596 = vadd.f32 %v2593, 1.0
  %v2597 = vadd.f32 %v2595, 1.0
  %v2598 = vrcp.pop %v2596
  %v2599 = vmul.f32 1.0, %v2598
  %v2600 = vrcp.pop %v2597
  %v2601 = vmul.f32 1.0, %v2600
  %v2602 = vadd.f32 %v2585, %v1773
  %v2603 = vmul.f32 %v2599, %v2602
  %v2604 = vadd.f32 %v2446, %v2603
  %v2605 = vtanh.pop %v2604
  %v2606 = vsub.f32 1.0, %v2601
  %v2607 = vmul.f32 %v2606, %v2605
  %v2608 = vmul.f32 %v2601, %v2443
  %v2609 = vadd.f32 %v2607, %v2608
  %v2610 = vld [vmem:[#allocation2 + $0x90] sm:$0xff]
  %v2611 = vld [vmem:[#allocation2 + $0x98] sm:$0xff]
  %v2612 = vld [vmem:[#allocation2 + $0xa0] sm:$0xff]
  %2613 = vmatprep.subr.mxu0 %v1706
  %2614 = vmatpush1.msra.mxu0 %v1705
  %2615 = vmatprep.subr.mxu0 %v1709
  %2616 = vmatpush1.msra.mxu0 %v1708
  %2617 = vmatprep.subr.mxu0 %v1712
  %2618 = vmatpush1.msra.mxu0 %v1711
  %2619 = vmatprep.subr.mxu0 %v1715
  %2620 = vmatpush1.msra.mxu0 %v1714
  %2621 = vmatprep.subr.mxu0 %v1718
  %2622 = vmatpush1.msra.mxu0 %v1717
  %2623 = vmatprep.subr.mxu0 %v1721
  %2624 = vmatpush1.msra.mxu0 %v1720
  %2625 = vmatprep.subr.mxu0 %v1724
  %2626 = vmatpush1.msra.mxu0 %v1723
  %2627 = vmatprep.subr.mxu0 %v1727
  %2628 = vmatpush1.msra.mxu0 %v1726
  %2629 = vmatprep.subr.mxu0 %v1730
  %2630 = vmatpush1.msra.mxu0 %v1729
  %2631 = vmatprep.subr.mxu0 %v1733
  %2632 = vmatpush1.msra.mxu0 %v1732
  %2633 = vmatprep.subr.mxu0 %v1736
  %2634 = vmatpush1.msra.mxu0 %v1735
  %2635 = vmatprep.subr.mxu0 %v1739
  %2636 = vmatpush1.msra.mxu0 %v1738
  %2637 = vmatprep.subr.mxu0 %v1742
  %2638 = vmatpush1.msra.mxu0 %v1741
  %2639 = vmatprep.subr.mxu0 %v1745
  %2640 = vmatpush1.msra.mxu0 %v1744
  %2641 = vmatprep.subr.mxu0 %v1748
  %2642 = vmatpush1.msra.mxu0 %v1747
  %2643 = vmatprep.subr.mxu0 %v1751
  %2644 = vmatpush1.msra.mxu0 %v1750
  %2645 = vmatprep.subr.mxu0 0.0
  %2646 = vmatpush1.msra.mxu0 0.0
  %2647 = vmatprep.subr.mxu0 0.0
  %2648 = vmatpush1.msra.mxu0 0.0
  %2649 = vmatprep.subr.mxu0 0.0
  %2650 = vmatpush1.msra.mxu0 0.0
  %2651 = vmatprep.subr.mxu0 0.0
  %2652 = vmatpush1.msra.mxu0 0.0
  %2653 = vmatprep.subr.mxu0 0.0
  %2654 = vmatpush1.msra.mxu0 0.0
  %2655 = vmatprep.subr.mxu0 0.0
  %2656 = vmatpush1.msra.mxu0 0.0
  %2657 = vmatprep.subr.mxu0 0.0
  %2658 = vmatpush1.msra.mxu0 0.0
  %2659 = vmatprep.subr.mxu0 0.0
  %2660 = vmatpush1.msra.mxu0 0.0
  %2661 = vmatprep.subr.mxu0 0.0
  %2662 = vmatpush1.msra.mxu0 0.0
  %2663 = vmatprep.subr.mxu0 0.0
  %2664 = vmatpush1.msra.mxu0 0.0
  %2665 = vmatprep.subr.mxu0 0.0
  %2666 = vmatpush1.msra.mxu0 0.0
  %2667 = vmatprep.subr.mxu0 0.0
  %2668 = vmatpush1.msra.mxu0 0.0
  %2669 = vmatprep.subr.mxu0 0.0
  %2670 = vmatpush1.msra.mxu0 0.0
  %2671 = vmatprep.subr.mxu0 0.0
  %2672 = vmatpush1.msra.mxu0 0.0
  %2673 = vmatprep.subr.mxu0 0.0
  %2674 = vmatpush1.msra.mxu0 0.0
  %2675 = vmatprep.subr.mxu0 0.0
  %2676 = vmatpush1.msra.mxu0 0.0
  %2677 = vmatprep.mubr.f32.mxu0 0.0
  %2678 = vmatmul.mubr.f32.gmra.mrb[0].mxu0 %v2609
  %v2679 = vpop.f32.mrb[0].mxu0
  %v2680 = vadd.f32 0.0, %v2679
  %v2681 = vpop.f32.mrb[0].mxu0
  %v2682 = vadd.f32 0.0, %v2681
  %2683 = vdwg.mxu0
  %2684 = vmatprep.subr.mxu0 0.0
  %2685 = vmatpush1.msra.mxu0 %v1707
  %2686 = vmatprep.subr.mxu0 0.0
  %2687 = vmatpush1.msra.mxu0 %v1710
  %2688 = vmatprep.subr.mxu0 0.0
  %2689 = vmatpush1.msra.mxu0 %v1713
  %2690 = vmatprep.subr.mxu0 0.0
  %2691 = vmatpush1.msra.mxu0 %v1716
  %2692 = vmatprep.subr.mxu0 0.0
  %2693 = vmatpush1.msra.mxu0 %v1719
  %2694 = vmatprep.subr.mxu0 0.0
  %2695 = vmatpush1.msra.mxu0 %v1722
  %2696 = vmatprep.subr.mxu0 0.0
  %2697 = vmatpush1.msra.mxu0 %v1725
  %2698 = vmatprep.subr.mxu0 0.0
  %2699 = vmatpush1.msra.mxu0 %v1728
  %2700 = vmatprep.subr.mxu0 0.0
  %2701 = vmatpush1.msra.mxu0 %v1731
  %2702 = vmatprep.subr.mxu0 0.0
  %2703 = vmatpush1.msra.mxu0 %v1734
  %2704 = vmatprep.subr.mxu0 0.0
  %2705 = vmatpush1.msra.mxu0 %v1737
  %2706 = vmatprep.subr.mxu0 0.0
  %2707 = vmatpush1.msra.mxu0 %v1740
  %2708 = vmatprep.subr.mxu0 0.0
  %2709 = vmatpush1.msra.mxu0 %v1743
  %2710 = vmatprep.subr.mxu0 0.0
  %2711 = vmatpush1.msra.mxu0 %v1746
  %2712 = vmatprep.subr.mxu0 0.0
  %2713 = vmatpush1.msra.mxu0 %v1749
  %2714 = vmatprep.subr.mxu0 0.0
  %2715 = vmatpush1.msra.mxu0 %v1752
  %2716 = vmatprep.subr.mxu0 0.0
  %2717 = vmatpush1.msra.mxu0 0.0
  %2718 = vmatprep.subr.mxu0 0.0
  %2719 = vmatpush1.msra.mxu0 0.0
  %2720 = vmatprep.subr.mxu0 0.0
  %2721 = vmatpush1.msra.mxu0 0.0
  %2722 = vmatprep.subr.mxu0 0.0
  %2723 = vmatpush1.msra.mxu0 0.0
  %2724 = vmatprep.subr.mxu0 0.0
  %2725 = vmatpush1.msra.mxu0 0.0
  %2726 = vmatprep.subr.mxu0 0.0
  %2727 = vmatpush1.msra.mxu0 0.0
  %2728 = vmatprep.subr.mxu0 0.0
  %2729 = vmatpush1.msra.mxu0 0.0
  %2730 = vmatprep.subr.mxu0 0.0
  %2731 = vmatpush1.msra.mxu0 0.0
  %2732 = vmatprep.subr.mxu0 0.0
  %2733 = vmatpush1.msra.mxu0 0.0
  %2734 = vmatprep.subr.mxu0 0.0
  %2735 = vmatpush1.msra.mxu0 0.0
  %2736 = vmatprep.subr.mxu0 0.0
  %2737 = vmatpush1.msra.mxu0 0.0
  %2738 = vmatprep.subr.mxu0 0.0
  %2739 = vmatpush1.msra.mxu0 0.0
  %2740 = vmatprep.subr.mxu0 0.0
  %2741 = vmatpush1.msra.mxu0 0.0
  %2742 = vmatprep.subr.mxu0 0.0
  %2743 = vmatpush1.msra.mxu0 0.0
  %2744 = vmatprep.subr.mxu0 0.0
  %2745 = vmatpush1.msra.mxu0 0.0
  %2746 = vmatprep.subr.mxu0 0.0
  %2747 = vmatpush1.msra.mxu0 0.0
  %2748 = vmatprep.mubr.f32.mxu0 0.0
  %2749 = vmatmul.mubr.f32.gmra.mrb[0].mxu0 %v2609
  %v2750 = vpop.f32.mrb[0].mxu0
  %v2751 = vadd.f32 0.0, %v2750
  %v2752 = vpop.f32.mrb[0].mxu0
  %2753 = vdwg.mxu0
  %v2754 = vadd.f32 %v2610, %v2680
  %v2755 = vadd.f32 %v2611, %v2682
  %v2756 = vxor.u32 %v2754, 2147483648
  %v2757 = vxor.u32 %v2755, 2147483648
  %v2758 = vmul.f32 %v2756, 1.442695
  %v2759 = vpow.pop %v2758
  %v2760 = vmul.f32 %v2757, 1.442695
  %v2761 = vpow.pop %v2760
  %v2762 = vadd.f32 %v2759, 1.0
  %v2763 = vadd.f32 %v2761, 1.0
  %v2764 = vrcp.pop %v2762
  %v2765 = vmul.f32 1.0, %v2764
  %v2766 = vrcp.pop %v2763
  %v2767 = vmul.f32 1.0, %v2766
  %v2768 = vadd.f32 %v2751, %v1773
  %v2769 = vmul.f32 %v2765, %v2768
  %v2770 = vadd.f32 %v2612, %v2769
  %v2771 = vtanh.pop %v2770
  %v2772 = vsub.f32 1.0, %v2767
  %v2773 = vmul.f32 %v2772, %v2771
  %v2774 = vmul.f32 %v2767, %v2609
  %v2775 = vadd.f32 %v2773, %v2774
  %v2776 = vld [vmem:[#allocation2 + $0xa8] sm:$0xff]
  %v2777 = vld [vmem:[#allocation2 + $0xb0] sm:$0xff]
  %v2778 = vld [vmem:[#allocation2 + $0xb8] sm:$0xff]
  %2779 = vmatprep.subr.mxu0 %v1706
  %2780 = vmatpush1.msra.mxu0 %v1705
  %2781 = vmatprep.subr.mxu0 %v1709
  %2782 = vmatpush1.msra.mxu0 %v1708
  %2783 = vmatprep.subr.mxu0 %v1712
  %2784 = vmatpush1.msra.mxu0 %v1711
  %2785 = vmatprep.subr.mxu0 %v1715
  %2786 = vmatpush1.msra.mxu0 %v1714
  %2787 = vmatprep.subr.mxu0 %v1718
  %2788 = vmatpush1.msra.mxu0 %v1717
  %2789 = vmatprep.subr.mxu0 %v1721
  %2790 = vmatpush1.msra.mxu0 %v1720
  %2791 = vmatprep.subr.mxu0 %v1724
  %2792 = vmatpush1.msra.mxu0 %v1723
  %2793 = vmatprep.subr.mxu0 %v1727
  %2794 = vmatpush1.msra.mxu0 %v1726
  %2795 = vmatprep.subr.mxu0 %v1730
  %2796 = vmatpush1.msra.mxu0 %v1729
  %2797 = vmatprep.subr.mxu0 %v1733
  %2798 = vmatpush1.msra.mxu0 %v1732
  %2799 = vmatprep.subr.mxu0 %v1736
  %2800 = vmatpush1.msra.mxu0 %v1735
  %2801 = vmatprep.subr.mxu0 %v1739
  %2802 = vmatpush1.msra.mxu0 %v1738
  %2803 = vmatprep.subr.mxu0 %v1742
  %2804 = vmatpush1.msra.mxu0 %v1741
  %2805 = vmatprep.subr.mxu0 %v1745
  %2806 = vmatpush1.msra.mxu0 %v1744
  %2807 = vmatprep.subr.mxu0 %v1748
  %2808 = vmatpush1.msra.mxu0 %v1747
  %2809 = vmatprep.subr.mxu0 %v1751
  %2810 = vmatpush1.msra.mxu0 %v1750
  %2811 = vmatprep.subr.mxu0 0.0
  %2812 = vmatpush1.msra.mxu0 0.0
  %2813 = vmatprep.subr.mxu0 0.0
  %2814 = vmatpush1.msra.mxu0 0.0
  %2815 = vmatprep.subr.mxu0 0.0
  %2816 = vmatpush1.msra.mxu0 0.0
  %2817 = vmatprep.subr.mxu0 0.0
  %2818 = vmatpush1.msra.mxu0 0.0
  %2819 = vmatprep.subr.mxu0 0.0
  %2820 = vmatpush1.msra.mxu0 0.0
  %2821 = vmatprep.subr.mxu0 0.0
  %2822 = vmatpush1.msra.mxu0 0.0
  %2823 = vmatprep.subr.mxu0 0.0
  %2824 = vmatpush1.msra.mxu0 0.0
  %2825 = vmatprep.subr.mxu0 0.0
  %2826 = vmatpush1.msra.mxu0 0.0
  %2827 = vmatprep.subr.mxu0 0.0
  %2828 = vmatpush1.msra.mxu0 0.0
  %2829 = vmatprep.subr.mxu0 0.0
  %2830 = vmatpush1.msra.mxu0 0.0
  %2831 = vmatprep.subr.mxu0 0.0
  %2832 = vmatpush1.msra.mxu0 0.0
  %2833 = vmatprep.subr.mxu0 0.0
  %2834 = vmatpush1.msra.mxu0 0.0
  %2835 = vmatprep.subr.mxu0 0.0
  %2836 = vmatpush1.msra.mxu0 0.0
  %2837 = vmatprep.subr.mxu0 0.0
  %2838 = vmatpush1.msra.mxu0 0.0
  %2839 = vmatprep.subr.mxu0 0.0
  %2840 = vmatpush1.msra.mxu0 0.0
  %2841 = vmatprep.subr.mxu0 0.0
  %2842 = vmatpush1.msra.mxu0 0.0
  %2843 = vmatprep.mubr.f32.mxu0 0.0
  %2844 = vmatmul.mubr.f32.gmra.mrb[0].mxu0 %v2775
  %v2845 = vpop.f32.mrb[0].mxu0
  %v2846 = vadd.f32 0.0, %v2845
  %v2847 = vpop.f32.mrb[0].mxu0
  %v2848 = vadd.f32 0.0, %v2847
  %2849 = vdwg.mxu0
  %2850 = vmatprep.subr.mxu0 0.0
  %2851 = vmatpush1.msra.mxu0 %v1707
  %2852 = vmatprep.subr.mxu0 0.0
  %2853 = vmatpush1.msra.mxu0 %v1710
  %2854 = vmatprep.subr.mxu0 0.0
  %2855 = vmatpush1.msra.mxu0 %v1713
  %2856 = vmatprep.subr.mxu0 0.0
  %2857 = vmatpush1.msra.mxu0 %v1716
  %2858 = vmatprep.subr.mxu0 0.0
  %2859 = vmatpush1.msra.mxu0 %v1719
  %2860 = vmatprep.subr.mxu0 0.0
  %2861 = vmatpush1.msra.mxu0 %v1722
  %2862 = vmatprep.subr.mxu0 0.0
  %2863 = vmatpush1.msra.mxu0 %v1725
  %2864 = vmatprep.subr.mxu0 0.0
  %2865 = vmatpush1.msra.mxu0 %v1728
  %2866 = vmatprep.subr.mxu0 0.0
  %2867 = vmatpush1.msra.mxu0 %v1731
  %2868 = vmatprep.subr.mxu0 0.0
  %2869 = vmatpush1.msra.mxu0 %v1734
  %2870 = vmatprep.subr.mxu0 0.0
  %2871 = vmatpush1.msra.mxu0 %v1737
  %2872 = vmatprep.subr.mxu0 0.0
  %2873 = vmatpush1.msra.mxu0 %v1740
  %2874 = vmatprep.subr.mxu0 0.0
  %2875 = vmatpush1.msra.mxu0 %v1743
  %2876 = vmatprep.subr.mxu0 0.0
  %2877 = vmatpush1.msra.mxu0 %v1746
  %2878 = vmatprep.subr.mxu0 0.0
  %2879 = vmatpush1.msra.mxu0 %v1749
  %2880 = vmatprep.subr.mxu0 0.0
  %2881 = vmatpush1.msra.mxu0 %v1752
  %2882 = vmatprep.subr.mxu0 0.0
  %2883 = vmatpush1.msra.mxu0 0.0
  %2884 = vmatprep.subr.mxu0 0.0
  %2885 = vmatpush1.msra.mxu0 0.0
  %2886 = vmatprep.subr.mxu0 0.0
  %2887 = vmatpush1.msra.mxu0 0.0
  %2888 = vmatprep.subr.mxu0 0.0
  %2889 = vmatpush1.msra.mxu0 0.0
  %2890 = vmatprep.subr.mxu0 0.0
  %2891 = vmatpush1.msra.mxu0 0.0
  %2892 = vmatprep.subr.mxu0 0.0
  %2893 = vmatpush1.msra.mxu0 0.0
  %2894 = vmatprep.subr.mxu0 0.0
  %2895 = vmatpush1.msra.mxu0 0.0
  %2896 = vmatprep.subr.mxu0 0.0
  %2897 = vmatpush1.msra.mxu0 0.0
  %2898 = vmatprep.subr.mxu0 0.0
  %2899 = vmatpush1.msra.mxu0 0.0
  %2900 = vmatprep.subr.mxu0 0.0
  %2901 = vmatpush1.msra.mxu0 0.0
  %2902 = vmatprep.subr.mxu0 0.0
  %2903 = vmatpush1.msra.mxu0 0.0
  %2904 = vmatprep.subr.mxu0 0.0
  %2905 = vmatpush1.msra.mxu0 0.0
  %2906 = vmatprep.subr.mxu0 0.0
  %2907 = vmatpush1.msra.mxu0 0.0
  %2908 = vmatprep.subr.mxu0 0.0
  %2909 = vmatpush1.msra.mxu0 0.0
  %2910 = vmatprep.subr.mxu0 0.0
  %2911 = vmatpush1.msra.mxu0 0.0
  %2912 = vmatprep.subr.mxu0 0.0
  %2913 = vmatpush1.msra.mxu0 0.0
  %2914 = vmatprep.mubr.f32.mxu0 0.0
  %2915 = vmatmul.mubr.f32.gmra.mrb[0].mxu0 %v2775
  %v2916 = vpop.f32.mrb[0].mxu0
  %v2917 = vadd.f32 0.0, %v2916
  %v2918 = vpop.f32.mrb[0].mxu0
  %2919 = vdwg.mxu0
  %v2920 = vadd.f32 %v2776, %v2846
  %v2921 = vadd.f32 %v2777, %v2848
  %v2922 = vxor.u32 %v2920, 2147483648
  %v2923 = vxor.u32 %v2921, 2147483648
  %v2924 = vmul.f32 %v2922, 1.442695
  %v2925 = vpow.pop %v2924
  %v2926 = vmul.f32 %v2923, 1.442695
  %v2927 = vpow.pop %v2926
  %v2928 = vadd.f32 %v2925, 1.0
  %v2929 = vadd.f32 %v2927, 1.0
  %v2930 = vrcp.pop %v2928
  %v2931 = vmul.f32 1.0, %v2930
  %v2932 = vrcp.pop %v2929
  %v2933 = vmul.f32 1.0, %v2932
  %v2934 = vadd.f32 %v2917, %v1773
  %v2935 = vmul.f32 %v2931, %v2934
  %v2936 = vadd.f32 %v2778, %v2935
  %v2937 = vtanh.pop %v2936
  %v2938 = vsub.f32 1.0, %v2933
  %v2939 = vmul.f32 %v2938, %v2937
  %v2940 = vmul.f32 %v2933, %v2775
  %v2941 = vadd.f32 %v2939, %v2940
  %s2942 = smul.u32 8, 16
  %s2943 = smul.u32 %s2942, 8
  %s2944 = sshll.u32 %s2943, 4
  %2945 = dma.done [#allocation5], %s2944
  %v2946 = vld [vmem:[#allocation3] sm:$0xff]
  %v2947 = vld [vmem:[#allocation3 + $0x8] sm:$0xff]
  %v2948 = vld [vmem:[#allocation3 + $0x10] sm:$0xff]
  %v2949 = vld [vmem:[#allocation3 + $0x18] sm:$0xff]
  %v2950 = vld [vmem:[#allocation3 + $0x20] sm:$0xff]
  %v2951 = vld [vmem:[#allocation3 + $0x28] sm:$0xff]
  %v2952 = vld [vmem:[#allocation3 + $0x30] sm:$0xff]
  %v2953 = vld [vmem:[#allocation3 + $0x38] sm:$0xff]
  %v2954 = vld [vmem:[#allocation3 + $0x40] sm:$0xff]
  %v2955 = vld [vmem:[#allocation3 + $0x48] sm:$0xff]
  %v2956 = vld [vmem:[#allocation3 + $0x50] sm:$0xff]
  %v2957 = vld [vmem:[#allocation3 + $0x58] sm:$0xff]
  %v2958 = vld [vmem:[#allocation3 + $0x60] sm:$0xff]
  %v2959 = vld [vmem:[#allocation3 + $0x68] sm:$0xff]
  %v2960 = vld [vmem:[#allocation3 + $0x70] sm:$0xff]
  %v2961 = vld [vmem:[#allocation3 + $0x78] sm:$0xff]
  %v2962 = vld [vmem:[#allocation3 + $0x80] sm:$0xff]
  %v2963 = vld [vmem:[#allocation3 + $0x88] sm:$0xff]
  %v2964 = vld [vmem:[#allocation3 + $0x90] sm:$0xff]
  %v2965 = vld [vmem:[#allocation3 + $0x98] sm:$0xff]
  %v2966 = vld [vmem:[#allocation3 + $0xa0] sm:$0xff]
  %v2967 = vld [vmem:[#allocation3 + $0xa8] sm:$0xff]
  %v2968 = vld [vmem:[#allocation3 + $0xb0] sm:$0xff]
  %v2969 = vld [vmem:[#allocation3 + $0xb8] sm:$0xff]
  %v2970 = vld [vmem:[#allocation3 + $0xc0] sm:$0xff]
  %v2971 = vld [vmem:[#allocation3 + $0xc8] sm:$0xff]
  %v2972 = vld [vmem:[#allocation3 + $0xd0] sm:$0xff]
  %v2973 = vld [vmem:[#allocation3 + $0xd8] sm:$0xff]
  %v2974 = vld [vmem:[#allocation3 + $0xe0] sm:$0xff]
  %v2975 = vld [vmem:[#allocation3 + $0xe8] sm:$0xff]
  %v2976 = vld [vmem:[#allocation3 + $0xf0] sm:$0xff]
  %v2977 = vld [vmem:[#allocation3 + $0xf8] sm:$0xff]
  %v2978 = vld [vmem:[#allocation3 + $0x100] sm:$0xff]
  %v2979 = vld [vmem:[#allocation3 + $0x108] sm:$0xff]
  %v2980 = vld [vmem:[#allocation3 + $0x110] sm:$0xff]
  %v2981 = vld [vmem:[#allocation3 + $0x118] sm:$0xff]
  %v2982 = vld [vmem:[#allocation3 + $0x120] sm:$0xff]
  %v2983 = vld [vmem:[#allocation3 + $0x128] sm:$0xff]
  %v2984 = vld [vmem:[#allocation3 + $0x130] sm:$0xff]
  %v2985 = vld [vmem:[#allocation3 + $0x138] sm:$0xff]
  %v2986 = vld [vmem:[#allocation3 + $0x140] sm:$0xff]
  %v2987 = vld [vmem:[#allocation3 + $0x148] sm:$0xff]
  %v2988 = vld [vmem:[#allocation3 + $0x150] sm:$0xff]
  %v2989 = vld [vmem:[#allocation3 + $0x158] sm:$0xff]
  %v2990 = vld [vmem:[#allocation3 + $0x160] sm:$0xff]
  %v2991 = vld [vmem:[#allocation3 + $0x168] sm:$0xff]
  %v2992 = vld [vmem:[#allocation3 + $0x170] sm:$0xff]
  %v2993 = vld [vmem:[#allocation3 + $0x178] sm:$0xff]
  %v2994 = vld [vmem:[#allocation3 + $0x180] sm:$0xff]
  %v2995 = vld [vmem:[#allocation3 + $0x188] sm:$0xff]
  %v2996 = vld [vmem:[#allocation3 + $0x190] sm:$0xff]
  %v2997 = vld [vmem:[#allocation3 + $0x198] sm:$0xff]
  %v2998 = vld [vmem:[#allocation3 + $0x1a0] sm:$0xff]
  %v2999 = vld [vmem:[#allocation3 + $0x1a8] sm:$0xff]
  %v3000 = vld [vmem:[#allocation3 + $0x1b0] sm:$0xff]
  %v3001 = vld [vmem:[#allocation3 + $0x1b8] sm:$0xff]
  %v3002 = vld [vmem:[#allocation3 + $0x1c0] sm:$0xff]
  %v3003 = vld [vmem:[#allocation3 + $0x1c8] sm:$0xff]
  %v3004 = vld [vmem:[#allocation3 + $0x1d0] sm:$0xff]
  %v3005 = vld [vmem:[#allocation3 + $0x1d8] sm:$0xff]
  %v3006 = vld [vmem:[#allocation3 + $0x1e0] sm:$0xff]
  %v3007 = vld [vmem:[#allocation3 + $0x1e8] sm:$0xff]
  %v3008 = vld [vmem:[#allocation3 + $0x1f0] sm:$0xff]
  %v3009 = vld [vmem:[#allocation3 + $0x1f8] sm:$0xff]
  %v3010 = vld [vmem:[#allocation3 + $0x200] sm:$0xff]
  %v3011 = vld [vmem:[#allocation3 + $0x208] sm:$0xff]
  %v3012 = vld [vmem:[#allocation3 + $0x210] sm:$0xff]
  %v3013 = vld [vmem:[#allocation3 + $0x218] sm:$0xff]
  %v3014 = vld [vmem:[#allocation3 + $0x220] sm:$0xff]
  %v3015 = vld [vmem:[#allocation3 + $0x228] sm:$0xff]
  %v3016 = vld [vmem:[#allocation3 + $0x230] sm:$0xff]
  %v3017 = vld [vmem:[#allocation3 + $0x238] sm:$0xff]
  %v3018 = vld [vmem:[#allocation3 + $0x240] sm:$0xff]
  %v3019 = vld [vmem:[#allocation3 + $0x248] sm:$0xff]
  %v3020 = vld [vmem:[#allocation3 + $0x250] sm:$0xff]
  %v3021 = vld [vmem:[#allocation3 + $0x258] sm:$0xff]
  %v3022 = vld [vmem:[#allocation3 + $0x260] sm:$0xff]
  %v3023 = vld [vmem:[#allocation3 + $0x268] sm:$0xff]
  %v3024 = vld [vmem:[#allocation3 + $0x270] sm:$0xff]
  %v3025 = vld [vmem:[#allocation3 + $0x278] sm:$0xff]
  %v3026 = vld [vmem:[#allocation3 + $0x280] sm:$0xff]
  %v3027 = vld [vmem:[#allocation3 + $0x288] sm:$0xff]
  %v3028 = vld [vmem:[#allocation3 + $0x290] sm:$0xff]
  %v3029 = vld [vmem:[#allocation3 + $0x298] sm:$0xff]
  %v3030 = vld [vmem:[#allocation3 + $0x2a0] sm:$0xff]
  %v3031 = vld [vmem:[#allocation3 + $0x2a8] sm:$0xff]
  %v3032 = vld [vmem:[#allocation3 + $0x2b0] sm:$0xff]
  %v3033 = vld [vmem:[#allocation3 + $0x2b8] sm:$0xff]
  %v3034 = vld [vmem:[#allocation3 + $0x2c0] sm:$0xff]
  %v3035 = vld [vmem:[#allocation3 + $0x2c8] sm:$0xff]
  %v3036 = vld [vmem:[#allocation3 + $0x2d0] sm:$0xff]
  %v3037 = vld [vmem:[#allocation3 + $0x2d8] sm:$0xff]
  %v3038 = vld [vmem:[#allocation3 + $0x2e0] sm:$0xff]
  %v3039 = vld [vmem:[#allocation3 + $0x2e8] sm:$0xff]
  %v3040 = vld [vmem:[#allocation3 + $0x2f0] sm:$0xff]
  %v3041 = vld [vmem:[#allocation3 + $0x2f8] sm:$0xff]
  %v3042 = vld [vmem:[#allocation3 + $0x300] sm:$0xff]
  %v3043 = vld [vmem:[#allocation3 + $0x308] sm:$0xff]
  %v3044 = vld [vmem:[#allocation3 + $0x310] sm:$0xff]
  %v3045 = vld [vmem:[#allocation3 + $0x318] sm:$0xff]
  %v3046 = vld [vmem:[#allocation3 + $0x320] sm:$0xff]
  %v3047 = vld [vmem:[#allocation3 + $0x328] sm:$0xff]
  %v3048 = vld [vmem:[#allocation3 + $0x330] sm:$0xff]
  %v3049 = vld [vmem:[#allocation3 + $0x338] sm:$0xff]
  %v3050 = vld [vmem:[#allocation3 + $0x340] sm:$0xff]
  %v3051 = vld [vmem:[#allocation3 + $0x348] sm:$0xff]
  %v3052 = vld [vmem:[#allocation3 + $0x350] sm:$0xff]
  %v3053 = vld [vmem:[#allocation3 + $0x358] sm:$0xff]
  %v3054 = vld [vmem:[#allocation3 + $0x360] sm:$0xff]
  %v3055 = vld [vmem:[#allocation3 + $0x368] sm:$0xff]
  %v3056 = vld [vmem:[#allocation3 + $0x370] sm:$0xff]
  %v3057 = vld [vmem:[#allocation3 + $0x378] sm:$0xff]
  %v3058 = vld [vmem:[#allocation3 + $0x380] sm:$0xff]
  %v3059 = vld [vmem:[#allocation3 + $0x388] sm:$0xff]
  %v3060 = vld [vmem:[#allocation3 + $0x390] sm:$0xff]
  %v3061 = vld [vmem:[#allocation3 + $0x398] sm:$0xff]
  %v3062 = vld [vmem:[#allocation3 + $0x3a0] sm:$0xff]
  %v3063 = vld [vmem:[#allocation3 + $0x3a8] sm:$0xff]
  %v3064 = vld [vmem:[#allocation3 + $0x3b0] sm:$0xff]
  %v3065 = vld [vmem:[#allocation3 + $0x3b8] sm:$0xff]
  %v3066 = vld [vmem:[#allocation3 + $0x3c0] sm:$0xff]
  %v3067 = vld [vmem:[#allocation3 + $0x3c8] sm:$0xff]
  %v3068 = vld [vmem:[#allocation3 + $0x3d0] sm:$0xff]
  %v3069 = vld [vmem:[#allocation3 + $0x3d8] sm:$0xff]
  %v3070 = vld [vmem:[#allocation3 + $0x3e0] sm:$0xff]
  %v3071 = vld [vmem:[#allocation3 + $0x3e8] sm:$0xff]
  %v3072 = vld [vmem:[#allocation3 + $0x3f0] sm:$0xff]
  %v3073 = vld [vmem:[#allocation3 + $0x3f8] sm:$0xff]
  %v3074 = vld [vmem:[%s5] sm:$0xff]
  %v3076 = vlaneseq
  %v3077 = vshrl.u32 %v3076, 7
  %v3078 = vsub.s32 0, %v3077
  %v3079 = vrot.slane %v3074, %v3078
  %v3080 = vlaneseq
  %v3081 = vshrl.u32 %v3080, 7
  %v3082 = vsub.s32 1, %v3081
  %v3083 = vrot.slane %v3074, %v3082
  %v3084 = vlaneseq
  %v3085 = vshrl.u32 %v3084, 7
  %v3086 = vsub.s32 2, %v3085
  %v3087 = vrot.slane %v3074, %v3086
  %v3088 = vlaneseq
  %v3089 = vshrl.u32 %v3088, 7
  %v3090 = vsub.s32 3, %v3089
  %v3091 = vrot.slane %v3074, %v3090
  %v3092 = vlaneseq
  %v3093 = vshrl.u32 %v3092, 7
  %v3094 = vsub.s32 4, %v3093
  %v3095 = vrot.slane %v3074, %v3094
  %v3096 = vlaneseq
  %v3097 = vshrl.u32 %v3096, 7
  %v3098 = vsub.s32 5, %v3097
  %v3099 = vrot.slane %v3074, %v3098
  %v3100 = vlaneseq
  %v3101 = vshrl.u32 %v3100, 7
  %v3102 = vsub.s32 6, %v3101
  %v3103 = vrot.slane %v3074, %v3102
  %v3104 = vlaneseq
  %v3105 = vshrl.u32 %v3104, 7
  %v3106 = vsub.s32 7, %v3105
  %v3107 = vrot.slane %v3074, %v3106
  %3116 = vmatprep.subr.mxu0 %v2947
  %3117 = vmatpush1.msra.mxu0 %v2946
  %3118 = vmatprep.subr.mxu0 %v2955
  %3119 = vmatpush1.msra.mxu0 %v2954
  %3120 = vmatprep.subr.mxu0 %v2963
  %3121 = vmatpush1.msra.mxu0 %v2962
  %3122 = vmatprep.subr.mxu0 %v2971
  %3123 = vmatpush1.msra.mxu0 %v2970
  %3124 = vmatprep.subr.mxu0 %v2979
  %3125 = vmatpush1.msra.mxu0 %v2978
  %3126 = vmatprep.subr.mxu0 %v2987
  %3127 = vmatpush1.msra.mxu0 %v2986
  %3128 = vmatprep.subr.mxu0 %v2995
  %3129 = vmatpush1.msra.mxu0 %v2994
  %3130 = vmatprep.subr.mxu0 %v3003
  %3131 = vmatpush1.msra.mxu0 %v3002
  %3132 = vmatprep.subr.mxu0 %v3011
  %3133 = vmatpush1.msra.mxu0 %v3010
  %3134 = vmatprep.subr.mxu0 %v3019
  %3135 = vmatpush1.msra.mxu0 %v3018
  %3136 = vmatprep.subr.mxu0 %v3027
  %3137 = vmatpush1.msra.mxu0 %v3026
  %3138 = vmatprep.subr.mxu0 %v3035
  %3139 = vmatpush1.msra.mxu0 %v3034
  %3140 = vmatprep.subr.mxu0 %v3043
  %3141 = vmatpush1.msra.mxu0 %v3042
  %3142 = vmatprep.subr.mxu0 %v3051
  %3143 = vmatpush1.msra.mxu0 %v3050
  %3144 = vmatprep.subr.mxu0 %v3059
  %3145 = vmatpush1.msra.mxu0 %v3058
  %3146 = vmatprep.subr.mxu0 %v3067
  %3147 = vmatpush1.msra.mxu0 %v3066
  %3148 = vmatprep.subr.mxu0 0.0
  %3149 = vmatpush1.msra.mxu0 0.0
  %3150 = vmatprep.subr.mxu0 0.0
  %3151 = vmatpush1.msra.mxu0 0.0
  %3152 = vmatprep.subr.mxu0 0.0
  %3153 = vmatpush1.msra.mxu0 0.0
  %3154 = vmatprep.subr.mxu0 0.0
  %3155 = vmatpush1.msra.mxu0 0.0
  %3156 = vmatprep.subr.mxu0 0.0
  %3157 = vmatpush1.msra.mxu0 0.0
  %3158 = vmatprep.subr.mxu0 0.0
  %3159 = vmatpush1.msra.mxu0 0.0
  %3160 = vmatprep.subr.mxu0 0.0
  %3161 = vmatpush1.msra.mxu0 0.0
  %3162 = vmatprep.subr.mxu0 0.0
  %3163 = vmatpush1.msra.mxu0 0.0
  %3164 = vmatprep.subr.mxu0 0.0
  %3165 = vmatpush1.msra.mxu0 0.0
  %3166 = vmatprep.subr.mxu0 0.0
  %3167 = vmatpush1.msra.mxu0 0.0
  %3168 = vmatprep.subr.mxu0 0.0
  %3169 = vmatpush1.msra.mxu0 0.0
  %3170 = vmatprep.subr.mxu0 0.0
  %3171 = vmatpush1.msra.mxu0 0.0
  %3172 = vmatprep.subr.mxu0 0.0
  %3173 = vmatpush1.msra.mxu0 0.0
  %3174 = vmatprep.subr.mxu0 0.0
  %3175 = vmatpush1.msra.mxu0 0.0
  %3176 = vmatprep.subr.mxu0 0.0
  %3177 = vmatpush1.msra.mxu0 0.0
  %3178 = vmatprep.subr.mxu0 0.0
  %3179 = vmatpush1.msra.mxu0 0.0
  %3180 = vmatprep.mubr.f32.mxu0 0.0
  %3181 = vmatmul.mubr.f32.gmra.mrb[0].mxu0 %v2941
  %v3182 = vpop.f32.mrb[0].mxu0
  %v3183 = vadd.f32 %v3079, %v3182
  %v3184 = vpop.f32.mrb[0].mxu0
  %v3185 = vadd.f32 %v3083, %v3184
  %3186 = vdwg.mxu0
  %3187 = vmatprep.subr.mxu0 %v2949
  %3188 = vmatpush1.msra.mxu0 %v2948
  %3189 = vmatprep.subr.mxu0 %v2957
  %3190 = vmatpush1.msra.mxu0 %v2956
  %3191 = vmatprep.subr.mxu0 %v2965
  %3192 = vmatpush1.msra.mxu0 %v2964
  %3193 = vmatprep.subr.mxu0 %v2973
  %3194 = vmatpush1.msra.mxu0 %v2972
  %3195 = vmatprep.subr.mxu0 %v2981
  %3196 = vmatpush1.msra.mxu0 %v2980
  %3197 = vmatprep.subr.mxu0 %v2989
  %3198 = vmatpush1.msra.mxu0 %v2988
  %3199 = vmatprep.subr.mxu0 %v2997
  %3200 = vmatpush1.msra.mxu0 %v2996
  %3201 = vmatprep.subr.mxu0 %v3005
  %3202 = vmatpush1.msra.mxu0 %v3004
  %3203 = vmatprep.subr.mxu0 %v3013
  %3204 = vmatpush1.msra.mxu0 %v3012
  %3205 = vmatprep.subr.mxu0 %v3021
  %3206 = vmatpush1.msra.mxu0 %v3020
  %3207 = vmatprep.subr.mxu0 %v3029
  %3208 = vmatpush1.msra.mxu0 %v3028
  %3209 = vmatprep.subr.mxu0 %v3037
  %3210 = vmatpush1.msra.mxu0 %v3036
  %3211 = vmatprep.subr.mxu0 %v3045
  %3212 = vmatpush1.msra.mxu0 %v3044
  %3213 = vmatprep.subr.mxu0 %v3053
  %3214 = vmatpush1.msra.mxu0 %v3052
  %3215 = vmatprep.subr.mxu0 %v3061
  %3216 = vmatpush1.msra.mxu0 %v3060
  %3217 = vmatprep.subr.mxu0 %v3069
  %3218 = vmatpush1.msra.mxu0 %v3068
  %3219 = vmatprep.subr.mxu0 0.0
  %3220 = vmatpush1.msra.mxu0 0.0
  %3221 = vmatprep.subr.mxu0 0.0
  %3222 = vmatpush1.msra.mxu0 0.0
  %3223 = vmatprep.subr.mxu0 0.0
  %3224 = vmatpush1.msra.mxu0 0.0
  %3225 = vmatprep.subr.mxu0 0.0
  %3226 = vmatpush1.msra.mxu0 0.0
  %3227 = vmatprep.subr.mxu0 0.0
  %3228 = vmatpush1.msra.mxu0 0.0
  %3229 = vmatprep.subr.mxu0 0.0
  %3230 = vmatpush1.msra.mxu0 0.0
  %3231 = vmatprep.subr.mxu0 0.0
  %3232 = vmatpush1.msra.mxu0 0.0
  %3233 = vmatprep.subr.mxu0 0.0
  %3234 = vmatpush1.msra.mxu0 0.0
  %3235 = vmatprep.subr.mxu0 0.0
  %3236 = vmatpush1.msra.mxu0 0.0
  %3237 = vmatprep.subr.mxu0 0.0
  %3238 = vmatpush1.msra.mxu0 0.0
  %3239 = vmatprep.subr.mxu0 0.0
  %3240 = vmatpush1.msra.mxu0 0.0
  %3241 = vmatprep.subr.mxu0 0.0
  %3242 = vmatpush1.msra.mxu0 0.0
  %3243 = vmatprep.subr.mxu0 0.0
  %3244 = vmatpush1.msra.mxu0 0.0
  %3245 = vmatprep.subr.mxu0 0.0
  %3246 = vmatpush1.msra.mxu0 0.0
  %3247 = vmatprep.subr.mxu0 0.0
  %3248 = vmatpush1.msra.mxu0 0.0
  %3249 = vmatprep.subr.mxu0 0.0
  %3250 = vmatpush1.msra.mxu0 0.0
  %3251 = vmatprep.mubr.f32.mxu0 0.0
  %3252 = vmatmul.mubr.f32.gmra.mrb[0].mxu0 %v2941
  %v3253 = vpop.f32.mrb[0].mxu0
  %v3254 = vadd.f32 %v3087, %v3253
  %v3255 = vpop.f32.mrb[0].mxu0
  %v3256 = vadd.f32 %v3091, %v3255
  %3257 = vdwg.mxu0
  %3258 = vmatprep.subr.mxu0 %v2951
  %3259 = vmatpush1.msra.mxu0 %v2950
  %3260 = vmatprep.subr.mxu0 %v2959
  %3261 = vmatpush1.msra.mxu0 %v2958
  %3262 = vmatprep.subr.mxu0 %v2967
  %3263 = vmatpush1.msra.mxu0 %v2966
  %3264 = vmatprep.subr.mxu0 %v2975
  %3265 = vmatpush1.msra.mxu0 %v2974
  %3266 = vmatprep.subr.mxu0 %v2983
  %3267 = vmatpush1.msra.mxu0 %v2982
  %3268 = vmatprep.subr.mxu0 %v2991
  %3269 = vmatpush1.msra.mxu0 %v2990
  %3270 = vmatprep.subr.mxu0 %v2999
  %3271 = vmatpush1.msra.mxu0 %v2998
  %3272 = vmatprep.subr.mxu0 %v3007
  %3273 = vmatpush1.msra.mxu0 %v3006
  %3274 = vmatprep.subr.mxu0 %v3015
  %3275 = vmatpush1.msra.mxu0 %v3014
  %3276 = vmatprep.subr.mxu0 %v3023
  %3277 = vmatpush1.msra.mxu0 %v3022
  %3278 = vmatprep.subr.mxu0 %v3031
  %3279 = vmatpush1.msra.mxu0 %v3030
  %3280 = vmatprep.subr.mxu0 %v3039
  %3281 = vmatpush1.msra.mxu0 %v3038
  %3282 = vmatprep.subr.mxu0 %v3047
  %3283 = vmatpush1.msra.mxu0 %v3046
  %3284 = vmatprep.subr.mxu0 %v3055
  %3285 = vmatpush1.msra.mxu0 %v3054
  %3286 = vmatprep.subr.mxu0 %v3063
  %3287 = vmatpush1.msra.mxu0 %v3062
  %3288 = vmatprep.subr.mxu0 %v3071
  %3289 = vmatpush1.msra.mxu0 %v3070
  %3290 = vmatprep.subr.mxu0 0.0
  %3291 = vmatpush1.msra.mxu0 0.0
  %3292 = vmatprep.subr.mxu0 0.0
  %3293 = vmatpush1.msra.mxu0 0.0
  %3294 = vmatprep.subr.mxu0 0.0
  %3295 = vmatpush1.msra.mxu0 0.0
  %3296 = vmatprep.subr.mxu0 0.0
  %3297 = vmatpush1.msra.mxu0 0.0
  %3298 = vmatprep.subr.mxu0 0.0
  %3299 = vmatpush1.msra.mxu0 0.0
  %3300 = vmatprep.subr.mxu0 0.0
  %3301 = vmatpush1.msra.mxu0 0.0
  %3302 = vmatprep.subr.mxu0 0.0
  %3303 = vmatpush1.msra.mxu0 0.0
  %3304 = vmatprep.subr.mxu0 0.0
  %3305 = vmatpush1.msra.mxu0 0.0
  %3306 = vmatprep.subr.mxu0 0.0
  %3307 = vmatpush1.msra.mxu0 0.0
  %3308 = vmatprep.subr.mxu0 0.0
  %3309 = vmatpush1.msra.mxu0 0.0
  %3310 = vmatprep.subr.mxu0 0.0
  %3311 = vmatpush1.msra.mxu0 0.0
  %3312 = vmatprep.subr.mxu0 0.0
  %3313 = vmatpush1.msra.mxu0 0.0
  %3314 = vmatprep.subr.mxu0 0.0
  %3315 = vmatpush1.msra.mxu0 0.0
  %3316 = vmatprep.subr.mxu0 0.0
  %3317 = vmatpush1.msra.mxu0 0.0
  %3318 = vmatprep.subr.mxu0 0.0
  %3319 = vmatpush1.msra.mxu0 0.0
  %3320 = vmatprep.subr.mxu0 0.0
  %3321 = vmatpush1.msra.mxu0 0.0
  %3322 = vmatprep.mubr.f32.mxu0 0.0
  %3323 = vmatmul.mubr.f32.gmra.mrb[0].mxu0 %v2941
  %v3324 = vpop.f32.mrb[0].mxu0
  %v3325 = vadd.f32 %v3095, %v3324
  %v3326 = vpop.f32.mrb[0].mxu0
  %v3327 = vadd.f32 %v3099, %v3326
  %3328 = vdwg.mxu0
  %3329 = vmatprep.subr.mxu0 %v2953
  %3330 = vmatpush1.msra.mxu0 %v2952
  %3331 = vmatprep.subr.mxu0 %v2961
  %3332 = vmatpush1.msra.mxu0 %v2960
  %3333 = vmatprep.subr.mxu0 %v2969
  %3334 = vmatpush1.msra.mxu0 %v2968
  %3335 = vmatprep.subr.mxu0 %v2977
  %3336 = vmatpush1.msra.mxu0 %v2976
  %3337 = vmatprep.subr.mxu0 %v2985
  %3338 = vmatpush1.msra.mxu0 %v2984
  %3339 = vmatprep.subr.mxu0 %v2993
  %3340 = vmatpush1.msra.mxu0 %v2992
  %3341 = vmatprep.subr.mxu0 %v3001
  %3342 = vmatpush1.msra.mxu0 %v3000
  %3343 = vmatprep.subr.mxu0 %v3009
  %3344 = vmatpush1.msra.mxu0 %v3008
  %3345 = vmatprep.subr.mxu0 %v3017
  %3346 = vmatpush1.msra.mxu0 %v3016
  %3347 = vmatprep.subr.mxu0 %v3025
  %3348 = vmatpush1.msra.mxu0 %v3024
  %3349 = vmatprep.subr.mxu0 %v3033
  %3350 = vmatpush1.msra.mxu0 %v3032
  %3351 = vmatprep.subr.mxu0 %v3041
  %3352 = vmatpush1.msra.mxu0 %v3040
  %3353 = vmatprep.subr.mxu0 %v3049
  %3354 = vmatpush1.msra.mxu0 %v3048
  %3355 = vmatprep.subr.mxu0 %v3057
  %3356 = vmatpush1.msra.mxu0 %v3056
  %3357 = vmatprep.subr.mxu0 %v3065
  %3358 = vmatpush1.msra.mxu0 %v3064
  %3359 = vmatprep.subr.mxu0 %v3073
  %3360 = vmatpush1.msra.mxu0 %v3072
  %3361 = vmatprep.subr.mxu0 0.0
  %3362 = vmatpush1.msra.mxu0 0.0
  %3363 = vmatprep.subr.mxu0 0.0
  %3364 = vmatpush1.msra.mxu0 0.0
  %3365 = vmatprep.subr.mxu0 0.0
  %3366 = vmatpush1.msra.mxu0 0.0
  %3367 = vmatprep.subr.mxu0 0.0
  %3368 = vmatpush1.msra.mxu0 0.0
  %3369 = vmatprep.subr.mxu0 0.0
  %3370 = vmatpush1.msra.mxu0 0.0
  %3371 = vmatprep.subr.mxu0 0.0
  %3372 = vmatpush1.msra.mxu0 0.0
  %3373 = vmatprep.subr.mxu0 0.0
  %3374 = vmatpush1.msra.mxu0 0.0
  %3375 = vmatprep.subr.mxu0 0.0
  %3376 = vmatpush1.msra.mxu0 0.0
  %3377 = vmatprep.subr.mxu0 0.0
  %3378 = vmatpush1.msra.mxu0 0.0
  %3379 = vmatprep.subr.mxu0 0.0
  %3380 = vmatpush1.msra.mxu0 0.0
  %3381 = vmatprep.subr.mxu0 0.0
  %3382 = vmatpush1.msra.mxu0 0.0
  %3383 = vmatprep.subr.mxu0 0.0
  %3384 = vmatpush1.msra.mxu0 0.0
  %3385 = vmatprep.subr.mxu0 0.0
  %3386 = vmatpush1.msra.mxu0 0.0
  %3387 = vmatprep.subr.mxu0 0.0
  %3388 = vmatpush1.msra.mxu0 0.0
  %3389 = vmatprep.subr.mxu0 0.0
  %3390 = vmatpush1.msra.mxu0 0.0
  %3391 = vmatprep.subr.mxu0 0.0
  %3392 = vmatpush1.msra.mxu0 0.0
  %3393 = vmatprep.mubr.f32.mxu0 0.0
  %3394 = vmatmul.mubr.f32.gmra.mrb[0].mxu0 %v2941
  %v3395 = vpop.f32.mrb[0].mxu0
  %v3396 = vadd.f32 %v3103, %v3395
  %v3397 = vpop.f32.mrb[0].mxu0
  %v3398 = vadd.f32 %v3107, %v3397
  %3399 = vdwg.mxu0
  %v3400 = vld [vmem:[%s6] sm:$0xff]
  %v3401 = vld [vmem:[%s7] sm:$0xff]
  %vm3402 = vcmask 1043456
  %v3403 = vsel %vm3402, %v3183, 0.0
  %v3404 = vrot.slane %v3403, 4
  %v3405 = vadd.f32 %v3403, %v3404
  %v3406 = vrot.slane %v3405, 2
  %v3407 = vadd.f32 %v3405, %v3406
  %v3408 = vrot.slane %v3407, 1
  %v3409 = vadd.f32 %v3407, %v3408
  %v3410 = vsel %vm3402, %v3185, 0.0
  %v3411 = vrot.slane %v3410, 4
  %v3412 = vadd.f32 %v3410, %v3411
  %v3413 = vrot.slane %v3412, 2
  %v3414 = vadd.f32 %v3412, %v3413
  %v3415 = vrot.slane %v3414, 1
  %v3416 = vadd.f32 %v3414, %v3415
  %v3417 = vsel %vm3402, %v3254, 0.0
  %v3418 = vrot.slane %v3417, 4
  %v3419 = vadd.f32 %v3417, %v3418
  %v3420 = vrot.slane %v3419, 2
  %v3421 = vadd.f32 %v3419, %v3420
  %v3422 = vrot.slane %v3421, 1
  %v3423 = vadd.f32 %v3421, %v3422
  %v3424 = vsel %vm3402, %v3256, 0.0
  %v3425 = vrot.slane %v3424, 4
  %v3426 = vadd.f32 %v3424, %v3425
  %v3427 = vrot.slane %v3426, 2
  %v3428 = vadd.f32 %v3426, %v3427
  %v3429 = vrot.slane %v3428, 1
  %v3430 = vadd.f32 %v3428, %v3429
  %v3431 = vsel %vm3402, %v3325, 0.0
  %v3432 = vrot.slane %v3431, 4
  %v3433 = vadd.f32 %v3431, %v3432
  %v3434 = vrot.slane %v3433, 2
  %v3435 = vadd.f32 %v3433, %v3434
  %v3436 = vrot.slane %v3435, 1
  %v3437 = vadd.f32 %v3435, %v3436
  %v3438 = vsel %vm3402, %v3327, 0.0
  %v3439 = vrot.slane %v3438, 4
  %v3440 = vadd.f32 %v3438, %v3439
  %v3441 = vrot.slane %v3440, 2
  %v3442 = vadd.f32 %v3440, %v3441
  %v3443 = vrot.slane %v3442, 1
  %v3444 = vadd.f32 %v3442, %v3443
  %v3445 = vsel %vm3402, %v3396, 0.0
  %v3446 = vrot.slane %v3445, 4
  %v3447 = vadd.f32 %v3445, %v3446
  %v3448 = vrot.slane %v3447, 2
  %v3449 = vadd.f32 %v3447, %v3448
  %v3450 = vrot.slane %v3449, 1
  %v3451 = vadd.f32 %v3449, %v3450
  %v3452 = vsel %vm3402, %v3398, 0.0
  %v3453 = vrot.slane %v3452, 4
  %v3454 = vadd.f32 %v3452, %v3453
  %v3455 = vrot.slane %v3454, 2
  %v3456 = vadd.f32 %v3454, %v3455
  %v3457 = vrot.slane %v3456, 1
  %v3458 = vadd.f32 %v3456, %v3457
  %v3459 = vrcp.pop 4.0
  %v3460 = vmul.f32 %v3409, %v3459
  %v3461 = vmul.f32 %v3416, %v3459
  %v3462 = vmul.f32 %v3423, %v3459
  %v3463 = vmul.f32 %v3430, %v3459
  %v3464 = vmul.f32 %v3437, %v3459
  %v3465 = vmul.f32 %v3444, %v3459
  %v3466 = vmul.f32 %v3451, %v3459
  %v3467 = vmul.f32 %v3458, %v3459
  %v3468 = vmul.f32 %v3183, %v3183
  %v3469 = vmul.f32 %v3185, %v3185
  %v3470 = vmul.f32 %v3254, %v3254
  %v3471 = vmul.f32 %v3256, %v3256
  %v3472 = vmul.f32 %v3325, %v3325
  %v3473 = vmul.f32 %v3327, %v3327
  %v3474 = vmul.f32 %v3396, %v3396
  %v3475 = vmul.f32 %v3398, %v3398
  %v3476 = vsel %vm3402, %v3468, 0.0
  %v3477 = vrot.slane %v3476, 4
  %v3478 = vadd.f32 %v3476, %v3477
  %v3479 = vrot.slane %v3478, 2
  %v3480 = vadd.f32 %v3478, %v3479
  %v3481 = vrot.slane %v3480, 1
  %v3482 = vadd.f32 %v3480, %v3481
  %v3483 = vsel %vm3402, %v3469, 0.0
  %v3484 = vrot.slane %v3483, 4
  %v3485 = vadd.f32 %v3483, %v3484
  %v3486 = vrot.slane %v3485, 2
  %v3487 = vadd.f32 %v3485, %v3486
  %v3488 = vrot.slane %v3487, 1
  %v3489 = vadd.f32 %v3487, %v3488
  %v3490 = vsel %vm3402, %v3470, 0.0
  %v3491 = vrot.slane %v3490, 4
  %v3492 = vadd.f32 %v3490, %v3491
  %v3493 = vrot.slane %v3492, 2
  %v3494 = vadd.f32 %v3492, %v3493
  %v3495 = vrot.slane %v3494, 1
  %v3496 = vadd.f32 %v3494, %v3495
  %v3497 = vsel %vm3402, %v3471, 0.0
  %v3498 = vrot.slane %v3497, 4
  %v3499 = vadd.f32 %v3497, %v3498
  %v3500 = vrot.slane %v3499, 2
  %v3501 = vadd.f32 %v3499, %v3500
  %v3502 = vrot.slane %v3501, 1
  %v3503 = vadd.f32 %v3501, %v3502
  %v3504 = vsel %vm3402, %v3472, 0.0
  %v3505 = vrot.slane %v3504, 4
  %v3506 = vadd.f32 %v3504, %v3505
  %v3507 = vrot.slane %v3506, 2
  %v3508 = vadd.f32 %v3506, %v3507
  %v3509 = vrot.slane %v3508, 1
  %v3510 = vadd.f32 %v3508, %v3509
  %v3511 = vsel %vm3402, %v3473, 0.0
  %v3512 = vrot.slane %v3511, 4
  %v3513 = vadd.f32 %v3511, %v3512
  %v3514 = vrot.slane %v3513, 2
  %v3515 = vadd.f32 %v3513, %v3514
  %v3516 = vrot.slane %v3515, 1
  %v3517 = vadd.f32 %v3515, %v3516
  %v3518 = vsel %vm3402, %v3474, 0.0
  %v3519 = vrot.slane %v3518, 4
  %v3520 = vadd.f32 %v3518, %v3519
  %v3521 = vrot.slane %v3520, 2
  %v3522 = vadd.f32 %v3520, %v3521
  %v3523 = vrot.slane %v3522, 1
  %v3524 = vadd.f32 %v3522, %v3523
  %v3525 = vsel %vm3402, %v3475, 0.0
  %v3526 = vrot.slane %v3525, 4
  %v3527 = vadd.f32 %v3525, %v3526
  %v3528 = vrot.slane %v3527, 2
  %v3529 = vadd.f32 %v3527, %v3528
  %v3530 = vrot.slane %v3529, 1
  %v3531 = vadd.f32 %v3529, %v3530
  %v3532 = vmul.f32 %v3482, %v3459
  %v3533 = vmul.f32 %v3489, %v3459
  %v3534 = vmul.f32 %v3496, %v3459
  %v3535 = vmul.f32 %v3503, %v3459
  %v3536 = vmul.f32 %v3510, %v3459
  %v3537 = vmul.f32 %v3517, %v3459
  %v3538 = vmul.f32 %v3524, %v3459
  %v3539 = vmul.f32 %v3531, %v3459
  %v3540 = vmul.f32 %v3460, %v3460
  %v3541 = vmul.f32 %v3461, %v3461
  %v3542 = vmul.f32 %v3462, %v3462
  %v3543 = vmul.f32 %v3463, %v3463
  %v3544 = vmul.f32 %v3464, %v3464
  %v3545 = vmul.f32 %v3465, %v3465
  %v3546 = vmul.f32 %v3466, %v3466
  %v3547 = vmul.f32 %v3467, %v3467
  %v3548 = vsub.f32 %v3532, %v3540
  %v3549 = vsub.f32 %v3533, %v3541
  %v3550 = vsub.f32 %v3534, %v3542
  %v3551 = vsub.f32 %v3535, %v3543
  %v3552 = vsub.f32 %v3536, %v3544
  %v3553 = vsub.f32 %v3537, %v3545
  %v3554 = vsub.f32 %v3538, %v3546
  %v3555 = vsub.f32 %v3539, %v3547
  %v3556 = vmax.f32 %v3548, 0.0
  %v3557 = vmax.f32 %v3549, 0.0
  %v3558 = vmax.f32 %v3550, 0.0
  %v3559 = vmax.f32 %v3551, 0.0
  %v3560 = vmax.f32 %v3552, 0.0
  %v3561 = vmax.f32 %v3553, 0.0
  %v3562 = vmax.f32 %v3554, 0.0
  %v3563 = vmax.f32 %v3555, 0.0
  %v3564 = vsub.f32 %v3183, %v3460
  %v3565 = vsub.f32 %v3185, %v3461
  %v3566 = vsub.f32 %v3254, %v3462
  %v3567 = vsub.f32 %v3256, %v3463
  %v3568 = vsub.f32 %v3325, %v3464
  %v3569 = vsub.f32 %v3327, %v3465
  %v3570 = vsub.f32 %v3396, %v3466
  %v3571 = vsub.f32 %v3398, %v3467
  %v3572 = vadd.f32 %v3556, 1e-05
  %v3573 = vadd.f32 %v3557, 1e-05
  %v3574 = vadd.f32 %v3558, 1e-05
  %v3575 = vadd.f32 %v3559, 1e-05
  %v3576 = vadd.f32 %v3560, 1e-05
  %v3577 = vadd.f32 %v3561, 1e-05
  %v3578 = vadd.f32 %v3562, 1e-05
  %v3579 = vadd.f32 %v3563, 1e-05
  %v3580 = vrsqrt.pop %v3572
  %v3581 = vrsqrt.pop %v3573
  %v3582 = vrsqrt.pop %v3574
  %v3583 = vrsqrt.pop %v3575
  %v3584 = vrsqrt.pop %v3576
  %v3585 = vrsqrt.pop %v3577
  %v3586 = vrsqrt.pop %v3578
  %v3587 = vrsqrt.pop %v3579
  %v3588 = vmul.f32 %v3564, %v3580
  %v3589 = vmul.f32 %v3565, %v3581
  %v3590 = vmul.f32 %v3566, %v3582
  %v3591 = vmul.f32 %v3567, %v3583
  %v3592 = vmul.f32 %v3568, %v3584
  %v3593 = vmul.f32 %v3569, %v3585
  %v3594 = vmul.f32 %v3570, %v3586
  %v3595 = vmul.f32 %v3571, %v3587
  %v3597 = vlaneseq
  %v3598 = vshrl.u32 %v3597, 7
  %v3599 = vsub.s32 0, %v3598
  %v3600 = vrot.slane %v3400, %v3599
  %v3601 = vlaneseq
  %v3602 = vshrl.u32 %v3601, 7
  %v3603 = vsub.s32 1, %v3602
  %v3604 = vrot.slane %v3400, %v3603
  %v3605 = vlaneseq
  %v3606 = vshrl.u32 %v3605, 7
  %v3607 = vsub.s32 2, %v3606
  %v3608 = vrot.slane %v3400, %v3607
  %v3609 = vlaneseq
  %v3610 = vshrl.u32 %v3609, 7
  %v3611 = vsub.s32 3, %v3610
  %v3612 = vrot.slane %v3400, %v3611
  %v3613 = vlaneseq
  %v3614 = vshrl.u32 %v3613, 7
  %v3615 = vsub.s32 4, %v3614
  %v3616 = vrot.slane %v3400, %v3615
  %v3617 = vlaneseq
  %v3618 = vshrl.u32 %v3617, 7
  %v3619 = vsub.s32 5, %v3618
  %v3620 = vrot.slane %v3400, %v3619
  %v3621 = vlaneseq
  %v3622 = vshrl.u32 %v3621, 7
  %v3623 = vsub.s32 6, %v3622
  %v3624 = vrot.slane %v3400, %v3623
  %v3625 = vlaneseq
  %v3626 = vshrl.u32 %v3625, 7
  %v3627 = vsub.s32 7, %v3626
  %v3628 = vrot.slane %v3400, %v3627
  %v3637 = vmul.f32 %v3588, %v3600
  %v3638 = vmul.f32 %v3589, %v3604
  %v3639 = vmul.f32 %v3590, %v3608
  %v3640 = vmul.f32 %v3591, %v3612
  %v3641 = vmul.f32 %v3592, %v3616
  %v3642 = vmul.f32 %v3593, %v3620
  %v3643 = vmul.f32 %v3594, %v3624
  %v3644 = vmul.f32 %v3595, %v3628
  %v3646 = vlaneseq
  %v3647 = vshrl.u32 %v3646, 7
  %v3648 = vsub.s32 0, %v3647
  %v3649 = vrot.slane %v3401, %v3648
  %v3650 = vlaneseq
  %v3651 = vshrl.u32 %v3650, 7
  %v3652 = vsub.s32 1, %v3651
  %v3653 = vrot.slane %v3401, %v3652
  %v3654 = vlaneseq
  %v3655 = vshrl.u32 %v3654, 7
  %v3656 = vsub.s32 2, %v3655
  %v3657 = vrot.slane %v3401, %v3656
  %v3658 = vlaneseq
  %v3659 = vshrl.u32 %v3658, 7
  %v3660 = vsub.s32 3, %v3659
  %v3661 = vrot.slane %v3401, %v3660
  %v3662 = vlaneseq
  %v3663 = vshrl.u32 %v3662, 7
  %v3664 = vsub.s32 4, %v3663
  %v3665 = vrot.slane %v3401, %v3664
  %v3666 = vlaneseq
  %v3667 = vshrl.u32 %v3666, 7
  %v3668 = vsub.s32 5, %v3667
  %v3669 = vrot.slane %v3401, %v3668
  %v3670 = vlaneseq
  %v3671 = vshrl.u32 %v3670, 7
  %v3672 = vsub.s32 6, %v3671
  %v3673 = vrot.slane %v3401, %v3672
  %v3674 = vlaneseq
  %v3675 = vshrl.u32 %v3674, 7
  %v3676 = vsub.s32 7, %v3675
  %v3677 = vrot.slane %v3401, %v3676
  %v3686 = vadd.f32 %v3637, %v3649
  %v3687 = vadd.f32 %v3638, %v3653
  %v3688 = vadd.f32 %v3639, %v3657
  %v3689 = vadd.f32 %v3640, %v3661
  %v3690 = vadd.f32 %v3641, %v3665
  %v3691 = vadd.f32 %v3642, %v3669
  %v3692 = vadd.f32 %v3643, %v3673
  %v3693 = vadd.f32 %v3644, %v3677
  %v3694 = vmax.f32 %v3686, 0.0
  %v3695 = vmax.f32 %v3687, 0.0
  %v3696 = vmax.f32 %v3688, 0.0
  %v3697 = vmax.f32 %v3689, 0.0
  %v3698 = vmax.f32 %v3690, 0.0
  %v3699 = vmax.f32 %v3691, 0.0
  %v3700 = vmax.f32 %v3692, 0.0
  %v3701 = vmax.f32 %v3693, 0.0
  %s3702 = smul.u32 8, 128
  %s3703 = smul.u32 %s3702, 4
  %s3704 = sshll.u32 %s3703, 4
  %3705 = dma.done %s336, %s3704
  %v3706 = vld [vmem:[#allocation4] sm:$0xff]
  %v3707 = vld [vmem:[#allocation4 + $0x8] sm:$0xff]
  %v3708 = vld [vmem:[#allocation4 + $0x10] sm:$0xff]
  %v3709 = vld [vmem:[#allocation4 + $0x18] sm:$0xff]
  %v3710 = vld [vmem:[#allocation4 + $0x20] sm:$0xff]
  %v3711 = vld [vmem:[#allocation4 + $0x28] sm:$0xff]
  %v3712 = vld [vmem:[#allocation4 + $0x30] sm:$0xff]
  %v3713 = vld [vmem:[#allocation4 + $0x38] sm:$0xff]
  %v3714 = vld [vmem:[#allocation4 + $0x40] sm:$0xff]
  %v3715 = vld [vmem:[#allocation4 + $0x48] sm:$0xff]
  %v3716 = vld [vmem:[#allocation4 + $0x50] sm:$0xff]
  %v3717 = vld [vmem:[#allocation4 + $0x58] sm:$0xff]
  %v3718 = vld [vmem:[#allocation4 + $0x60] sm:$0xff]
  %v3719 = vld [vmem:[#allocation4 + $0x68] sm:$0xff]
  %v3720 = vld [vmem:[#allocation4 + $0x70] sm:$0xff]
  %v3721 = vld [vmem:[#allocation4 + $0x78] sm:$0xff]
  %v3722 = vld [vmem:[#allocation4 + $0x80] sm:$0xff]
  %v3723 = vld [vmem:[#allocation4 + $0x88] sm:$0xff]
  %v3724 = vld [vmem:[#allocation4 + $0x90] sm:$0xff]
  %v3725 = vld [vmem:[#allocation4 + $0x98] sm:$0xff]
  %v3726 = vld [vmem:[#allocation4 + $0xa0] sm:$0xff]
  %v3727 = vld [vmem:[#allocation4 + $0xa8] sm:$0xff]
  %v3728 = vld [vmem:[#allocation4 + $0xb0] sm:$0xff]
  %v3729 = vld [vmem:[#allocation4 + $0xb8] sm:$0xff]
  %v3730 = vld [vmem:[#allocation4 + $0xc0] sm:$0xff]
  %v3731 = vld [vmem:[#allocation4 + $0xc8] sm:$0xff]
  %v3732 = vld [vmem:[#allocation4 + $0xd0] sm:$0xff]
  %v3733 = vld [vmem:[#allocation4 + $0xd8] sm:$0xff]
  %v3734 = vld [vmem:[#allocation4 + $0xe0] sm:$0xff]
  %v3735 = vld [vmem:[#allocation4 + $0xe8] sm:$0xff]
  %v3736 = vld [vmem:[#allocation4 + $0xf0] sm:$0xff]
  %v3737 = vld [vmem:[#allocation4 + $0xf8] sm:$0xff]
  %v3738 = vld [vmem:[#allocation4 + $0x100] sm:$0xff]
  %v3739 = vld [vmem:[#allocation4 + $0x108] sm:$0xff]
  %v3740 = vld [vmem:[#allocation4 + $0x110] sm:$0xff]
  %v3741 = vld [vmem:[#allocation4 + $0x118] sm:$0xff]
  %v3742 = vld [vmem:[#allocation4 + $0x120] sm:$0xff]
  %v3743 = vld [vmem:[#allocation4 + $0x128] sm:$0xff]
  %v3744 = vld [vmem:[#allocation4 + $0x130] sm:$0xff]
  %v3745 = vld [vmem:[#allocation4 + $0x138] sm:$0xff]
  %v3746 = vld [vmem:[#allocation4 + $0x140] sm:$0xff]
  %v3747 = vld [vmem:[#allocation4 + $0x148] sm:$0xff]
  %v3748 = vld [vmem:[#allocation4 + $0x150] sm:$0xff]
  %v3749 = vld [vmem:[#allocation4 + $0x158] sm:$0xff]
  %v3750 = vld [vmem:[#allocation4 + $0x160] sm:$0xff]
  %v3751 = vld [vmem:[#allocation4 + $0x168] sm:$0xff]
  %v3752 = vld [vmem:[#allocation4 + $0x170] sm:$0xff]
  %v3753 = vld [vmem:[#allocation4 + $0x178] sm:$0xff]
  %v3754 = vld [vmem:[#allocation4 + $0x180] sm:$0xff]
  %v3755 = vld [vmem:[#allocation4 + $0x188] sm:$0xff]
  %v3756 = vld [vmem:[#allocation4 + $0x190] sm:$0xff]
  %v3757 = vld [vmem:[#allocation4 + $0x198] sm:$0xff]
  %v3758 = vld [vmem:[#allocation4 + $0x1a0] sm:$0xff]
  %v3759 = vld [vmem:[#allocation4 + $0x1a8] sm:$0xff]
  %v3760 = vld [vmem:[#allocation4 + $0x1b0] sm:$0xff]
  %v3761 = vld [vmem:[#allocation4 + $0x1b8] sm:$0xff]
  %v3762 = vld [vmem:[#allocation4 + $0x1c0] sm:$0xff]
  %v3763 = vld [vmem:[#allocation4 + $0x1c8] sm:$0xff]
  %v3764 = vld [vmem:[#allocation4 + $0x1d0] sm:$0xff]
  %v3765 = vld [vmem:[#allocation4 + $0x1d8] sm:$0xff]
  %v3766 = vld [vmem:[#allocation4 + $0x1e0] sm:$0xff]
  %v3767 = vld [vmem:[#allocation4 + $0x1e8] sm:$0xff]
  %v3768 = vld [vmem:[#allocation4 + $0x1f0] sm:$0xff]
  %v3769 = vld [vmem:[#allocation4 + $0x1f8] sm:$0xff]
  %v3770 = vld [vmem:[#allocation4 + $0x200] sm:$0xff]
  %v3771 = vld [vmem:[#allocation4 + $0x208] sm:$0xff]
  %v3772 = vld [vmem:[#allocation4 + $0x210] sm:$0xff]
  %v3773 = vld [vmem:[#allocation4 + $0x218] sm:$0xff]
  %v3774 = vld [vmem:[#allocation4 + $0x220] sm:$0xff]
  %v3775 = vld [vmem:[#allocation4 + $0x228] sm:$0xff]
  %v3776 = vld [vmem:[#allocation4 + $0x230] sm:$0xff]
  %v3777 = vld [vmem:[#allocation4 + $0x238] sm:$0xff]
  %v3778 = vld [vmem:[#allocation4 + $0x240] sm:$0xff]
  %v3779 = vld [vmem:[#allocation4 + $0x248] sm:$0xff]
  %v3780 = vld [vmem:[#allocation4 + $0x250] sm:$0xff]
  %v3781 = vld [vmem:[#allocation4 + $0x258] sm:$0xff]
  %v3782 = vld [vmem:[#allocation4 + $0x260] sm:$0xff]
  %v3783 = vld [vmem:[#allocation4 + $0x268] sm:$0xff]
  %v3784 = vld [vmem:[#allocation4 + $0x270] sm:$0xff]
  %v3785 = vld [vmem:[#allocation4 + $0x278] sm:$0xff]
  %v3786 = vld [vmem:[#allocation4 + $0x280] sm:$0xff]
  %v3787 = vld [vmem:[#allocation4 + $0x288] sm:$0xff]
  %v3788 = vld [vmem:[#allocation4 + $0x290] sm:$0xff]
  %v3789 = vld [vmem:[#allocation4 + $0x298] sm:$0xff]
  %v3790 = vld [vmem:[#allocation4 + $0x2a0] sm:$0xff]
  %v3791 = vld [vmem:[#allocation4 + $0x2a8] sm:$0xff]
  %v3792 = vld [vmem:[#allocation4 + $0x2b0] sm:$0xff]
  %v3793 = vld [vmem:[#allocation4 + $0x2b8] sm:$0xff]
  %v3794 = vld [vmem:[#allocation4 + $0x2c0] sm:$0xff]
  %v3795 = vld [vmem:[#allocation4 + $0x2c8] sm:$0xff]
  %v3796 = vld [vmem:[#allocation4 + $0x2d0] sm:$0xff]
  %v3797 = vld [vmem:[#allocation4 + $0x2d8] sm:$0xff]
  %v3798 = vld [vmem:[#allocation4 + $0x2e0] sm:$0xff]
  %v3799 = vld [vmem:[#allocation4 + $0x2e8] sm:$0xff]
  %v3800 = vld [vmem:[#allocation4 + $0x2f0] sm:$0xff]
  %v3801 = vld [vmem:[#allocation4 + $0x2f8] sm:$0xff]
  %v3802 = vld [vmem:[#allocation4 + $0x300] sm:$0xff]
  %v3803 = vld [vmem:[#allocation4 + $0x308] sm:$0xff]
  %v3804 = vld [vmem:[#allocation4 + $0x310] sm:$0xff]
  %v3805 = vld [vmem:[#allocation4 + $0x318] sm:$0xff]
  %v3806 = vld [vmem:[#allocation4 + $0x320] sm:$0xff]
  %v3807 = vld [vmem:[#allocation4 + $0x328] sm:$0xff]
  %v3808 = vld [vmem:[#allocation4 + $0x330] sm:$0xff]
  %v3809 = vld [vmem:[#allocation4 + $0x338] sm:$0xff]
  %v3810 = vld [vmem:[#allocation4 + $0x340] sm:$0xff]
  %v3811 = vld [vmem:[#allocation4 + $0x348] sm:$0xff]
  %v3812 = vld [vmem:[#allocation4 + $0x350] sm:$0xff]
  %v3813 = vld [vmem:[#allocation4 + $0x358] sm:$0xff]
  %v3814 = vld [vmem:[#allocation4 + $0x360] sm:$0xff]
  %v3815 = vld [vmem:[#allocation4 + $0x368] sm:$0xff]
  %v3816 = vld [vmem:[#allocation4 + $0x370] sm:$0xff]
  %v3817 = vld [vmem:[#allocation4 + $0x378] sm:$0xff]
  %v3818 = vld [vmem:[#allocation4 + $0x380] sm:$0xff]
  %v3819 = vld [vmem:[#allocation4 + $0x388] sm:$0xff]
  %v3820 = vld [vmem:[#allocation4 + $0x390] sm:$0xff]
  %v3821 = vld [vmem:[#allocation4 + $0x398] sm:$0xff]
  %v3822 = vld [vmem:[#allocation4 + $0x3a0] sm:$0xff]
  %v3823 = vld [vmem:[#allocation4 + $0x3a8] sm:$0xff]
  %v3824 = vld [vmem:[#allocation4 + $0x3b0] sm:$0xff]
  %v3825 = vld [vmem:[#allocation4 + $0x3b8] sm:$0xff]
  %v3826 = vld [vmem:[#allocation4 + $0x3c0] sm:$0xff]
  %v3827 = vld [vmem:[#allocation4 + $0x3c8] sm:$0xff]
  %v3828 = vld [vmem:[#allocation4 + $0x3d0] sm:$0xff]
  %v3829 = vld [vmem:[#allocation4 + $0x3d8] sm:$0xff]
  %v3830 = vld [vmem:[#allocation4 + $0x3e0] sm:$0xff]
  %v3831 = vld [vmem:[#allocation4 + $0x3e8] sm:$0xff]
  %v3832 = vld [vmem:[#allocation4 + $0x3f0] sm:$0xff]
  %v3833 = vld [vmem:[#allocation4 + $0x3f8] sm:$0xff]
  %v3834 = vld [vmem:[#allocation4 + $0x400] sm:$0xff]
  %v3835 = vld [vmem:[#allocation4 + $0x408] sm:$0xff]
  %v3836 = vld [vmem:[#allocation4 + $0x410] sm:$0xff]
  %v3837 = vld [vmem:[#allocation4 + $0x418] sm:$0xff]
  %v3838 = vld [vmem:[#allocation4 + $0x420] sm:$0xff]
  %v3839 = vld [vmem:[#allocation4 + $0x428] sm:$0xff]
  %v3840 = vld [vmem:[#allocation4 + $0x430] sm:$0xff]
  %v3841 = vld [vmem:[#allocation4 + $0x438] sm:$0xff]
  %v3842 = vld [vmem:[#allocation4 + $0x440] sm:$0xff]
  %v3843 = vld [vmem:[#allocation4 + $0x448] sm:$0xff]
  %v3844 = vld [vmem:[#allocation4 + $0x450] sm:$0xff]
  %v3845 = vld [vmem:[#allocation4 + $0x458] sm:$0xff]
  %v3846 = vld [vmem:[#allocation4 + $0x460] sm:$0xff]
  %v3847 = vld [vmem:[#allocation4 + $0x468] sm:$0xff]
  %v3848 = vld [vmem:[#allocation4 + $0x470] sm:$0xff]
  %v3849 = vld [vmem:[#allocation4 + $0x478] sm:$0xff]
  %v3850 = vld [vmem:[#allocation4 + $0x480] sm:$0xff]
  %v3851 = vld [vmem:[#allocation4 + $0x488] sm:$0xff]
  %v3852 = vld [vmem:[#allocation4 + $0x490] sm:$0xff]
  %v3853 = vld [vmem:[#allocation4 + $0x498] sm:$0xff]
  %v3854 = vld [vmem:[#allocation4 + $0x4a0] sm:$0xff]
  %v3855 = vld [vmem:[#allocation4 + $0x4a8] sm:$0xff]
  %v3856 = vld [vmem:[#allocation4 + $0x4b0] sm:$0xff]
  %v3857 = vld [vmem:[#allocation4 + $0x4b8] sm:$0xff]
  %v3858 = vld [vmem:[#allocation4 + $0x4c0] sm:$0xff]
  %v3859 = vld [vmem:[#allocation4 + $0x4c8] sm:$0xff]
  %v3860 = vld [vmem:[#allocation4 + $0x4d0] sm:$0xff]
  %v3861 = vld [vmem:[#allocation4 + $0x4d8] sm:$0xff]
  %v3862 = vld [vmem:[#allocation4 + $0x4e0] sm:$0xff]
  %v3863 = vld [vmem:[#allocation4 + $0x4e8] sm:$0xff]
  %v3864 = vld [vmem:[#allocation4 + $0x4f0] sm:$0xff]
  %v3865 = vld [vmem:[#allocation4 + $0x4f8] sm:$0xff]
  %v3866 = vld [vmem:[#allocation4 + $0x500] sm:$0xff]
  %v3867 = vld [vmem:[#allocation4 + $0x508] sm:$0xff]
  %v3868 = vld [vmem:[#allocation4 + $0x510] sm:$0xff]
  %v3869 = vld [vmem:[#allocation4 + $0x518] sm:$0xff]
  %v3870 = vld [vmem:[#allocation4 + $0x520] sm:$0xff]
  %v3871 = vld [vmem:[#allocation4 + $0x528] sm:$0xff]
  %v3872 = vld [vmem:[#allocation4 + $0x530] sm:$0xff]
  %v3873 = vld [vmem:[#allocation4 + $0x538] sm:$0xff]
  %v3874 = vld [vmem:[#allocation4 + $0x540] sm:$0xff]
  %v3875 = vld [vmem:[#allocation4 + $0x548] sm:$0xff]
  %v3876 = vld [vmem:[#allocation4 + $0x550] sm:$0xff]
  %v3877 = vld [vmem:[#allocation4 + $0x558] sm:$0xff]
  %v3878 = vld [vmem:[#allocation4 + $0x560] sm:$0xff]
  %v3879 = vld [vmem:[#allocation4 + $0x568] sm:$0xff]
  %v3880 = vld [vmem:[#allocation4 + $0x570] sm:$0xff]
  %v3881 = vld [vmem:[#allocation4 + $0x578] sm:$0xff]
  %v3882 = vld [vmem:[#allocation4 + $0x580] sm:$0xff]
  %v3883 = vld [vmem:[#allocation4 + $0x588] sm:$0xff]
  %v3884 = vld [vmem:[#allocation4 + $0x590] sm:$0xff]
  %v3885 = vld [vmem:[#allocation4 + $0x598] sm:$0xff]
  %v3886 = vld [vmem:[#allocation4 + $0x5a0] sm:$0xff]
  %v3887 = vld [vmem:[#allocation4 + $0x5a8] sm:$0xff]
  %v3888 = vld [vmem:[#allocation4 + $0x5b0] sm:$0xff]
  %v3889 = vld [vmem:[#allocation4 + $0x5b8] sm:$0xff]
  %v3890 = vld [vmem:[#allocation4 + $0x5c0] sm:$0xff]
  %v3891 = vld [vmem:[#allocation4 + $0x5c8] sm:$0xff]
  %v3892 = vld [vmem:[#allocation4 + $0x5d0] sm:$0xff]
  %v3893 = vld [vmem:[#allocation4 + $0x5d8] sm:$0xff]
  %v3894 = vld [vmem:[#allocation4 + $0x5e0] sm:$0xff]
  %v3895 = vld [vmem:[#allocation4 + $0x5e8] sm:$0xff]
  %v3896 = vld [vmem:[#allocation4 + $0x5f0] sm:$0xff]
  %v3897 = vld [vmem:[#allocation4 + $0x5f8] sm:$0xff]
  %v3898 = vld [vmem:[#allocation4 + $0x600] sm:$0xff]
  %v3899 = vld [vmem:[#allocation4 + $0x608] sm:$0xff]
  %v3900 = vld [vmem:[#allocation4 + $0x610] sm:$0xff]
  %v3901 = vld [vmem:[#allocation4 + $0x618] sm:$0xff]
  %v3902 = vld [vmem:[#allocation4 + $0x620] sm:$0xff]
  %v3903 = vld [vmem:[#allocation4 + $0x628] sm:$0xff]
  %v3904 = vld [vmem:[#allocation4 + $0x630] sm:$0xff]
  %v3905 = vld [vmem:[#allocation4 + $0x638] sm:$0xff]
  %v3906 = vld [vmem:[#allocation4 + $0x640] sm:$0xff]
  %v3907 = vld [vmem:[#allocation4 + $0x648] sm:$0xff]
  %v3908 = vld [vmem:[#allocation4 + $0x650] sm:$0xff]
  %v3909 = vld [vmem:[#allocation4 + $0x658] sm:$0xff]
  %v3910 = vld [vmem:[#allocation4 + $0x660] sm:$0xff]
  %v3911 = vld [vmem:[#allocation4 + $0x668] sm:$0xff]
  %v3912 = vld [vmem:[#allocation4 + $0x670] sm:$0xff]
  %v3913 = vld [vmem:[#allocation4 + $0x678] sm:$0xff]
  %v3914 = vld [vmem:[#allocation4 + $0x680] sm:$0xff]
  %v3915 = vld [vmem:[#allocation4 + $0x688] sm:$0xff]
  %v3916 = vld [vmem:[#allocation4 + $0x690] sm:$0xff]
  %v3917 = vld [vmem:[#allocation4 + $0x698] sm:$0xff]
  %v3918 = vld [vmem:[#allocation4 + $0x6a0] sm:$0xff]
  %v3919 = vld [vmem:[#allocation4 + $0x6a8] sm:$0xff]
  %v3920 = vld [vmem:[#allocation4 + $0x6b0] sm:$0xff]
  %v3921 = vld [vmem:[#allocation4 + $0x6b8] sm:$0xff]
  %v3922 = vld [vmem:[#allocation4 + $0x6c0] sm:$0xff]
  %v3923 = vld [vmem:[#allocation4 + $0x6c8] sm:$0xff]
  %v3924 = vld [vmem:[#allocation4 + $0x6d0] sm:$0xff]
  %v3925 = vld [vmem:[#allocation4 + $0x6d8] sm:$0xff]
  %v3926 = vld [vmem:[#allocation4 + $0x6e0] sm:$0xff]
  %v3927 = vld [vmem:[#allocation4 + $0x6e8] sm:$0xff]
  %v3928 = vld [vmem:[#allocation4 + $0x6f0] sm:$0xff]
  %v3929 = vld [vmem:[#allocation4 + $0x6f8] sm:$0xff]
  %v3930 = vld [vmem:[#allocation4 + $0x700] sm:$0xff]
  %v3931 = vld [vmem:[#allocation4 + $0x708] sm:$0xff]
  %v3932 = vld [vmem:[#allocation4 + $0x710] sm:$0xff]
  %v3933 = vld [vmem:[#allocation4 + $0x718] sm:$0xff]
  %v3934 = vld [vmem:[#allocation4 + $0x720] sm:$0xff]
  %v3935 = vld [vmem:[#allocation4 + $0x728] sm:$0xff]
  %v3936 = vld [vmem:[#allocation4 + $0x730] sm:$0xff]
  %v3937 = vld [vmem:[#allocation4 + $0x738] sm:$0xff]
  %v3938 = vld [vmem:[#allocation4 + $0x740] sm:$0xff]
  %v3939 = vld [vmem:[#allocation4 + $0x748] sm:$0xff]
  %v3940 = vld [vmem:[#allocation4 + $0x750] sm:$0xff]
  %v3941 = vld [vmem:[#allocation4 + $0x758] sm:$0xff]
  %v3942 = vld [vmem:[#allocation4 + $0x760] sm:$0xff]
  %v3943 = vld [vmem:[#allocation4 + $0x768] sm:$0xff]
  %v3944 = vld [vmem:[#allocation4 + $0x770] sm:$0xff]
  %v3945 = vld [vmem:[#allocation4 + $0x778] sm:$0xff]
  %v3946 = vld [vmem:[#allocation4 + $0x780] sm:$0xff]
  %v3947 = vld [vmem:[#allocation4 + $0x788] sm:$0xff]
  %v3948 = vld [vmem:[#allocation4 + $0x790] sm:$0xff]
  %v3949 = vld [vmem:[#allocation4 + $0x798] sm:$0xff]
  %v3950 = vld [vmem:[#allocation4 + $0x7a0] sm:$0xff]
  %v3951 = vld [vmem:[#allocation4 + $0x7a8] sm:$0xff]
  %v3952 = vld [vmem:[#allocation4 + $0x7b0] sm:$0xff]
  %v3953 = vld [vmem:[#allocation4 + $0x7b8] sm:$0xff]
  %v3954 = vld [vmem:[#allocation4 + $0x7c0] sm:$0xff]
  %v3955 = vld [vmem:[#allocation4 + $0x7c8] sm:$0xff]
  %v3956 = vld [vmem:[#allocation4 + $0x7d0] sm:$0xff]
  %v3957 = vld [vmem:[#allocation4 + $0x7d8] sm:$0xff]
  %v3958 = vld [vmem:[#allocation4 + $0x7e0] sm:$0xff]
  %v3959 = vld [vmem:[#allocation4 + $0x7e8] sm:$0xff]
  %v3960 = vld [vmem:[#allocation4 + $0x7f0] sm:$0xff]
  %v3961 = vld [vmem:[#allocation4 + $0x7f8] sm:$0xff]
  %v3962 = vld [vmem:[#allocation4 + $0x800] sm:$0xff]
  %v3963 = vld [vmem:[#allocation4 + $0x808] sm:$0xff]
  %v3964 = vld [vmem:[#allocation4 + $0x810] sm:$0xff]
  %v3965 = vld [vmem:[#allocation4 + $0x818] sm:$0xff]
  %v3966 = vld [vmem:[#allocation4 + $0x820] sm:$0xff]
  %v3967 = vld [vmem:[#allocation4 + $0x828] sm:$0xff]
  %v3968 = vld [vmem:[#allocation4 + $0x830] sm:$0xff]
  %v3969 = vld [vmem:[#allocation4 + $0x838] sm:$0xff]
  %v3970 = vld [vmem:[#allocation4 + $0x840] sm:$0xff]
  %v3971 = vld [vmem:[#allocation4 + $0x848] sm:$0xff]
  %v3972 = vld [vmem:[#allocation4 + $0x850] sm:$0xff]
  %v3973 = vld [vmem:[#allocation4 + $0x858] sm:$0xff]
  %v3974 = vld [vmem:[#allocation4 + $0x860] sm:$0xff]
  %v3975 = vld [vmem:[#allocation4 + $0x868] sm:$0xff]
  %v3976 = vld [vmem:[#allocation4 + $0x870] sm:$0xff]
  %v3977 = vld [vmem:[#allocation4 + $0x878] sm:$0xff]
  %v3978 = vld [vmem:[#allocation4 + $0x880] sm:$0xff]
  %v3979 = vld [vmem:[#allocation4 + $0x888] sm:$0xff]
  %v3980 = vld [vmem:[#allocation4 + $0x890] sm:$0xff]
  %v3981 = vld [vmem:[#allocation4 + $0x898] sm:$0xff]
  %v3982 = vld [vmem:[#allocation4 + $0x8a0] sm:$0xff]
  %v3983 = vld [vmem:[#allocation4 + $0x8a8] sm:$0xff]
  %v3984 = vld [vmem:[#allocation4 + $0x8b0] sm:$0xff]
  %v3985 = vld [vmem:[#allocation4 + $0x8b8] sm:$0xff]
  %v3986 = vld [vmem:[#allocation4 + $0x8c0] sm:$0xff]
  %v3987 = vld [vmem:[#allocation4 + $0x8c8] sm:$0xff]
  %v3988 = vld [vmem:[#allocation4 + $0x8d0] sm:$0xff]
  %v3989 = vld [vmem:[#allocation4 + $0x8d8] sm:$0xff]
  %v3990 = vld [vmem:[#allocation4 + $0x8e0] sm:$0xff]
  %v3991 = vld [vmem:[#allocation4 + $0x8e8] sm:$0xff]
  %v3992 = vld [vmem:[#allocation4 + $0x8f0] sm:$0xff]
  %v3993 = vld [vmem:[#allocation4 + $0x8f8] sm:$0xff]
  %v3994 = vld [vmem:[#allocation4 + $0x900] sm:$0xff]
  %v3995 = vld [vmem:[#allocation4 + $0x908] sm:$0xff]
  %v3996 = vld [vmem:[#allocation4 + $0x910] sm:$0xff]
  %v3997 = vld [vmem:[#allocation4 + $0x918] sm:$0xff]
  %v3998 = vld [vmem:[#allocation4 + $0x920] sm:$0xff]
  %v3999 = vld [vmem:[#allocation4 + $0x928] sm:$0xff]
  %v4000 = vld [vmem:[#allocation4 + $0x930] sm:$0xff]
  %v4001 = vld [vmem:[#allocation4 + $0x938] sm:$0xff]
  %v4002 = vld [vmem:[#allocation4 + $0x940] sm:$0xff]
  %v4003 = vld [vmem:[#allocation4 + $0x948] sm:$0xff]
  %v4004 = vld [vmem:[#allocation4 + $0x950] sm:$0xff]
  %v4005 = vld [vmem:[#allocation4 + $0x958] sm:$0xff]
  %v4006 = vld [vmem:[#allocation4 + $0x960] sm:$0xff]
  %v4007 = vld [vmem:[#allocation4 + $0x968] sm:$0xff]
  %v4008 = vld [vmem:[#allocation4 + $0x970] sm:$0xff]
  %v4009 = vld [vmem:[#allocation4 + $0x978] sm:$0xff]
  %v4010 = vld [vmem:[#allocation4 + $0x980] sm:$0xff]
  %v4011 = vld [vmem:[#allocation4 + $0x988] sm:$0xff]
  %v4012 = vld [vmem:[#allocation4 + $0x990] sm:$0xff]
  %v4013 = vld [vmem:[#allocation4 + $0x998] sm:$0xff]
  %v4014 = vld [vmem:[#allocation4 + $0x9a0] sm:$0xff]
  %v4015 = vld [vmem:[#allocation4 + $0x9a8] sm:$0xff]
  %v4016 = vld [vmem:[#allocation4 + $0x9b0] sm:$0xff]
  %v4017 = vld [vmem:[#allocation4 + $0x9b8] sm:$0xff]
  %v4018 = vld [vmem:[#allocation4 + $0x9c0] sm:$0xff]
  %v4019 = vld [vmem:[#allocation4 + $0x9c8] sm:$0xff]
  %v4020 = vld [vmem:[#allocation4 + $0x9d0] sm:$0xff]
  %v4021 = vld [vmem:[#allocation4 + $0x9d8] sm:$0xff]
  %v4022 = vld [vmem:[#allocation4 + $0x9e0] sm:$0xff]
  %v4023 = vld [vmem:[#allocation4 + $0x9e8] sm:$0xff]
  %v4024 = vld [vmem:[#allocation4 + $0x9f0] sm:$0xff]
  %v4025 = vld [vmem:[#allocation4 + $0x9f8] sm:$0xff]
  %v4026 = vld [vmem:[#allocation4 + $0xa00] sm:$0xff]
  %v4027 = vld [vmem:[#allocation4 + $0xa08] sm:$0xff]
  %v4028 = vld [vmem:[#allocation4 + $0xa10] sm:$0xff]
  %v4029 = vld [vmem:[#allocation4 + $0xa18] sm:$0xff]
  %v4030 = vld [vmem:[#allocation4 + $0xa20] sm:$0xff]
  %v4031 = vld [vmem:[#allocation4 + $0xa28] sm:$0xff]
  %v4032 = vld [vmem:[#allocation4 + $0xa30] sm:$0xff]
  %v4033 = vld [vmem:[#allocation4 + $0xa38] sm:$0xff]
  %v4034 = vld [vmem:[#allocation4 + $0xa40] sm:$0xff]
  %v4035 = vld [vmem:[#allocation4 + $0xa48] sm:$0xff]
  %v4036 = vld [vmem:[#allocation4 + $0xa50] sm:$0xff]
  %v4037 = vld [vmem:[#allocation4 + $0xa58] sm:$0xff]
  %v4038 = vld [vmem:[#allocation4 + $0xa60] sm:$0xff]
  %v4039 = vld [vmem:[#allocation4 + $0xa68] sm:$0xff]
  %v4040 = vld [vmem:[#allocation4 + $0xa70] sm:$0xff]
  %v4041 = vld [vmem:[#allocation4 + $0xa78] sm:$0xff]
  %v4042 = vld [vmem:[#allocation4 + $0xa80] sm:$0xff]
  %v4043 = vld [vmem:[#allocation4 + $0xa88] sm:$0xff]
  %v4044 = vld [vmem:[#allocation4 + $0xa90] sm:$0xff]
  %v4045 = vld [vmem:[#allocation4 + $0xa98] sm:$0xff]
  %v4046 = vld [vmem:[#allocation4 + $0xaa0] sm:$0xff]
  %v4047 = vld [vmem:[#allocation4 + $0xaa8] sm:$0xff]
  %v4048 = vld [vmem:[#allocation4 + $0xab0] sm:$0xff]
  %v4049 = vld [vmem:[#allocation4 + $0xab8] sm:$0xff]
  %v4050 = vld [vmem:[#allocation4 + $0xac0] sm:$0xff]
  %v4051 = vld [vmem:[#allocation4 + $0xac8] sm:$0xff]
  %v4052 = vld [vmem:[#allocation4 + $0xad0] sm:$0xff]
  %v4053 = vld [vmem:[#allocation4 + $0xad8] sm:$0xff]
  %v4054 = vld [vmem:[#allocation4 + $0xae0] sm:$0xff]
  %v4055 = vld [vmem:[#allocation4 + $0xae8] sm:$0xff]
  %v4056 = vld [vmem:[#allocation4 + $0xaf0] sm:$0xff]
  %v4057 = vld [vmem:[#allocation4 + $0xaf8] sm:$0xff]
  %v4058 = vld [vmem:[#allocation4 + $0xb00] sm:$0xff]
  %v4059 = vld [vmem:[#allocation4 + $0xb08] sm:$0xff]
  %v4060 = vld [vmem:[#allocation4 + $0xb10] sm:$0xff]
  %v4061 = vld [vmem:[#allocation4 + $0xb18] sm:$0xff]
  %v4062 = vld [vmem:[#allocation4 + $0xb20] sm:$0xff]
  %v4063 = vld [vmem:[#allocation4 + $0xb28] sm:$0xff]
  %v4064 = vld [vmem:[#allocation4 + $0xb30] sm:$0xff]
  %v4065 = vld [vmem:[#allocation4 + $0xb38] sm:$0xff]
  %v4066 = vld [vmem:[#allocation4 + $0xb40] sm:$0xff]
  %v4067 = vld [vmem:[#allocation4 + $0xb48] sm:$0xff]
  %v4068 = vld [vmem:[#allocation4 + $0xb50] sm:$0xff]
  %v4069 = vld [vmem:[#allocation4 + $0xb58] sm:$0xff]
  %v4070 = vld [vmem:[#allocation4 + $0xb60] sm:$0xff]
  %v4071 = vld [vmem:[#allocation4 + $0xb68] sm:$0xff]
  %v4072 = vld [vmem:[#allocation4 + $0xb70] sm:$0xff]
  %v4073 = vld [vmem:[#allocation4 + $0xb78] sm:$0xff]
  %v4074 = vld [vmem:[#allocation4 + $0xb80] sm:$0xff]
  %v4075 = vld [vmem:[#allocation4 + $0xb88] sm:$0xff]
  %v4076 = vld [vmem:[#allocation4 + $0xb90] sm:$0xff]
  %v4077 = vld [vmem:[#allocation4 + $0xb98] sm:$0xff]
  %v4078 = vld [vmem:[#allocation4 + $0xba0] sm:$0xff]
  %v4079 = vld [vmem:[#allocation4 + $0xba8] sm:$0xff]
  %v4080 = vld [vmem:[#allocation4 + $0xbb0] sm:$0xff]
  %v4081 = vld [vmem:[#allocation4 + $0xbb8] sm:$0xff]
  %v4082 = vld [vmem:[#allocation4 + $0xbc0] sm:$0xff]
  %v4083 = vld [vmem:[#allocation4 + $0xbc8] sm:$0xff]
  %v4084 = vld [vmem:[#allocation4 + $0xbd0] sm:$0xff]
  %v4085 = vld [vmem:[#allocation4 + $0xbd8] sm:$0xff]
  %v4086 = vld [vmem:[#allocation4 + $0xbe0] sm:$0xff]
  %v4087 = vld [vmem:[#allocation4 + $0xbe8] sm:$0xff]
  %v4088 = vld [vmem:[#allocation4 + $0xbf0] sm:$0xff]
  %v4089 = vld [vmem:[#allocation4 + $0xbf8] sm:$0xff]
  %v4090 = vld [vmem:[#allocation4 + $0xc00] sm:$0xff]
  %v4091 = vld [vmem:[#allocation4 + $0xc08] sm:$0xff]
  %v4092 = vld [vmem:[#allocation4 + $0xc10] sm:$0xff]
  %v4093 = vld [vmem:[#allocation4 + $0xc18] sm:$0xff]
  %v4094 = vld [vmem:[#allocation4 + $0xc20] sm:$0xff]
  %v4095 = vld [vmem:[#allocation4 + $0xc28] sm:$0xff]
  %v4096 = vld [vmem:[#allocation4 + $0xc30] sm:$0xff]
  %v4097 = vld [vmem:[#allocation4 + $0xc38] sm:$0xff]
  %v4098 = vld [vmem:[#allocation4 + $0xc40] sm:$0xff]
  %v4099 = vld [vmem:[#allocation4 + $0xc48] sm:$0xff]
  %v4100 = vld [vmem:[#allocation4 + $0xc50] sm:$0xff]
  %v4101 = vld [vmem:[#allocation4 + $0xc58] sm:$0xff]
  %v4102 = vld [vmem:[#allocation4 + $0xc60] sm:$0xff]
  %v4103 = vld [vmem:[#allocation4 + $0xc68] sm:$0xff]
  %v4104 = vld [vmem:[#allocation4 + $0xc70] sm:$0xff]
  %v4105 = vld [vmem:[#allocation4 + $0xc78] sm:$0xff]
  %v4106 = vld [vmem:[#allocation4 + $0xc80] sm:$0xff]
  %v4107 = vld [vmem:[#allocation4 + $0xc88] sm:$0xff]
  %v4108 = vld [vmem:[#allocation4 + $0xc90] sm:$0xff]
  %v4109 = vld [vmem:[#allocation4 + $0xc98] sm:$0xff]
  %v4110 = vld [vmem:[#allocation4 + $0xca0] sm:$0xff]
  %v4111 = vld [vmem:[#allocation4 + $0xca8] sm:$0xff]
  %v4112 = vld [vmem:[#allocation4 + $0xcb0] sm:$0xff]
  %v4113 = vld [vmem:[#allocation4 + $0xcb8] sm:$0xff]
  %v4114 = vld [vmem:[#allocation4 + $0xcc0] sm:$0xff]
  %v4115 = vld [vmem:[#allocation4 + $0xcc8] sm:$0xff]
  %v4116 = vld [vmem:[#allocation4 + $0xcd0] sm:$0xff]
  %v4117 = vld [vmem:[#allocation4 + $0xcd8] sm:$0xff]
  %v4118 = vld [vmem:[#allocation4 + $0xce0] sm:$0xff]
  %v4119 = vld [vmem:[#allocation4 + $0xce8] sm:$0xff]
  %v4120 = vld [vmem:[#allocation4 + $0xcf0] sm:$0xff]
  %v4121 = vld [vmem:[#allocation4 + $0xcf8] sm:$0xff]
  %v4122 = vld [vmem:[#allocation4 + $0xd00] sm:$0xff]
  %v4123 = vld [vmem:[#allocation4 + $0xd08] sm:$0xff]
  %v4124 = vld [vmem:[#allocation4 + $0xd10] sm:$0xff]
  %v4125 = vld [vmem:[#allocation4 + $0xd18] sm:$0xff]
  %v4126 = vld [vmem:[#allocation4 + $0xd20] sm:$0xff]
  %v4127 = vld [vmem:[#allocation4 + $0xd28] sm:$0xff]
  %v4128 = vld [vmem:[#allocation4 + $0xd30] sm:$0xff]
  %v4129 = vld [vmem:[#allocation4 + $0xd38] sm:$0xff]
  %v4130 = vld [vmem:[#allocation4 + $0xd40] sm:$0xff]
  %v4131 = vld [vmem:[#allocation4 + $0xd48] sm:$0xff]
  %v4132 = vld [vmem:[#allocation4 + $0xd50] sm:$0xff]
  %v4133 = vld [vmem:[#allocation4 + $0xd58] sm:$0xff]
  %v4134 = vld [vmem:[#allocation4 + $0xd60] sm:$0xff]
  %v4135 = vld [vmem:[#allocation4 + $0xd68] sm:$0xff]
  %v4136 = vld [vmem:[#allocation4 + $0xd70] sm:$0xff]
  %v4137 = vld [vmem:[#allocation4 + $0xd78] sm:$0xff]
  %v4138 = vld [vmem:[#allocation4 + $0xd80] sm:$0xff]
  %v4139 = vld [vmem:[#allocation4 + $0xd88] sm:$0xff]
  %v4140 = vld [vmem:[#allocation4 + $0xd90] sm:$0xff]
  %v4141 = vld [vmem:[#allocation4 + $0xd98] sm:$0xff]
  %v4142 = vld [vmem:[#allocation4 + $0xda0] sm:$0xff]
  %v4143 = vld [vmem:[#allocation4 + $0xda8] sm:$0xff]
  %v4144 = vld [vmem:[#allocation4 + $0xdb0] sm:$0xff]
  %v4145 = vld [vmem:[#allocation4 + $0xdb8] sm:$0xff]
  %v4146 = vld [vmem:[#allocation4 + $0xdc0] sm:$0xff]
  %v4147 = vld [vmem:[#allocation4 + $0xdc8] sm:$0xff]
  %v4148 = vld [vmem:[#allocation4 + $0xdd0] sm:$0xff]
  %v4149 = vld [vmem:[#allocation4 + $0xdd8] sm:$0xff]
  %v4150 = vld [vmem:[#allocation4 + $0xde0] sm:$0xff]
  %v4151 = vld [vmem:[#allocation4 + $0xde8] sm:$0xff]
  %v4152 = vld [vmem:[#allocation4 + $0xdf0] sm:$0xff]
  %v4153 = vld [vmem:[#allocation4 + $0xdf8] sm:$0xff]
  %v4154 = vld [vmem:[#allocation4 + $0xe00] sm:$0xff]
  %v4155 = vld [vmem:[#allocation4 + $0xe08] sm:$0xff]
  %v4156 = vld [vmem:[#allocation4 + $0xe10] sm:$0xff]
  %v4157 = vld [vmem:[#allocation4 + $0xe18] sm:$0xff]
  %v4158 = vld [vmem:[#allocation4 + $0xe20] sm:$0xff]
  %v4159 = vld [vmem:[#allocation4 + $0xe28] sm:$0xff]
  %v4160 = vld [vmem:[#allocation4 + $0xe30] sm:$0xff]
  %v4161 = vld [vmem:[#allocation4 + $0xe38] sm:$0xff]
  %v4162 = vld [vmem:[#allocation4 + $0xe40] sm:$0xff]
  %v4163 = vld [vmem:[#allocation4 + $0xe48] sm:$0xff]
  %v4164 = vld [vmem:[#allocation4 + $0xe50] sm:$0xff]
  %v4165 = vld [vmem:[#allocation4 + $0xe58] sm:$0xff]
  %v4166 = vld [vmem:[#allocation4 + $0xe60] sm:$0xff]
  %v4167 = vld [vmem:[#allocation4 + $0xe68] sm:$0xff]
  %v4168 = vld [vmem:[#allocation4 + $0xe70] sm:$0xff]
  %v4169 = vld [vmem:[#allocation4 + $0xe78] sm:$0xff]
  %v4170 = vld [vmem:[#allocation4 + $0xe80] sm:$0xff]
  %v4171 = vld [vmem:[#allocation4 + $0xe88] sm:$0xff]
  %v4172 = vld [vmem:[#allocation4 + $0xe90] sm:$0xff]
  %v4173 = vld [vmem:[#allocation4 + $0xe98] sm:$0xff]
  %v4174 = vld [vmem:[#allocation4 + $0xea0] sm:$0xff]
  %v4175 = vld [vmem:[#allocation4 + $0xea8] sm:$0xff]
  %v4176 = vld [vmem:[#allocation4 + $0xeb0] sm:$0xff]
  %v4177 = vld [vmem:[#allocation4 + $0xeb8] sm:$0xff]
  %v4178 = vld [vmem:[#allocation4 + $0xec0] sm:$0xff]
  %v4179 = vld [vmem:[#allocation4 + $0xec8] sm:$0xff]
  %v4180 = vld [vmem:[#allocation4 + $0xed0] sm:$0xff]
  %v4181 = vld [vmem:[#allocation4 + $0xed8] sm:$0xff]
  %v4182 = vld [vmem:[#allocation4 + $0xee0] sm:$0xff]
  %v4183 = vld [vmem:[#allocation4 + $0xee8] sm:$0xff]
  %v4184 = vld [vmem:[#allocation4 + $0xef0] sm:$0xff]
  %v4185 = vld [vmem:[#allocation4 + $0xef8] sm:$0xff]
  %v4186 = vld [vmem:[#allocation4 + $0xf00] sm:$0xff]
  %v4187 = vld [vmem:[#allocation4 + $0xf08] sm:$0xff]
  %v4188 = vld [vmem:[#allocation4 + $0xf10] sm:$0xff]
  %v4189 = vld [vmem:[#allocation4 + $0xf18] sm:$0xff]
  %v4190 = vld [vmem:[#allocation4 + $0xf20] sm:$0xff]
  %v4191 = vld [vmem:[#allocation4 + $0xf28] sm:$0xff]
  %v4192 = vld [vmem:[#allocation4 + $0xf30] sm:$0xff]
  %v4193 = vld [vmem:[#allocation4 + $0xf38] sm:$0xff]
  %v4194 = vld [vmem:[#allocation4 + $0xf40] sm:$0xff]
  %v4195 = vld [vmem:[#allocation4 + $0xf48] sm:$0xff]
  %v4196 = vld [vmem:[#allocation4 + $0xf50] sm:$0xff]
  %v4197 = vld [vmem:[#allocation4 + $0xf58] sm:$0xff]
  %v4198 = vld [vmem:[#allocation4 + $0xf60] sm:$0xff]
  %v4199 = vld [vmem:[#allocation4 + $0xf68] sm:$0xff]
  %v4200 = vld [vmem:[#allocation4 + $0xf70] sm:$0xff]
  %v4201 = vld [vmem:[#allocation4 + $0xf78] sm:$0xff]
  %v4202 = vld [vmem:[#allocation4 + $0xf80] sm:$0xff]
  %v4203 = vld [vmem:[#allocation4 + $0xf88] sm:$0xff]
  %v4204 = vld [vmem:[#allocation4 + $0xf90] sm:$0xff]
  %v4205 = vld [vmem:[#allocation4 + $0xf98] sm:$0xff]
  %v4206 = vld [vmem:[#allocation4 + $0xfa0] sm:$0xff]
  %v4207 = vld [vmem:[#allocation4 + $0xfa8] sm:$0xff]
  %v4208 = vld [vmem:[#allocation4 + $0xfb0] sm:$0xff]
  %v4209 = vld [vmem:[#allocation4 + $0xfb8] sm:$0xff]
  %v4210 = vld [vmem:[#allocation4 + $0xfc0] sm:$0xff]
  %v4211 = vld [vmem:[#allocation4 + $0xfc8] sm:$0xff]
  %v4212 = vld [vmem:[#allocation4 + $0xfd0] sm:$0xff]
  %v4213 = vld [vmem:[#allocation4 + $0xfd8] sm:$0xff]
  %v4214 = vld [vmem:[#allocation4 + $0xfe0] sm:$0xff]
  %v4215 = vld [vmem:[#allocation4 + $0xfe8] sm:$0xff]
  %v4216 = vld [vmem:[#allocation4 + $0xff0] sm:$0xff]
  %v4217 = vld [vmem:[#allocation4 + $0xff8] sm:$0xff]
  %v4218 = vld [vmem:[%s8] sm:$0xf]
  %v4220 = vlaneseq
  %v4221 = vshrl.u32 %v4220, 7
  %v4222 = vsub.s32 0, %v4221
  %v4223 = vrot.slane %v4218, %v4222
  %v4224 = vlaneseq
  %v4225 = vshrl.u32 %v4224, 7
  %v4226 = vsub.s32 1, %v4225
  %v4227 = vrot.slane %v4218, %v4226
  %v4228 = vlaneseq
  %v4229 = vshrl.u32 %v4228, 7
  %v4230 = vsub.s32 2, %v4229
  %v4231 = vrot.slane %v4218, %v4230
  %v4232 = vlaneseq
  %v4233 = vshrl.u32 %v4232, 7
  %v4234 = vsub.s32 3, %v4233
  %v4235 = vrot.slane %v4218, %v4234
  %4240 = vmatprep.subr.mxu0 %v3707
  %4241 = vmatpush1.msra.mxu0 %v3706
  %4242 = vmatprep.subr.mxu0 %v3711
  %4243 = vmatpush1.msra.mxu0 %v3710
  %4244 = vmatprep.subr.mxu0 %v3715
  %4245 = vmatpush1.msra.mxu0 %v3714
  %4246 = vmatprep.subr.mxu0 %v3719
  %4247 = vmatpush1.msra.mxu0 %v3718
  %4248 = vmatprep.subr.mxu0 %v3723
  %4249 = vmatpush1.msra.mxu0 %v3722
  %4250 = vmatprep.subr.mxu0 %v3727
  %4251 = vmatpush1.msra.mxu0 %v3726
  %4252 = vmatprep.subr.mxu0 %v3731
  %4253 = vmatpush1.msra.mxu0 %v3730
  %4254 = vmatprep.subr.mxu0 %v3735
  %4255 = vmatpush1.msra.mxu0 %v3734
  %4256 = vmatprep.subr.mxu0 %v3739
  %4257 = vmatpush1.msra.mxu0 %v3738
  %4258 = vmatprep.subr.mxu0 %v3743
  %4259 = vmatpush1.msra.mxu0 %v3742
  %4260 = vmatprep.subr.mxu0 %v3747
  %4261 = vmatpush1.msra.mxu0 %v3746
  %4262 = vmatprep.subr.mxu0 %v3751
  %4263 = vmatpush1.msra.mxu0 %v3750
  %4264 = vmatprep.subr.mxu0 %v3755
  %4265 = vmatpush1.msra.mxu0 %v3754
  %4266 = vmatprep.subr.mxu0 %v3759
  %4267 = vmatpush1.msra.mxu0 %v3758
  %4268 = vmatprep.subr.mxu0 %v3763
  %4269 = vmatpush1.msra.mxu0 %v3762
  %4270 = vmatprep.subr.mxu0 %v3767
  %4271 = vmatpush1.msra.mxu0 %v3766
  %4272 = vmatprep.subr.mxu0 %v3771
  %4273 = vmatpush1.msra.mxu0 %v3770
  %4274 = vmatprep.subr.mxu0 %v3775
  %4275 = vmatpush1.msra.mxu0 %v3774
  %4276 = vmatprep.subr.mxu0 %v3779
  %4277 = vmatpush1.msra.mxu0 %v3778
  %4278 = vmatprep.subr.mxu0 %v3783
  %4279 = vmatpush1.msra.mxu0 %v3782
  %4280 = vmatprep.subr.mxu0 %v3787
  %4281 = vmatpush1.msra.mxu0 %v3786
  %4282 = vmatprep.subr.mxu0 %v3791
  %4283 = vmatpush1.msra.mxu0 %v3790
  %4284 = vmatprep.subr.mxu0 %v3795
  %4285 = vmatpush1.msra.mxu0 %v3794
  %4286 = vmatprep.subr.mxu0 %v3799
  %4287 = vmatpush1.msra.mxu0 %v3798
  %4288 = vmatprep.subr.mxu0 %v3803
  %4289 = vmatpush1.msra.mxu0 %v3802
  %4290 = vmatprep.subr.mxu0 %v3807
  %4291 = vmatpush1.msra.mxu0 %v3806
  %4292 = vmatprep.subr.mxu0 %v3811
  %4293 = vmatpush1.msra.mxu0 %v3810
  %4294 = vmatprep.subr.mxu0 %v3815
  %4295 = vmatpush1.msra.mxu0 %v3814
  %4296 = vmatprep.subr.mxu0 %v3819
  %4297 = vmatpush1.msra.mxu0 %v3818
  %4298 = vmatprep.subr.mxu0 %v3823
  %4299 = vmatpush1.msra.mxu0 %v3822
  %4300 = vmatprep.subr.mxu0 %v3827
  %4301 = vmatpush1.msra.mxu0 %v3826
  %4302 = vmatprep.subr.mxu0 %v3831
  %4303 = vmatpush1.msra.mxu0 %v3830
  %4304 = vmatprep.mubr.f32.mxu0 %v3695
  %4305 = vmatmul.mubr.f32.gmra.mrb[0].mxu0 %v3694
  %v4306 = vpop.f32.mrb[0].mxu0
  %v4307 = vadd.f32 %v4223, %v4306
  %v4308 = vpop.f32.mrb[0].mxu0
  %v4309 = vadd.f32 %v4227, %v4308
  %4310 = vdwg.mxu0
  %4311 = vmatprep.subr.mxu0 %v3835
  %4312 = vmatpush1.msra.mxu0 %v3834
  %4313 = vmatprep.subr.mxu0 %v3839
  %4314 = vmatpush1.msra.mxu0 %v3838
  %4315 = vmatprep.subr.mxu0 %v3843
  %4316 = vmatpush1.msra.mxu0 %v3842
  %4317 = vmatprep.subr.mxu0 %v3847
  %4318 = vmatpush1.msra.mxu0 %v3846
  %4319 = vmatprep.subr.mxu0 %v3851
  %4320 = vmatpush1.msra.mxu0 %v3850
  %4321 = vmatprep.subr.mxu0 %v3855
  %4322 = vmatpush1.msra.mxu0 %v3854
  %4323 = vmatprep.subr.mxu0 %v3859
  %4324 = vmatpush1.msra.mxu0 %v3858
  %4325 = vmatprep.subr.mxu0 %v3863
  %4326 = vmatpush1.msra.mxu0 %v3862
  %4327 = vmatprep.subr.mxu0 %v3867
  %4328 = vmatpush1.msra.mxu0 %v3866
  %4329 = vmatprep.subr.mxu0 %v3871
  %4330 = vmatpush1.msra.mxu0 %v3870
  %4331 = vmatprep.subr.mxu0 %v3875
  %4332 = vmatpush1.msra.mxu0 %v3874
  %4333 = vmatprep.subr.mxu0 %v3879
  %4334 = vmatpush1.msra.mxu0 %v3878
  %4335 = vmatprep.subr.mxu0 %v3883
  %4336 = vmatpush1.msra.mxu0 %v3882
  %4337 = vmatprep.subr.mxu0 %v3887
  %4338 = vmatpush1.msra.mxu0 %v3886
  %4339 = vmatprep.subr.mxu0 %v3891
  %4340 = vmatpush1.msra.mxu0 %v3890
  %4341 = vmatprep.subr.mxu0 %v3895
  %4342 = vmatpush1.msra.mxu0 %v3894
  %4343 = vmatprep.subr.mxu0 %v3899
  %4344 = vmatpush1.msra.mxu0 %v3898
  %4345 = vmatprep.subr.mxu0 %v3903
  %4346 = vmatpush1.msra.mxu0 %v3902
  %4347 = vmatprep.subr.mxu0 %v3907
  %4348 = vmatpush1.msra.mxu0 %v3906
  %4349 = vmatprep.subr.mxu0 %v3911
  %4350 = vmatpush1.msra.mxu0 %v3910
  %4351 = vmatprep.subr.mxu0 %v3915
  %4352 = vmatpush1.msra.mxu0 %v3914
  %4353 = vmatprep.subr.mxu0 %v3919
  %4354 = vmatpush1.msra.mxu0 %v3918
  %4355 = vmatprep.subr.mxu0 %v3923
  %4356 = vmatpush1.msra.mxu0 %v3922
  %4357 = vmatprep.subr.mxu0 %v3927
  %4358 = vmatpush1.msra.mxu0 %v3926
  %4359 = vmatprep.subr.mxu0 %v3931
  %4360 = vmatpush1.msra.mxu0 %v3930
  %4361 = vmatprep.subr.mxu0 %v3935
  %4362 = vmatpush1.msra.mxu0 %v3934
  %4363 = vmatprep.subr.mxu0 %v3939
  %4364 = vmatpush1.msra.mxu0 %v3938
  %4365 = vmatprep.subr.mxu0 %v3943
  %4366 = vmatpush1.msra.mxu0 %v3942
  %4367 = vmatprep.subr.mxu0 %v3947
  %4368 = vmatpush1.msra.mxu0 %v3946
  %4369 = vmatprep.subr.mxu0 %v3951
  %4370 = vmatpush1.msra.mxu0 %v3950
  %4371 = vmatprep.subr.mxu0 %v3955
  %4372 = vmatpush1.msra.mxu0 %v3954
  %4373 = vmatprep.subr.mxu0 %v3959
  %4374 = vmatpush1.msra.mxu0 %v3958
  %4375 = vmatprep.mubr.f32.mxu0 %v3697
  %4376 = vmatmul.mubr.f32.gmra.mrb[0].mxu0 %v3696
  %v4377 = vpop.f32.mrb[0].mxu0
  %v4378 = vadd.f32 %v4307, %v4377
  %v4379 = vpop.f32.mrb[0].mxu0
  %v4380 = vadd.f32 %v4309, %v4379
  %4381 = vdwg.mxu0
  %4382 = vmatprep.subr.mxu0 %v3963
  %4383 = vmatpush1.msra.mxu0 %v3962
  %4384 = vmatprep.subr.mxu0 %v3967
  %4385 = vmatpush1.msra.mxu0 %v3966
  %4386 = vmatprep.subr.mxu0 %v3971
  %4387 = vmatpush1.msra.mxu0 %v3970
  %4388 = vmatprep.subr.mxu0 %v3975
  %4389 = vmatpush1.msra.mxu0 %v3974
  %4390 = vmatprep.subr.mxu0 %v3979
  %4391 = vmatpush1.msra.mxu0 %v3978
  %4392 = vmatprep.subr.mxu0 %v3983
  %4393 = vmatpush1.msra.mxu0 %v3982
  %4394 = vmatprep.subr.mxu0 %v3987
  %4395 = vmatpush1.msra.mxu0 %v3986
  %4396 = vmatprep.subr.mxu0 %v3991
  %4397 = vmatpush1.msra.mxu0 %v3990
  %4398 = vmatprep.subr.mxu0 %v3995
  %4399 = vmatpush1.msra.mxu0 %v3994
  %4400 = vmatprep.subr.mxu0 %v3999
  %4401 = vmatpush1.msra.mxu0 %v3998
  %4402 = vmatprep.subr.mxu0 %v4003
  %4403 = vmatpush1.msra.mxu0 %v4002
  %4404 = vmatprep.subr.mxu0 %v4007
  %4405 = vmatpush1.msra.mxu0 %v4006
  %4406 = vmatprep.subr.mxu0 %v4011
  %4407 = vmatpush1.msra.mxu0 %v4010
  %4408 = vmatprep.subr.mxu0 %v4015
  %4409 = vmatpush1.msra.mxu0 %v4014
  %4410 = vmatprep.subr.mxu0 %v4019
  %4411 = vmatpush1.msra.mxu0 %v4018
  %4412 = vmatprep.subr.mxu0 %v4023
  %4413 = vmatpush1.msra.mxu0 %v4022
  %4414 = vmatprep.subr.mxu0 %v4027
  %4415 = vmatpush1.msra.mxu0 %v4026
  %4416 = vmatprep.subr.mxu0 %v4031
  %4417 = vmatpush1.msra.mxu0 %v4030
  %4418 = vmatprep.subr.mxu0 %v4035
  %4419 = vmatpush1.msra.mxu0 %v4034
  %4420 = vmatprep.subr.mxu0 %v4039
  %4421 = vmatpush1.msra.mxu0 %v4038
  %4422 = vmatprep.subr.mxu0 %v4043
  %4423 = vmatpush1.msra.mxu0 %v4042
  %4424 = vmatprep.subr.mxu0 %v4047
  %4425 = vmatpush1.msra.mxu0 %v4046
  %4426 = vmatprep.subr.mxu0 %v4051
  %4427 = vmatpush1.msra.mxu0 %v4050
  %4428 = vmatprep.subr.mxu0 %v4055
  %4429 = vmatpush1.msra.mxu0 %v4054
  %4430 = vmatprep.subr.mxu0 %v4059
  %4431 = vmatpush1.msra.mxu0 %v4058
  %4432 = vmatprep.subr.mxu0 %v4063
  %4433 = vmatpush1.msra.mxu0 %v4062
  %4434 = vmatprep.subr.mxu0 %v4067
  %4435 = vmatpush1.msra.mxu0 %v4066
  %4436 = vmatprep.subr.mxu0 %v4071
  %4437 = vmatpush1.msra.mxu0 %v4070
  %4438 = vmatprep.subr.mxu0 %v4075
  %4439 = vmatpush1.msra.mxu0 %v4074
  %4440 = vmatprep.subr.mxu0 %v4079
  %4441 = vmatpush1.msra.mxu0 %v4078
  %4442 = vmatprep.subr.mxu0 %v4083
  %4443 = vmatpush1.msra.mxu0 %v4082
  %4444 = vmatprep.subr.mxu0 %v4087
  %4445 = vmatpush1.msra.mxu0 %v4086
  %4446 = vmatprep.mubr.f32.mxu0 %v3699
  %4447 = vmatmul.mubr.f32.gmra.mrb[0].mxu0 %v3698
  %v4448 = vpop.f32.mrb[0].mxu0
  %v4449 = vadd.f32 %v4378, %v4448
  %v4450 = vpop.f32.mrb[0].mxu0
  %v4451 = vadd.f32 %v4380, %v4450
  %4452 = vdwg.mxu0
  %4453 = vmatprep.subr.mxu0 %v4091
  %4454 = vmatpush1.msra.mxu0 %v4090
  %4455 = vmatprep.subr.mxu0 %v4095
  %4456 = vmatpush1.msra.mxu0 %v4094
  %4457 = vmatprep.subr.mxu0 %v4099
  %4458 = vmatpush1.msra.mxu0 %v4098
  %4459 = vmatprep.subr.mxu0 %v4103
  %4460 = vmatpush1.msra.mxu0 %v4102
  %4461 = vmatprep.subr.mxu0 %v4107
  %4462 = vmatpush1.msra.mxu0 %v4106
  %4463 = vmatprep.subr.mxu0 %v4111
  %4464 = vmatpush1.msra.mxu0 %v4110
  %4465 = vmatprep.subr.mxu0 %v4115
  %4466 = vmatpush1.msra.mxu0 %v4114
  %4467 = vmatprep.subr.mxu0 %v4119
  %4468 = vmatpush1.msra.mxu0 %v4118
  %4469 = vmatprep.subr.mxu0 %v4123
  %4470 = vmatpush1.msra.mxu0 %v4122
  %4471 = vmatprep.subr.mxu0 %v4127
  %4472 = vmatpush1.msra.mxu0 %v4126
  %4473 = vmatprep.subr.mxu0 %v4131
  %4474 = vmatpush1.msra.mxu0 %v4130
  %4475 = vmatprep.subr.mxu0 %v4135
  %4476 = vmatpush1.msra.mxu0 %v4134
  %4477 = vmatprep.subr.mxu0 %v4139
  %4478 = vmatpush1.msra.mxu0 %v4138
  %4479 = vmatprep.subr.mxu0 %v4143
  %4480 = vmatpush1.msra.mxu0 %v4142
  %4481 = vmatprep.subr.mxu0 %v4147
  %4482 = vmatpush1.msra.mxu0 %v4146
  %4483 = vmatprep.subr.mxu0 %v4151
  %4484 = vmatpush1.msra.mxu0 %v4150
  %4485 = vmatprep.subr.mxu0 %v4155
  %4486 = vmatpush1.msra.mxu0 %v4154
  %4487 = vmatprep.subr.mxu0 %v4159
  %4488 = vmatpush1.msra.mxu0 %v4158
  %4489 = vmatprep.subr.mxu0 %v4163
  %4490 = vmatpush1.msra.mxu0 %v4162
  %4491 = vmatprep.subr.mxu0 %v4167
  %4492 = vmatpush1.msra.mxu0 %v4166
  %4493 = vmatprep.subr.mxu0 %v4171
  %4494 = vmatpush1.msra.mxu0 %v4170
  %4495 = vmatprep.subr.mxu0 %v4175
  %4496 = vmatpush1.msra.mxu0 %v4174
  %4497 = vmatprep.subr.mxu0 %v4179
  %4498 = vmatpush1.msra.mxu0 %v4178
  %4499 = vmatprep.subr.mxu0 %v4183
  %4500 = vmatpush1.msra.mxu0 %v4182
  %4501 = vmatprep.subr.mxu0 %v4187
  %4502 = vmatpush1.msra.mxu0 %v4186
  %4503 = vmatprep.subr.mxu0 %v4191
  %4504 = vmatpush1.msra.mxu0 %v4190
  %4505 = vmatprep.subr.mxu0 %v4195
  %4506 = vmatpush1.msra.mxu0 %v4194
  %4507 = vmatprep.subr.mxu0 %v4199
  %4508 = vmatpush1.msra.mxu0 %v4198
  %4509 = vmatprep.subr.mxu0 %v4203
  %4510 = vmatpush1.msra.mxu0 %v4202
  %4511 = vmatprep.subr.mxu0 %v4207
  %4512 = vmatpush1.msra.mxu0 %v4206
  %4513 = vmatprep.subr.mxu0 %v4211
  %4514 = vmatpush1.msra.mxu0 %v4210
  %4515 = vmatprep.subr.mxu0 %v4215
  %4516 = vmatpush1.msra.mxu0 %v4214
  %4517 = vmatprep.mubr.f32.mxu0 %v3701
  %4518 = vmatmul.mubr.f32.gmra.mrb[0].mxu0 %v3700
  %v4519 = vpop.f32.mrb[0].mxu0
  %v4520 = vadd.f32 %v4449, %v4519
  %v4521 = vpop.f32.mrb[0].mxu0
  %v4522 = vadd.f32 %v4451, %v4521
  %4523 = vdwg.mxu0
  %4524 = vmatprep.subr.mxu0 %v3709
  %4525 = vmatpush1.msra.mxu0 %v3708
  %4526 = vmatprep.subr.mxu0 %v3713
  %4527 = vmatpush1.msra.mxu0 %v3712
  %4528 = vmatprep.subr.mxu0 %v3717
  %4529 = vmatpush1.msra.mxu0 %v3716
  %4530 = vmatprep.subr.mxu0 %v3721
  %4531 = vmatpush1.msra.mxu0 %v3720
  %4532 = vmatprep.subr.mxu0 %v3725
  %4533 = vmatpush1.msra.mxu0 %v3724
  %4534 = vmatprep.subr.mxu0 %v3729
  %4535 = vmatpush1.msra.mxu0 %v3728
  %4536 = vmatprep.subr.mxu0 %v3733
  %4537 = vmatpush1.msra.mxu0 %v3732
  %4538 = vmatprep.subr.mxu0 %v3737
  %4539 = vmatpush1.msra.mxu0 %v3736
  %4540 = vmatprep.subr.mxu0 %v3741
  %4541 = vmatpush1.msra.mxu0 %v3740
  %4542 = vmatprep.subr.mxu0 %v3745
  %4543 = vmatpush1.msra.mxu0 %v3744
  %4544 = vmatprep.subr.mxu0 %v3749
  %4545 = vmatpush1.msra.mxu0 %v3748
  %4546 = vmatprep.subr.mxu0 %v3753
  %4547 = vmatpush1.msra.mxu0 %v3752
  %4548 = vmatprep.subr.mxu0 %v3757
  %4549 = vmatpush1.msra.mxu0 %v3756
  %4550 = vmatprep.subr.mxu0 %v3761
  %4551 = vmatpush1.msra.mxu0 %v3760
  %4552 = vmatprep.subr.mxu0 %v3765
  %4553 = vmatpush1.msra.mxu0 %v3764
  %4554 = vmatprep.subr.mxu0 %v3769
  %4555 = vmatpush1.msra.mxu0 %v3768
  %4556 = vmatprep.subr.mxu0 %v3773
  %4557 = vmatpush1.msra.mxu0 %v3772
  %4558 = vmatprep.subr.mxu0 %v3777
  %4559 = vmatpush1.msra.mxu0 %v3776
  %4560 = vmatprep.subr.mxu0 %v3781
  %4561 = vmatpush1.msra.mxu0 %v3780
  %4562 = vmatprep.subr.mxu0 %v3785
  %4563 = vmatpush1.msra.mxu0 %v3784
  %4564 = vmatprep.subr.mxu0 %v3789
  %4565 = vmatpush1.msra.mxu0 %v3788
  %4566 = vmatprep.subr.mxu0 %v3793
  %4567 = vmatpush1.msra.mxu0 %v3792
  %4568 = vmatprep.subr.mxu0 %v3797
  %4569 = vmatpush1.msra.mxu0 %v3796
  %4570 = vmatprep.subr.mxu0 %v3801
  %4571 = vmatpush1.msra.mxu0 %v3800
  %4572 = vmatprep.subr.mxu0 %v3805
  %4573 = vmatpush1.msra.mxu0 %v3804
  %4574 = vmatprep.subr.mxu0 %v3809
  %4575 = vmatpush1.msra.mxu0 %v3808
  %4576 = vmatprep.subr.mxu0 %v3813
  %4577 = vmatpush1.msra.mxu0 %v3812
  %4578 = vmatprep.subr.mxu0 %v3817
  %4579 = vmatpush1.msra.mxu0 %v3816
  %4580 = vmatprep.subr.mxu0 %v3821
  %4581 = vmatpush1.msra.mxu0 %v3820
  %4582 = vmatprep.subr.mxu0 %v3825
  %4583 = vmatpush1.msra.mxu0 %v3824
  %4584 = vmatprep.subr.mxu0 %v3829
  %4585 = vmatpush1.msra.mxu0 %v3828
  %4586 = vmatprep.subr.mxu0 %v3833
  %4587 = vmatpush1.msra.mxu0 %v3832
  %4588 = vmatprep.mubr.f32.mxu0 %v3695
  %4589 = vmatmul.mubr.f32.gmra.mrb[0].mxu0 %v3694
  %v4590 = vpop.f32.mrb[0].mxu0
  %v4591 = vadd.f32 %v4231, %v4590
  %v4592 = vpop.f32.mrb[0].mxu0
  %v4593 = vadd.f32 %v4235, %v4592
  %4594 = vdwg.mxu0
  %4595 = vmatprep.subr.mxu0 %v3837
  %4596 = vmatpush1.msra.mxu0 %v3836
  %4597 = vmatprep.subr.mxu0 %v3841
  %4598 = vmatpush1.msra.mxu0 %v3840
  %4599 = vmatprep.subr.mxu0 %v3845
  %4600 = vmatpush1.msra.mxu0 %v3844
  %4601 = vmatprep.subr.mxu0 %v3849
  %4602 = vmatpush1.msra.mxu0 %v3848
  %4603 = vmatprep.subr.mxu0 %v3853
  %4604 = vmatpush1.msra.mxu0 %v3852
  %4605 = vmatprep.subr.mxu0 %v3857
  %4606 = vmatpush1.msra.mxu0 %v3856
  %4607 = vmatprep.subr.mxu0 %v3861
  %4608 = vmatpush1.msra.mxu0 %v3860
  %4609 = vmatprep.subr.mxu0 %v3865
  %4610 = vmatpush1.msra.mxu0 %v3864
  %4611 = vmatprep.subr.mxu0 %v3869
  %4612 = vmatpush1.msra.mxu0 %v3868
  %4613 = vmatprep.subr.mxu0 %v3873
  %4614 = vmatpush1.msra.mxu0 %v3872
  %4615 = vmatprep.subr.mxu0 %v3877
  %4616 = vmatpush1.msra.mxu0 %v3876
  %4617 = vmatprep.subr.mxu0 %v3881
  %4618 = vmatpush1.msra.mxu0 %v3880
  %4619 = vmatprep.subr.mxu0 %v3885
  %4620 = vmatpush1.msra.mxu0 %v3884
  %4621 = vmatprep.subr.mxu0 %v3889
  %4622 = vmatpush1.msra.mxu0 %v3888
  %4623 = vmatprep.subr.mxu0 %v3893
  %4624 = vmatpush1.msra.mxu0 %v3892
  %4625 = vmatprep.subr.mxu0 %v3897
  %4626 = vmatpush1.msra.mxu0 %v3896
  %4627 = vmatprep.subr.mxu0 %v3901
  %4628 = vmatpush1.msra.mxu0 %v3900
  %4629 = vmatprep.subr.mxu0 %v3905
  %4630 = vmatpush1.msra.mxu0 %v3904
  %4631 = vmatprep.subr.mxu0 %v3909
  %4632 = vmatpush1.msra.mxu0 %v3908
  %4633 = vmatprep.subr.mxu0 %v3913
  %4634 = vmatpush1.msra.mxu0 %v3912
  %4635 = vmatprep.subr.mxu0 %v3917
  %4636 = vmatpush1.msra.mxu0 %v3916
  %4637 = vmatprep.subr.mxu0 %v3921
  %4638 = vmatpush1.msra.mxu0 %v3920
  %4639 = vmatprep.subr.mxu0 %v3925
  %4640 = vmatpush1.msra.mxu0 %v3924
  %4641 = vmatprep.subr.mxu0 %v3929
  %4642 = vmatpush1.msra.mxu0 %v3928
  %4643 = vmatprep.subr.mxu0 %v3933
  %4644 = vmatpush1.msra.mxu0 %v3932
  %4645 = vmatprep.subr.mxu0 %v3937
  %4646 = vmatpush1.msra.mxu0 %v3936
  %4647 = vmatprep.subr.mxu0 %v3941
  %4648 = vmatpush1.msra.mxu0 %v3940
  %4649 = vmatprep.subr.mxu0 %v3945
  %4650 = vmatpush1.msra.mxu0 %v3944
  %4651 = vmatprep.subr.mxu0 %v3949
  %4652 = vmatpush1.msra.mxu0 %v3948
  %4653 = vmatprep.subr.mxu0 %v3953
  %4654 = vmatpush1.msra.mxu0 %v3952
  %4655 = vmatprep.subr.mxu0 %v3957
  %4656 = vmatpush1.msra.mxu0 %v3956
  %4657 = vmatprep.subr.mxu0 %v3961
  %4658 = vmatpush1.msra.mxu0 %v3960
  %4659 = vmatprep.mubr.f32.mxu0 %v3697
  %4660 = vmatmul.mubr.f32.gmra.mrb[0].mxu0 %v3696
  %v4661 = vpop.f32.mrb[0].mxu0
  %v4662 = vadd.f32 %v4591, %v4661
  %v4663 = vpop.f32.mrb[0].mxu0
  %v4664 = vadd.f32 %v4593, %v4663
  %4665 = vdwg.mxu0
  %4666 = vmatprep.subr.mxu0 %v3965
  %4667 = vmatpush1.msra.mxu0 %v3964
  %4668 = vmatprep.subr.mxu0 %v3969
  %4669 = vmatpush1.msra.mxu0 %v3968
  %4670 = vmatprep.subr.mxu0 %v3973
  %4671 = vmatpush1.msra.mxu0 %v3972
  %4672 = vmatprep.subr.mxu0 %v3977
  %4673 = vmatpush1.msra.mxu0 %v3976
  %4674 = vmatprep.subr.mxu0 %v3981
  %4675 = vmatpush1.msra.mxu0 %v3980
  %4676 = vmatprep.subr.mxu0 %v3985
  %4677 = vmatpush1.msra.mxu0 %v3984
  %4678 = vmatprep.subr.mxu0 %v3989
  %4679 = vmatpush1.msra.mxu0 %v3988
  %4680 = vmatprep.subr.mxu0 %v3993
  %4681 = vmatpush1.msra.mxu0 %v3992
  %4682 = vmatprep.subr.mxu0 %v3997
  %4683 = vmatpush1.msra.mxu0 %v3996
  %4684 = vmatprep.subr.mxu0 %v4001
  %4685 = vmatpush1.msra.mxu0 %v4000
  %4686 = vmatprep.subr.mxu0 %v4005
  %4687 = vmatpush1.msra.mxu0 %v4004
  %4688 = vmatprep.subr.mxu0 %v4009
  %4689 = vmatpush1.msra.mxu0 %v4008
  %4690 = vmatprep.subr.mxu0 %v4013
  %4691 = vmatpush1.msra.mxu0 %v4012
  %4692 = vmatprep.subr.mxu0 %v4017
  %4693 = vmatpush1.msra.mxu0 %v4016
  %4694 = vmatprep.subr.mxu0 %v4021
  %4695 = vmatpush1.msra.mxu0 %v4020
  %4696 = vmatprep.subr.mxu0 %v4025
  %4697 = vmatpush1.msra.mxu0 %v4024
  %4698 = vmatprep.subr.mxu0 %v4029
  %4699 = vmatpush1.msra.mxu0 %v4028
  %4700 = vmatprep.subr.mxu0 %v4033
  %4701 = vmatpush1.msra.mxu0 %v4032
  %4702 = vmatprep.subr.mxu0 %v4037
  %4703 = vmatpush1.msra.mxu0 %v4036
  %4704 = vmatprep.subr.mxu0 %v4041
  %4705 = vmatpush1.msra.mxu0 %v4040
  %4706 = vmatprep.subr.mxu0 %v4045
  %4707 = vmatpush1.msra.mxu0 %v4044
  %4708 = vmatprep.subr.mxu0 %v4049
  %4709 = vmatpush1.msra.mxu0 %v4048
  %4710 = vmatprep.subr.mxu0 %v4053
  %4711 = vmatpush1.msra.mxu0 %v4052
  %4712 = vmatprep.subr.mxu0 %v4057
  %4713 = vmatpush1.msra.mxu0 %v4056
  %4714 = vmatprep.subr.mxu0 %v4061
  %4715 = vmatpush1.msra.mxu0 %v4060
  %4716 = vmatprep.subr.mxu0 %v4065
  %4717 = vmatpush1.msra.mxu0 %v4064
  %4718 = vmatprep.subr.mxu0 %v4069
  %4719 = vmatpush1.msra.mxu0 %v4068
  %4720 = vmatprep.subr.mxu0 %v4073
  %4721 = vmatpush1.msra.mxu0 %v4072
  %4722 = vmatprep.subr.mxu0 %v4077
  %4723 = vmatpush1.msra.mxu0 %v4076
  %4724 = vmatprep.subr.mxu0 %v4081
  %4725 = vmatpush1.msra.mxu0 %v4080
  %4726 = vmatprep.subr.mxu0 %v4085
  %4727 = vmatpush1.msra.mxu0 %v4084
  %4728 = vmatprep.subr.mxu0 %v4089
  %4729 = vmatpush1.msra.mxu0 %v4088
  %4730 = vmatprep.mubr.f32.mxu0 %v3699
  %4731 = vmatmul.mubr.f32.gmra.mrb[0].mxu0 %v3698
  %v4732 = vpop.f32.mrb[0].mxu0
  %v4733 = vadd.f32 %v4662, %v4732
  %v4734 = vpop.f32.mrb[0].mxu0
  %v4735 = vadd.f32 %v4664, %v4734
  %4736 = vdwg.mxu0
  %4737 = vmatprep.subr.mxu0 %v4093
  %4738 = vmatpush1.msra.mxu0 %v4092
  %4739 = vmatprep.subr.mxu0 %v4097
  %4740 = vmatpush1.msra.mxu0 %v4096
  %4741 = vmatprep.subr.mxu0 %v4101
  %4742 = vmatpush1.msra.mxu0 %v4100
  %4743 = vmatprep.subr.mxu0 %v4105
  %4744 = vmatpush1.msra.mxu0 %v4104
  %4745 = vmatprep.subr.mxu0 %v4109
  %4746 = vmatpush1.msra.mxu0 %v4108
  %4747 = vmatprep.subr.mxu0 %v4113
  %4748 = vmatpush1.msra.mxu0 %v4112
  %4749 = vmatprep.subr.mxu0 %v4117
  %4750 = vmatpush1.msra.mxu0 %v4116
  %4751 = vmatprep.subr.mxu0 %v4121
  %4752 = vmatpush1.msra.mxu0 %v4120
  %4753 = vmatprep.subr.mxu0 %v4125
  %4754 = vmatpush1.msra.mxu0 %v4124
  %4755 = vmatprep.subr.mxu0 %v4129
  %4756 = vmatpush1.msra.mxu0 %v4128
  %4757 = vmatprep.subr.mxu0 %v4133
  %4758 = vmatpush1.msra.mxu0 %v4132
  %4759 = vmatprep.subr.mxu0 %v4137
  %4760 = vmatpush1.msra.mxu0 %v4136
  %4761 = vmatprep.subr.mxu0 %v4141
  %4762 = vmatpush1.msra.mxu0 %v4140
  %4763 = vmatprep.subr.mxu0 %v4145
  %4764 = vmatpush1.msra.mxu0 %v4144
  %4765 = vmatprep.subr.mxu0 %v4149
  %4766 = vmatpush1.msra.mxu0 %v4148
  %4767 = vmatprep.subr.mxu0 %v4153
  %4768 = vmatpush1.msra.mxu0 %v4152
  %4769 = vmatprep.subr.mxu0 %v4157
  %4770 = vmatpush1.msra.mxu0 %v4156
  %4771 = vmatprep.subr.mxu0 %v4161
  %4772 = vmatpush1.msra.mxu0 %v4160
  %4773 = vmatprep.subr.mxu0 %v4165
  %4774 = vmatpush1.msra.mxu0 %v4164
  %4775 = vmatprep.subr.mxu0 %v4169
  %4776 = vmatpush1.msra.mxu0 %v4168
  %4777 = vmatprep.subr.mxu0 %v4173
  %4778 = vmatpush1.msra.mxu0 %v4172
  %4779 = vmatprep.subr.mxu0 %v4177
  %4780 = vmatpush1.msra.mxu0 %v4176
  %4781 = vmatprep.subr.mxu0 %v4181
  %4782 = vmatpush1.msra.mxu0 %v4180
  %4783 = vmatprep.subr.mxu0 %v4185
  %4784 = vmatpush1.msra.mxu0 %v4184
  %4785 = vmatprep.subr.mxu0 %v4189
  %4786 = vmatpush1.msra.mxu0 %v4188
  %4787 = vmatprep.subr.mxu0 %v4193
  %4788 = vmatpush1.msra.mxu0 %v4192
  %4789 = vmatprep.subr.mxu0 %v4197
  %4790 = vmatpush1.msra.mxu0 %v4196
  %4791 = vmatprep.subr.mxu0 %v4201
  %4792 = vmatpush1.msra.mxu0 %v4200
  %4793 = vmatprep.subr.mxu0 %v4205
  %4794 = vmatpush1.msra.mxu0 %v4204
  %4795 = vmatprep.subr.mxu0 %v4209
  %4796 = vmatpush1.msra.mxu0 %v4208
  %4797 = vmatprep.subr.mxu0 %v4213
  %4798 = vmatpush1.msra.mxu0 %v4212
  %4799 = vmatprep.subr.mxu0 %v4217
  %4800 = vmatpush1.msra.mxu0 %v4216
  %4801 = vmatprep.mubr.f32.mxu0 %v3701
  %4802 = vmatmul.mubr.f32.gmra.mrb[0].mxu0 %v3700
  %v4803 = vpop.f32.mrb[0].mxu0
  %v4804 = vadd.f32 %v4733, %v4803
  %v4805 = vpop.f32.mrb[0].mxu0
  %v4806 = vadd.f32 %v4735, %v4805
  %4807 = vdwg.mxu0
  %v4808 = vld [vmem:[%s9] sm:$0xf]
  %v4809 = vld [vmem:[%s10] sm:$0xf]
  %v4810 = vsel %vm3402, %v4520, 0.0
  %v4811 = vrot.slane %v4810, 4
  %v4812 = vadd.f32 %v4810, %v4811
  %v4813 = vrot.slane %v4812, 2
  %v4814 = vadd.f32 %v4812, %v4813
  %v4815 = vrot.slane %v4814, 1
  %v4816 = vadd.f32 %v4814, %v4815
  %v4817 = vsel %vm3402, %v4522, 0.0
  %v4818 = vrot.slane %v4817, 4
  %v4819 = vadd.f32 %v4817, %v4818
  %v4820 = vrot.slane %v4819, 2
  %v4821 = vadd.f32 %v4819, %v4820
  %v4822 = vrot.slane %v4821, 1
  %v4823 = vadd.f32 %v4821, %v4822
  %v4824 = vsel %vm3402, %v4804, 0.0
  %v4825 = vrot.slane %v4824, 4
  %v4826 = vadd.f32 %v4824, %v4825
  %v4827 = vrot.slane %v4826, 2
  %v4828 = vadd.f32 %v4826, %v4827
  %v4829 = vrot.slane %v4828, 1
  %v4830 = vadd.f32 %v4828, %v4829
  %v4831 = vsel %vm3402, %v4806, 0.0
  %v4832 = vrot.slane %v4831, 4
  %v4833 = vadd.f32 %v4831, %v4832
  %v4834 = vrot.slane %v4833, 2
  %v4835 = vadd.f32 %v4833, %v4834
  %v4836 = vrot.slane %v4835, 1
  %v4837 = vadd.f32 %v4835, %v4836
  %v4838 = vmul.f32 %v4816, %v3459
  %v4839 = vmul.f32 %v4823, %v3459
  %v4840 = vmul.f32 %v4830, %v3459
  %v4841 = vmul.f32 %v4837, %v3459
  %v4842 = vmul.f32 %v4520, %v4520
  %v4843 = vmul.f32 %v4522, %v4522
  %v4844 = vmul.f32 %v4804, %v4804
  %v4845 = vmul.f32 %v4806, %v4806
  %v4846 = vsel %vm3402, %v4842, 0.0
  %v4847 = vrot.slane %v4846, 4
  %v4848 = vadd.f32 %v4846, %v4847
  %v4849 = vrot.slane %v4848, 2
  %v4850 = vadd.f32 %v4848, %v4849
  %v4851 = vrot.slane %v4850, 1
  %v4852 = vadd.f32 %v4850, %v4851
  %v4853 = vsel %vm3402, %v4843, 0.0
  %v4854 = vrot.slane %v4853, 4
  %v4855 = vadd.f32 %v4853, %v4854
  %v4856 = vrot.slane %v4855, 2
  %v4857 = vadd.f32 %v4855, %v4856
  %v4858 = vrot.slane %v4857, 1
  %v4859 = vadd.f32 %v4857, %v4858
  %v4860 = vsel %vm3402, %v4844, 0.0
  %v4861 = vrot.slane %v4860, 4
  %v4862 = vadd.f32 %v4860, %v4861
  %v4863 = vrot.slane %v4862, 2
  %v4864 = vadd.f32 %v4862, %v4863
  %v4865 = vrot.slane %v4864, 1
  %v4866 = vadd.f32 %v4864, %v4865
  %v4867 = vsel %vm3402, %v4845, 0.0
  %v4868 = vrot.slane %v4867, 4
  %v4869 = vadd.f32 %v4867, %v4868
  %v4870 = vrot.slane %v4869, 2
  %v4871 = vadd.f32 %v4869, %v4870
  %v4872 = vrot.slane %v4871, 1
  %v4873 = vadd.f32 %v4871, %v4872
  %v4874 = vmul.f32 %v4852, %v3459
  %v4875 = vmul.f32 %v4859, %v3459
  %v4876 = vmul.f32 %v4866, %v3459
  %v4877 = vmul.f32 %v4873, %v3459
  %v4878 = vmul.f32 %v4838, %v4838
  %v4879 = vmul.f32 %v4839, %v4839
  %v4880 = vmul.f32 %v4840, %v4840
  %v4881 = vmul.f32 %v4841, %v4841
  %v4882 = vsub.f32 %v4874, %v4878
  %v4883 = vsub.f32 %v4875, %v4879
  %v4884 = vsub.f32 %v4876, %v4880
  %v4885 = vsub.f32 %v4877, %v4881
  %v4886 = vmax.f32 %v4882, 0.0
  %v4887 = vmax.f32 %v4883, 0.0
  %v4888 = vmax.f32 %v4884, 0.0
  %v4889 = vmax.f32 %v4885, 0.0
  %v4890 = vsub.f32 %v4520, %v4838
  %v4891 = vsub.f32 %v4522, %v4839
  %v4892 = vsub.f32 %v4804, %v4840
  %v4893 = vsub.f32 %v4806, %v4841
  %v4894 = vadd.f32 %v4886, 1e-05
  %v4895 = vadd.f32 %v4887, 1e-05
  %v4896 = vadd.f32 %v4888, 1e-05
  %v4897 = vadd.f32 %v4889, 1e-05
  %v4898 = vrsqrt.pop %v4894
  %v4899 = vrsqrt.pop %v4895
  %v4900 = vrsqrt.pop %v4896
  %v4901 = vrsqrt.pop %v4897
  %v4902 = vmul.f32 %v4890, %v4898
  %v4903 = vmul.f32 %v4891, %v4899
  %v4904 = vmul.f32 %v4892, %v4900
  %v4905 = vmul.f32 %v4893, %v4901
  %v4907 = vlaneseq
  %v4908 = vshrl.u32 %v4907, 7
  %v4909 = vsub.s32 0, %v4908
  %v4910 = vrot.slane %v4808, %v4909
  %v4911 = vlaneseq
  %v4912 = vshrl.u32 %v4911, 7
  %v4913 = vsub.s32 1, %v4912
  %v4914 = vrot.slane %v4808, %v4913
  %v4915 = vlaneseq
  %v4916 = vshrl.u32 %v4915, 7
  %v4917 = vsub.s32 2, %v4916
  %v4918 = vrot.slane %v4808, %v4917
  %v4919 = vlaneseq
  %v4920 = vshrl.u32 %v4919, 7
  %v4921 = vsub.s32 3, %v4920
  %v4922 = vrot.slane %v4808, %v4921
  %v4927 = vmul.f32 %v4902, %v4910
  %v4928 = vmul.f32 %v4903, %v4914
  %v4929 = vmul.f32 %v4904, %v4918
  %v4930 = vmul.f32 %v4905, %v4922
  %v4932 = vlaneseq
  %v4933 = vshrl.u32 %v4932, 7
  %v4934 = vsub.s32 0, %v4933
  %v4935 = vrot.slane %v4809, %v4934
  %v4936 = vlaneseq
  %v4937 = vshrl.u32 %v4936, 7
  %v4938 = vsub.s32 1, %v4937
  %v4939 = vrot.slane %v4809, %v4938
  %v4940 = vlaneseq
  %v4941 = vshrl.u32 %v4940, 7
  %v4942 = vsub.s32 2, %v4941
  %v4943 = vrot.slane %v4809, %v4942
  %v4944 = vlaneseq
  %v4945 = vshrl.u32 %v4944, 7
  %v4946 = vsub.s32 3, %v4945
  %v4947 = vrot.slane %v4809, %v4946
  %v4952 = vadd.f32 %v4927, %v4935
  %v4953 = vadd.f32 %v4928, %v4939
  %v4954 = vadd.f32 %v4929, %v4943
  %v4955 = vadd.f32 %v4930, %v4947
  %v4956 = vmax.f32 %v4952, 0.0
  %v4957 = vmax.f32 %v4953, 0.0
  %v4958 = vmax.f32 %v4954, 0.0
  %v4959 = vmax.f32 %v4955, 0.0
  %4960 = vst [vmem:[%s13] sm:$0xff] %v4956
  %4961 = vst [vmem:[%s13 + $0x8] sm:$0xff] %v4957
  %4962 = vst [vmem:[%s13 + $0x10] sm:$0xff] %v4958
  %4963 = vst [vmem:[%s13 + $0x18] sm:$0xff] %v4959
  // Predicated region
  $region114: #{text_gru_forward.1} parent=0 // pred_check
    _
  $region115: #{text_gru_forward.1} parent=0 // pred_check_branch
    %4965 = sbr.rel (0) target = $region117
  $region116: #{text_gru_forward.1} parent=0 // pred_region
    _
  $region117: #{text_gru_forward.1} parent=0 // pred_fallthru
    _
  // Predicated region
  $region118: #{text_gru_forward.1} parent=0 // pred_check
    _
  $region119: #{text_gru_forward.1} parent=0 // pred_check_branch
    %4967 = sbr.rel (0) target = $region121
  $region120: #{text_gru_forward.1} parent=0 // pred_region
    _
  $region121: #{text_gru_forward.1} parent=0 // pred_fallthru
    _
  %4968 = vsyncmov [#allocation5]
  %s4969 = vpop.sfrf %4968
  %p4970 = scmp.eq.s32.totalorder %s4969, 0
  %p4971 = pneg %p4970
  %4973 = shalt.err (%p4971)
  %s4974 = scalar_lea.sflag [#allocation5], 1
  %4975 = vsyncmov %s4974
  %s4976 = vpop.sfrf %4975
  %p4977 = scmp.eq.s32.totalorder %s4976, 0
  %p4978 = pneg %p4977
  %4980 = shalt.err (%p4978)

</llo_original>
